<compile_context>
chip_gen: v7x
topology: tpu7x:2x2x1
jax: 0.10.0
libtpu: 0.0.40
codegen_flags: <defaults>
</compile_context>

<pallas_src>
import jax
import jax.numpy as jnp
from jax.experimental import pallas as pl
from jax.experimental.pallas import tpu as pltpu


def _fold_bn(gamma, beta, mean, var, eps=1e-5):
    scale = gamma / jnp.sqrt(var + eps)
    bias = beta - mean * scale
    return scale, bias


def _make_fused_bottleneck_kernel(H, W, C, IC, G, OFF, PADROWS):
    HW = H * W

    def kernel(x_ref, s1_ref, b1_ref, w1f_ref, b2_ref, w2_ref, o_ref, ypad_ref):
        # ---------- stage 1: y = relu(bn2(conv1(relu(bn1(x))))) ----------
        # bn2 scale is already folded into w1f; only the bn2 bias remains.
        x = x_ref[0]                                              # (HW, C) raw input rows
        a = jnp.maximum(x * s1_ref[...] + b1_ref[...], 0.0)        # relu(bn1(x))
        y = jnp.dot(a, w1f_ref[...], preferred_element_type=jnp.float32)   # 1x1 conv (MXU)
        y = jnp.maximum(y + b2_ref[...], 0.0)                      # relu(bn2(.)) -> (HW, IC)

        # ---------- stage 2: 3x3 conv (pad=1) entirely in VMEM ----------
        # Row-padded flat buffer: interior rows [OFF, OFF+HW) hold y; halo rows
        # above/below are zero (post-ReLU zero padding, as in PyTorch).
        # Zeroing the halo every step keeps this megacore-safe under "parallel".
        ypad_ref[pl.ds(0, OFF), :] = jnp.zeros((OFF, IC), jnp.float32)
        ypad_ref[pl.ds(OFF + HW, PADROWS - OFF - HW), :] = jnp.zeros(
            (PADROWS - OFF - HW, IC), jnp.float32)
        ypad_ref[pl.ds(OFF, HW), :] = y

        # Column-validity masks: a +-1 shift along W is a +-1 row shift in the
        # flattened buffer, which wraps across image rows; mask those lanes out.
        col = jax.lax.broadcasted_iota(jnp.int32, (HW, IC), 0) % W
        mask_m1 = col >= 1          # reading w-1 is valid
        mask_p1 = col <= W - 2      # reading w+1 is valid

        acc = jnp.zeros((HW, G), jnp.float32)
        for kh in range(3):
            dh = kh - 1
            for kw in range(3):
                dw = kw - 1
                start = OFF + dh * W + dw               # static python int, >= 0
                patch = ypad_ref[pl.ds(start, HW), :]   # (HW, IC) shifted window
                if dw == -1:
                    patch = jnp.where(mask_m1, patch, 0.0)
                elif dw == 1:
                    patch = jnp.where(mask_p1, patch, 0.0)
                acc = acc + jnp.dot(patch, w2_ref[kh * 3 + kw],
                                    preferred_element_type=jnp.float32)

        # ---------- fused channel concat: out = [x, conv2(...)] ----------
        o_ref[0] = jnp.concatenate([x, acc], axis=-1).astype(o_ref.dtype)

    return kernel


def bottleneck_forward(x_nchw, params):
    """x_nchw: (N, C, H, W) float32. Returns (N, C + growthRate, H, W)."""
    N, C, H, W = x_nchw.shape
    w1 = params["w1"]          # (C, IC)      (1x1 conv, torch OIHW transposed)
    w2 = params["w2"]          # (3, 3, IC, G)
    IC = w1.shape[1]
    G = w2.shape[-1]
    HW = H * W

    s1, b1 = _fold_bn(params["g1"], params["beta1"], params["m1"], params["v1"])
    s2, b2 = _fold_bn(params["g2"], params["beta2"], params["m2"], params["v2"])
    w1f = (w1 * s2[None, :]).astype(jnp.float32)     # fold bn2 scale into conv1 weight

    # NCHW -> NHWC -> (N, H*W, C): channels on the lane axis (layout glue only).
    xr = jnp.transpose(x_nchw, (0, 2, 3, 1)).reshape(N, HW, C).astype(jnp.float32)
    w2t = w2.reshape(9, IC, G).astype(jnp.float32)   # tap-major: index kh*3 + kw

    OFF = W + 8                    # interior offset inside the row-padded scratch
    PADROWS = HW + 2 * W + 16      # interior + halo rows for all 9 shifted reads

    kernel = _make_fused_bottleneck_kernel(H, W, C, IC, G, OFF, PADROWS)

    out = pl.pallas_call(
        kernel,
        out_shape=jax.ShapeDtypeStruct((N, HW, C + G), jnp.float32),
        grid_spec=pltpu.PrefetchScalarGridSpec(
            num_scalar_prefetch=0,
            grid=(N,),
            in_specs=[
                pl.BlockSpec((1, HW, C), lambda n: (n, 0, 0)),      # x rows of one image
                pl.BlockSpec((1, C), lambda n: (0, 0)),             # bn1 scale
                pl.BlockSpec((1, C), lambda n: (0, 0)),             # bn1 bias
                pl.BlockSpec((C, IC), lambda n: (0, 0)),            # w1 * s2
                pl.BlockSpec((1, IC), lambda n: (0, 0)),            # bn2 bias
                pl.BlockSpec((9, IC, G), lambda n: (0, 0, 0)),      # 3x3 taps
            ],
            out_specs=pl.BlockSpec((1, HW, C + G), lambda n: (n, 0, 0)),
            scratch_shapes=[pltpu.VMEM((PADROWS, IC), jnp.float32)],
        ),
        compiler_params=pltpu.CompilerParams(dimension_semantics=("parallel",)),
    )(xr,
      s1.reshape(1, C).astype(jnp.float32), b1.reshape(1, C).astype(jnp.float32),
      w1f,
      b2.reshape(1, IC).astype(jnp.float32), w2t)

    # (N, H*W, C+G) -> NCHW to match the PyTorch module's output layout.
    return jnp.transpose(out.reshape(N, H, W, C + G), (0, 3, 1, 2))


# ----------------------- pure-JAX reference (for checking) -----------------------
def bottleneck_reference(x, params, eps=1e-5):
    def bn(v, g, b, m, var):
        return (v - m[None, :, None, None]) / jnp.sqrt(var + eps)[None, :, None, None] \
               * g[None, :, None, None] + b[None, :, None, None]

    a = jax.nn.relu(bn(x, params["g1"], params["beta1"], params["m1"], params["v1"]))
    w1_oihw = jnp.transpose(params["w1"], (1, 0))[:, :, None, None]          # (IC, C, 1, 1)
    t = jax.lax.conv_general_dilated(a, w1_oihw, (1, 1), "VALID",
                                     dimension_numbers=("NCHW", "OIHW", "NCHW"))
    a2 = jax.nn.relu(bn(t, params["g2"], params["beta2"], params["m2"], params["v2"]))
    w2_oihw = jnp.transpose(params["w2"], (3, 2, 0, 1))                       # (G, IC, 3, 3)
    o = jax.lax.conv_general_dilated(a2, w2_oihw, (1, 1), ((1, 1), (1, 1)),
                                     dimension_numbers=("NCHW", "OIHW", "NCHW"))
    return jnp.concatenate([x, o], axis=1)


if __name__ == "__main__":
    # TODO(synk): only the Bottleneck block is kernelized; the full DenseNet
    # (stem conv, Transition avg-pool, final BN+pool+FC) is composed of the same
    # conv/bn/relu primitives and is out of scope of this kernel.

    # Bottleneck(nChannels=4, growthRate=4) -> interChannels = 16
    nChannels, growthRate = 4, 4
    interChannels = 4 * growthRate
    N, H, W = 2, 16, 16

    key = jax.random.PRNGKey(0)
    ks = jax.random.split(key, 12)

    x = jax.random.normal(ks[0], (N, nChannels, H, W), dtype=jnp.float32)

    params = {
        # bn1 (over nChannels)
        "g1":    jax.random.normal(ks[1], (nChannels,)) * 0.1 + 1.0,
        "beta1": jax.random.normal(ks[2], (nChannels,)) * 0.1,
        "m1":    jax.random.normal(ks[3], (nChannels,)) * 0.1,
        "v1":    jax.random.uniform(ks[4], (nChannels,), minval=0.5, maxval=1.5),
        # conv1 weight, stored (C_in, IC) = torch (IC, C_in, 1, 1) transposed
        "w1":    jax.random.normal(ks[5], (nChannels, interChannels)) * 0.2,
        # bn2 (over interChannels)
        "g2":    jax.random.normal(ks[6], (interChannels,)) * 0.1 + 1.0,
        "beta2": jax.random.normal(ks[7], (interChannels,)) * 0.1,
        "m2":    jax.random.normal(ks[8], (interChannels,)) * 0.1,
        "v2":    jax.random.uniform(ks[9], (interChannels,), minval=0.5, maxval=1.5),
        # conv2 weight, stored (3, 3, IC, G) = torch (G, IC, 3, 3) transposed
        "w2":    jax.random.normal(ks[10], (3, 3, interChannels, growthRate)) * 0.1,
    }

    out = jax.block_until_ready(bottleneck_forward(x, params))
    ref = jax.block_until_ready(bottleneck_reference(x, params))

    assert out.shape == (N, nChannels + growthRate, H, W), out.shape
    assert jnp.allclose(out, ref, atol=1e-4, rtol=1e-4), \
        f"max abs err = {jnp.max(jnp.abs(out - ref))}"

    print("KERNEL_OK")
</pallas_src>

<mosaic_0001>
module attributes {stable_mosaic.version = 11 : i64} {
  func.func @kernel(%arg0: i32, %arg1: memref<1x256x4xf32, #tpu.memory_space<vmem>>, %arg2: memref<1x4xf32, #tpu.memory_space<vmem>>, %arg3: memref<1x4xf32, #tpu.memory_space<vmem>>, %arg4: memref<4x16xf32, #tpu.memory_space<vmem>>, %arg5: memref<1x16xf32, #tpu.memory_space<vmem>>, %arg6: memref<9x16x4xf32, #tpu.memory_space<vmem>>, %arg7: memref<1x256x8xf32, #tpu.memory_space<vmem>>, %arg8: memref<304x16xf32, #tpu.memory_space<vmem>>) attributes {dimension_semantics = [#tpu.dimension_semantics<parallel>], iteration_bounds = array<i64: 2>, scalar_prefetch = 0 : i64, scratch_operands = 1 : i64, tpu.core_type = #tpu.core_type<tc>, window_params = [{transform_indices = @transform_0, window_bounds = array<i64: 1, 256, 4>}, {pipeline_mode = #tpu.pipeline_mode<synchronous>, transform_indices = @transform_1, window_bounds = array<i64: 1, 4>}, {pipeline_mode = #tpu.pipeline_mode<synchronous>, transform_indices = @transform_2, window_bounds = array<i64: 1, 4>}, {pipeline_mode = #tpu.pipeline_mode<synchronous>, transform_indices = @transform_3, window_bounds = array<i64: 4, 16>}, {pipeline_mode = #tpu.pipeline_mode<synchronous>, transform_indices = @transform_4, window_bounds = array<i64: 1, 16>}, {pipeline_mode = #tpu.pipeline_mode<synchronous>, transform_indices = @transform_5, window_bounds = array<i64: 9, 16, 4>}, {transform_indices = @transform_6, window_bounds = array<i64: 1, 256, 8>}]} {
    %c0 = arith.constant 0 : index
    %c0_0 = arith.constant 0 : index
    %c0_1 = arith.constant 0 : index
    %0 = vector.load %arg1[%c0, %c0_0, %c0_1] : memref<1x256x4xf32, #tpu.memory_space<vmem>>, vector<1x256x4xf32>
    %1 = vector.shape_cast %0 : vector<1x256x4xf32> to vector<256x4xf32>
    %c0_2 = arith.constant 0 : index
    %c0_3 = arith.constant 0 : index
    %2 = vector.load %arg2[%c0_2, %c0_3] : memref<1x4xf32, #tpu.memory_space<vmem>>, vector<1x4xf32>
    %3 = vector.broadcast %2 : vector<1x4xf32> to vector<256x4xf32>
    %4 = arith.mulf %1, %3 : vector<256x4xf32>
    %c0_4 = arith.constant 0 : index
    %c0_5 = arith.constant 0 : index
    %5 = vector.load %arg3[%c0_4, %c0_5] : memref<1x4xf32, #tpu.memory_space<vmem>>, vector<1x4xf32>
    %6 = vector.broadcast %5 : vector<1x4xf32> to vector<256x4xf32>
    %7 = arith.addf %4, %6 : vector<256x4xf32>
    %cst = arith.constant 0.000000e+00 : f32
    %8 = vector.broadcast %cst : f32 to vector<256x4xf32>
    %9 = arith.maximumf %7, %8 : vector<256x4xf32>
    %c0_6 = arith.constant 0 : index
    %c0_7 = arith.constant 0 : index
    %10 = vector.load %arg4[%c0_6, %c0_7] : memref<4x16xf32, #tpu.memory_space<vmem>>, vector<4x16xf32>
    %cst_8 = arith.constant dense<0.000000e+00> : vector<256x16xf32>
    %11 = tpu.matmul %9, %10, %cst_8 {dimension_numbers = #tpu.dot_dimension_numbers<[1], [0], [0], [1], [0, 0, 1, 1], [], []>} : vector<256x4xf32>, vector<4x16xf32>, vector<256x16xf32> -> vector<256x16xf32>
    %c0_9 = arith.constant 0 : index
    %c0_10 = arith.constant 0 : index
    %12 = vector.load %arg5[%c0_9, %c0_10] : memref<1x16xf32, #tpu.memory_space<vmem>>, vector<1x16xf32>
    %13 = vector.broadcast %12 : vector<1x16xf32> to vector<256x16xf32>
    %14 = arith.addf %11, %13 : vector<256x16xf32>
    %cst_11 = arith.constant 0.000000e+00 : f32
    %15 = vector.broadcast %cst_11 : f32 to vector<256x16xf32>
    %16 = arith.maximumf %14, %15 : vector<256x16xf32>
    %cst_12 = arith.constant 0.000000e+00 : f32
    %17 = vector.broadcast %cst_12 : f32 to vector<24x16xf32>
    %c0_13 = arith.constant 0 : index
    %c0_14 = arith.constant 0 : index
    %18 = vector.load %arg8[%c0_13, %c0_14] : memref<304x16xf32, #tpu.memory_space<vmem>>, vector<24x16xf32>
    tpu.vector_store %arg8[%c0_13, %c0_14], %17 {strides = array<i32>} : memref<304x16xf32, #tpu.memory_space<vmem>>, vector<24x16xf32>,
    %cst_15 = arith.constant 0.000000e+00 : f32
    %19 = vector.broadcast %cst_15 : f32 to vector<24x16xf32>
    %c280 = arith.constant 280 : index
    %c0_16 = arith.constant 0 : index
    %20 = vector.load %arg8[%c280, %c0_16] : memref<304x16xf32, #tpu.memory_space<vmem>>, vector<24x16xf32>
    tpu.vector_store %arg8[%c280, %c0_16], %19 {strides = array<i32>} : memref<304x16xf32, #tpu.memory_space<vmem>>, vector<24x16xf32>,
    %c24 = arith.constant 24 : index
    %c0_17 = arith.constant 0 : index
    %21 = vector.load %arg8[%c24, %c0_17] : memref<304x16xf32, #tpu.memory_space<vmem>>, vector<256x16xf32>
    tpu.vector_store %arg8[%c24, %c0_17], %16 {strides = array<i32>} : memref<304x16xf32, #tpu.memory_space<vmem>>, vector<256x16xf32>,
    %22 = tpu.iota {dimensions = array<i32: 0>} : vector<256x16xi32>
    %c16_i32 = arith.constant 16 : i32
    %c0_i32 = arith.constant 0 : i32
    %23 = arith.cmpi eq, %c16_i32, %c0_i32 : i32
    %c1_i32 = arith.constant 1 : i32
    %24 = arith.select %23, %c1_i32, %c16_i32 : i32
    %25 = vector.broadcast %24 : i32 to vector<256x16xi32>
    %26 = arith.remsi %22, %25 : vector<256x16xi32>
    %c0_i32_18 = arith.constant 0 : i32
    %27 = vector.broadcast %c0_i32_18 : i32 to vector<256x16xi32>
    %28 = arith.cmpi ne, %26, %27 : vector<256x16xi32>
    %c0_i32_19 = arith.constant 0 : i32
    %29 = vector.broadcast %c0_i32_19 : i32 to vector<256x16xi32>
    %30 = arith.cmpi slt, %26, %29 : vector<256x16xi32>
    %c0_i32_20 = arith.constant 0 : i32
    %31 = arith.cmpi slt, %24, %c0_i32_20 : i32
    %32 = vector.broadcast %31 : i1 to vector<256x16xi1>
    %33 = vector.broadcast %32 : vector<256x16xi1> to vector<256x16xi1>
    %34 = arith.xori %30, %33 : vector<256x16xi1>
    %35 = arith.andi %34, %28 : vector<256x16xi1>
    %36 = vector.broadcast %24 : i32 to vector<256x16xi32>
    %37 = arith.addi %26, %36 : vector<256x16xi32>
    %38 = arith.select %35, %37, %26 : vector<256x16xi1>, vector<256x16xi32>
    %c1_i32_21 = arith.constant 1 : i32
    %39 = vector.broadcast %c1_i32_21 : i32 to vector<256x16xi32>
    %40 = arith.cmpi sge, %38, %39 : vector<256x16xi32>
    %c14_i32 = arith.constant 14 : i32
    %41 = vector.broadcast %c14_i32 : i32 to vector<256x16xi32>
    %42 = arith.cmpi sle, %38, %41 : vector<256x16xi32>
    %cst_22 = arith.constant 0.000000e+00 : f32
    %43 = vector.broadcast %cst_22 : f32 to vector<256x4xf32>
    %c7 = arith.constant 7 : index
    %c0_23 = arith.constant 0 : index
    %44 = vector.load %arg8[%c7, %c0_23] : memref<304x16xf32, #tpu.memory_space<vmem>>, vector<256x16xf32>
    %cst_24 = arith.constant 0.000000e+00 : f32
    %45 = vector.broadcast %cst_24 : f32 to vector<256x16xf32>
    %46 = arith.select %40, %44, %45 : vector<256x16xi1>, vector<256x16xf32>
    %c0_25 = arith.constant 0 : index
    %c0_26 = arith.constant 0 : index
    %c0_27 = arith.constant 0 : index
    %47 = vector.load %arg6[%c0_25, %c0_26, %c0_27] : memref<9x16x4xf32, #tpu.memory_space<vmem>>, vector<1x16x4xf32>
    %48 = vector.shape_cast %47 : vector<1x16x4xf32> to vector<16x4xf32>
    %cst_28 = arith.constant dense<0.000000e+00> : vector<256x4xf32>
    %49 = tpu.matmul %46, %48, %cst_28 {dimension_numbers = #tpu.dot_dimension_numbers<[1], [0], [0], [1], [0, 0, 1, 1], [], []>} : vector<256x16xf32>, vector<16x4xf32>, vector<256x4xf32> -> vector<256x4xf32>
    %50 = arith.addf %43, %49 : vector<256x4xf32>
    %c8 = arith.constant 8 : index
    %c0_29 = arith.constant 0 : index
    %51 = vector.load %arg8[%c8, %c0_29] : memref<304x16xf32, #tpu.memory_space<vmem>>, vector<256x16xf32>
    %c1 = arith.constant 1 : index
    %c0_30 = arith.constant 0 : index
    %c0_31 = arith.constant 0 : index
    %52 = vector.load %arg6[%c1, %c0_30, %c0_31] : memref<9x16x4xf32, #tpu.memory_space<vmem>>, vector<1x16x4xf32>
    %53 = vector.shape_cast %52 : vector<1x16x4xf32> to vector<16x4xf32>
    %cst_32 = arith.constant dense<0.000000e+00> : vector<256x4xf32>
    %54 = tpu.matmul %51, %53, %cst_32 {dimension_numbers = #tpu.dot_dimension_numbers<[1], [0], [0], [1], [0, 0, 1, 1], [], []>} : vector<256x16xf32>, vector<16x4xf32>, vector<256x4xf32> -> vector<256x4xf32>
    %55 = arith.addf %50, %54 : vector<256x4xf32>
    %c9 = arith.constant 9 : index
    %c0_33 = arith.constant 0 : index
    %56 = vector.load %arg8[%c9, %c0_33] : memref<304x16xf32, #tpu.memory_space<vmem>>, vector<256x16xf32>
    %cst_34 = arith.constant 0.000000e+00 : f32
    %57 = vector.broadcast %cst_34 : f32 to vector<256x16xf32>
    %58 = arith.select %42, %56, %57 : vector<256x16xi1>, vector<256x16xf32>
    %c2 = arith.constant 2 : index
    %c0_35 = arith.constant 0 : index
    %c0_36 = arith.constant 0 : index
    %59 = vector.load %arg6[%c2, %c0_35, %c0_36] : memref<9x16x4xf32, #tpu.memory_space<vmem>>, vector<1x16x4xf32>
    %60 = vector.shape_cast %59 : vector<1x16x4xf32> to vector<16x4xf32>
    %cst_37 = arith.constant dense<0.000000e+00> : vector<256x4xf32>
    %61 = tpu.matmul %58, %60, %cst_37 {dimension_numbers = #tpu.dot_dimension_numbers<[1], [0], [0], [1], [0, 0, 1, 1], [], []>} : vector<256x16xf32>, vector<16x4xf32>, vector<256x4xf32> -> vector<256x4xf32>
    %62 = arith.addf %55, %61 : vector<256x4xf32>
    %c23 = arith.constant 23 : index
    %c0_38 = arith.constant 0 : index
    %63 = vector.load %arg8[%c23, %c0_38] : memref<304x16xf32, #tpu.memory_space<vmem>>, vector<256x16xf32>
    %cst_39 = arith.constant 0.000000e+00 : f32
    %64 = vector.broadcast %cst_39 : f32 to vector<256x16xf32>
    %65 = arith.select %40, %63, %64 : vector<256x16xi1>, vector<256x16xf32>
    %c3 = arith.constant 3 : index
    %c0_40 = arith.constant 0 : index
    %c0_41 = arith.constant 0 : index
    %66 = vector.load %arg6[%c3, %c0_40, %c0_41] : memref<9x16x4xf32, #tpu.memory_space<vmem>>, vector<1x16x4xf32>
    %67 = vector.shape_cast %66 : vector<1x16x4xf32> to vector<16x4xf32>
    %cst_42 = arith.constant dense<0.000000e+00> : vector<256x4xf32>
    %68 = tpu.matmul %65, %67, %cst_42 {dimension_numbers = #tpu.dot_dimension_numbers<[1], [0], [0], [1], [0, 0, 1, 1], [], []>} : vector<256x16xf32>, vector<16x4xf32>, vector<256x4xf32> -> vector<256x4xf32>
    %69 = arith.addf %62, %68 : vector<256x4xf32>
    %c24_43 = arith.constant 24 : index
    %c0_44 = arith.constant 0 : index
    %70 = vector.load %arg8[%c24_43, %c0_44] : memref<304x16xf32, #tpu.memory_space<vmem>>, vector<256x16xf32>
    %c4 = arith.constant 4 : index
    %c0_45 = arith.constant 0 : index
    %c0_46 = arith.constant 0 : index
    %71 = vector.load %arg6[%c4, %c0_45, %c0_46] : memref<9x16x4xf32, #tpu.memory_space<vmem>>, vector<1x16x4xf32>
    %72 = vector.shape_cast %71 : vector<1x16x4xf32> to vector<16x4xf32>
    %cst_47 = arith.constant dense<0.000000e+00> : vector<256x4xf32>
    %73 = tpu.matmul %70, %72, %cst_47 {dimension_numbers = #tpu.dot_dimension_numbers<[1], [0], [0], [1], [0, 0, 1, 1], [], []>} : vector<256x16xf32>, vector<16x4xf32>, vector<256x4xf32> -> vector<256x4xf32>
    %74 = arith.addf %69, %73 : vector<256x4xf32>
    %c25 = arith.constant 25 : index
    %c0_48 = arith.constant 0 : index
    %75 = vector.load %arg8[%c25, %c0_48] : memref<304x16xf32, #tpu.memory_space<vmem>>, vector<256x16xf32>
    %cst_49 = arith.constant 0.000000e+00 : f32
    %76 = vector.broadcast %cst_49 : f32 to vector<256x16xf32>
    %77 = arith.select %42, %75, %76 : vector<256x16xi1>, vector<256x16xf32>
    %c5 = arith.constant 5 : index
    %c0_50 = arith.constant 0 : index
    %c0_51 = arith.constant 0 : index
    %78 = vector.load %arg6[%c5, %c0_50, %c0_51] : memref<9x16x4xf32, #tpu.memory_space<vmem>>, vector<1x16x4xf32>
    %79 = vector.shape_cast %78 : vector<1x16x4xf32> to vector<16x4xf32>
    %cst_52 = arith.constant dense<0.000000e+00> : vector<256x4xf32>
    %80 = tpu.matmul %77, %79, %cst_52 {dimension_numbers = #tpu.dot_dimension_numbers<[1], [0], [0], [1], [0, 0, 1, 1], [], []>} : vector<256x16xf32>, vector<16x4xf32>, vector<256x4xf32> -> vector<256x4xf32>
    %81 = arith.addf %74, %80 : vector<256x4xf32>
    %c39 = arith.constant 39 : index
    %c0_53 = arith.constant 0 : index
    %82 = vector.load %arg8[%c39, %c0_53] : memref<304x16xf32, #tpu.memory_space<vmem>>, vector<256x16xf32>
    %cst_54 = arith.constant 0.000000e+00 : f32
    %83 = vector.broadcast %cst_54 : f32 to vector<256x16xf32>
    %84 = arith.select %40, %82, %83 : vector<256x16xi1>, vector<256x16xf32>
    %c6 = arith.constant 6 : index
    %c0_55 = arith.constant 0 : index
    %c0_56 = arith.constant 0 : index
    %85 = vector.load %arg6[%c6, %c0_55, %c0_56] : memref<9x16x4xf32, #tpu.memory_space<vmem>>, vector<1x16x4xf32>
    %86 = vector.shape_cast %85 : vector<1x16x4xf32> to vector<16x4xf32>
    %cst_57 = arith.constant dense<0.000000e+00> : vector<256x4xf32>
    %87 = tpu.matmul %84, %86, %cst_57 {dimension_numbers = #tpu.dot_dimension_numbers<[1], [0], [0], [1], [0, 0, 1, 1], [], []>} : vector<256x16xf32>, vector<16x4xf32>, vector<256x4xf32> -> vector<256x4xf32>
    %88 = arith.addf %81, %87 : vector<256x4xf32>
    %c40 = arith.constant 40 : index
    %c0_58 = arith.constant 0 : index
    %89 = vector.load %arg8[%c40, %c0_58] : memref<304x16xf32, #tpu.memory_space<vmem>>, vector<256x16xf32>
    %c7_59 = arith.constant 7 : index
    %c0_60 = arith.constant 0 : index
    %c0_61 = arith.constant 0 : index
    %90 = vector.load %arg6[%c7_59, %c0_60, %c0_61] : memref<9x16x4xf32, #tpu.memory_space<vmem>>, vector<1x16x4xf32>
    %91 = vector.shape_cast %90 : vector<1x16x4xf32> to vector<16x4xf32>
    %cst_62 = arith.constant dense<0.000000e+00> : vector<256x4xf32>
    %92 = tpu.matmul %89, %91, %cst_62 {dimension_numbers = #tpu.dot_dimension_numbers<[1], [0], [0], [1], [0, 0, 1, 1], [], []>} : vector<256x16xf32>, vector<16x4xf32>, vector<256x4xf32> -> vector<256x4xf32>
    %93 = arith.addf %88, %92 : vector<256x4xf32>
    %c41 = arith.constant 41 : index
    %c0_63 = arith.constant 0 : index
    %94 = vector.load %arg8[%c41, %c0_63] : memref<304x16xf32, #tpu.memory_space<vmem>>, vector<256x16xf32>
    %cst_64 = arith.constant 0.000000e+00 : f32
    %95 = vector.broadcast %cst_64 : f32 to vector<256x16xf32>
    %96 = arith.select %42, %94, %95 : vector<256x16xi1>, vector<256x16xf32>
    %c8_65 = arith.constant 8 : index
    %c0_66 = arith.constant 0 : index
    %c0_67 = arith.constant 0 : index
    %97 = vector.load %arg6[%c8_65, %c0_66, %c0_67] : memref<9x16x4xf32, #tpu.memory_space<vmem>>, vector<1x16x4xf32>
    %98 = vector.shape_cast %97 : vector<1x16x4xf32> to vector<16x4xf32>
    %cst_68 = arith.constant dense<0.000000e+00> : vector<256x4xf32>
    %99 = tpu.matmul %96, %98, %cst_68 {dimension_numbers = #tpu.dot_dimension_numbers<[1], [0], [0], [1], [0, 0, 1, 1], [], []>} : vector<256x16xf32>, vector<16x4xf32>, vector<256x4xf32> -> vector<256x4xf32>
    %100 = arith.addf %93, %99 : vector<256x4xf32>
    %101 = tpu.concatenate %1, %100 in 1 : vector<256x4xf32>, vector<256x4xf32> -> vector<256x8xf32>
    %c0_69 = arith.constant 0 : index
    %c0_70 = arith.constant 0 : index
    %c0_71 = arith.constant 0 : index
    %102 = vector.load %arg7[%c0_69, %c0_70, %c0_71] : memref<1x256x8xf32, #tpu.memory_space<vmem>>, vector<1x256x8xf32>
    %103 = vector.shape_cast %102 : vector<1x256x8xf32> to vector<256x8xf32>
    %104 = vector.shape_cast %101 : vector<256x8xf32> to vector<1x256x8xf32>
    tpu.vector_store %arg7[%c0_69, %c0_70, %c0_71], %104 {strides = array<i32>} : memref<1x256x8xf32, #tpu.memory_space<vmem>>, vector<1x256x8xf32>,
    return
  }
  func.func @transform_0(%arg0: i32) -> (i32, i32, i32) {
    %c0_i32 = arith.constant 0 : i32
    %c0_i32_0 = arith.constant 0 : i32
    %c0_i32_1 = arith.constant 0 : i32
    return %arg0, %c0_i32, %c0_i32_0 : i32, i32, i32
  }
  func.func @transform_1(%arg0: i32) -> (i32, i32) {
    %c0_i32 = arith.constant 0 : i32
    %c0_i32_0 = arith.constant 0 : i32
    %c0_i32_1 = arith.constant 0 : i32
    return %c0_i32, %c0_i32_0 : i32, i32
  }
  func.func @transform_2(%arg0: i32) -> (i32, i32) {
    %c0_i32 = arith.constant 0 : i32
    %c0_i32_0 = arith.constant 0 : i32
    %c0_i32_1 = arith.constant 0 : i32
    return %c0_i32, %c0_i32_0 : i32, i32
  }
  func.func @transform_3(%arg0: i32) -> (i32, i32) {
    %c0_i32 = arith.constant 0 : i32
    %c0_i32_0 = arith.constant 0 : i32
    %c0_i32_1 = arith.constant 0 : i32
    return %c0_i32, %c0_i32_0 : i32, i32
  }
  func.func @transform_4(%arg0: i32) -> (i32, i32) {
    %c0_i32 = arith.constant 0 : i32
    %c0_i32_0 = arith.constant 0 : i32
    %c0_i32_1 = arith.constant 0 : i32
    return %c0_i32, %c0_i32_0 : i32, i32
  }
  func.func @transform_5(%arg0: i32) -> (i32, i32, i32) {
    %c0_i32 = arith.constant 0 : i32
    %c0_i32_0 = arith.constant 0 : i32
    %c0_i32_1 = arith.constant 0 : i32
    %c0_i32_2 = arith.constant 0 : i32
    return %c0_i32, %c0_i32_0, %c0_i32_1 : i32, i32, i32
  }
  func.func @transform_6(%arg0: i32) -> (i32, i32, i32) {
    %c0_i32 = arith.constant 0 : i32
    %c0_i32_0 = arith.constant 0 : i32
    %c0_i32_1 = arith.constant 0 : i32
    return %arg0, %c0_i32, %c0_i32_0 : i32, i32, i32
  }
}

</mosaic_0001>

<llo_original>
// kernel: tpu_custom_call.1
$region0: #{tpu_custom_call.1}
  #allocation0 [shape = 'u32[]', space=smem, size = 0x4, offset = 0x4, fixed_abs, tag = 'smem constant byte address 0x4 - core index']
  #allocation1 [shape = 'u32[144,128]{1,0:T(1,128)}', space=vmem, size = 0x12000, scoped, tag = 'internal scratch']
  #allocation2 [shape = 'f32[304,16]{1,0:T(8,128)}', space=vmem, size = 0x26000, scoped, tag = 'scratch operand']
  %s0 = inlined_call_operand.vmem [shape: f32[2,256,4], index: 0, kind: input, shape index: {}]
  %s1 = inlined_call_operand.vmem [shape: f32[1,4], index: 1, kind: input, shape index: {}]
  %s2 = inlined_call_operand.vmem [shape: f32[1,4], index: 2, kind: input, shape index: {}]
  %s3 = inlined_call_operand.vmem [shape: f32[4,16], index: 3, kind: input, shape index: {}]
  %s4 = inlined_call_operand.vmem [shape: f32[1,16], index: 4, kind: input, shape index: {}]
  %s5 = inlined_call_operand.vmem [shape: f32[9,16,4], index: 5, kind: input, shape index: {}]
  %s6 = inlined_call_operand.vmem [shape: f32[2,256,8], index: 6, kind: output, shape index: {}]
  %s7 = sld [smem:[#allocation0]]
  $region57: #{tpu_custom_call.1} parent=0
    _
  %s9 = ssub.s32 1, %s7
  %s10 = scalar_select 0, %s9, %s7
  loop: start=0, step=1, limit=4
  $region2: #{tpu_custom_call.1} parent=0 // loop_pre_header
    _
  $region3: #{tpu_custom_call.1} parent=0 // loop_header
    %s12 = sphi 0, %s16
    %p13 = scmp.ge.s32.totalorder %s12, 4
    %s22 = sphi 0, %s24
    %s25 = sphi 0, %s22
    %s26 = sphi 0, %s25
    %s42 = sphi 0, %s26
    %s46 = sphi 0, %s46
    %s48 = sphi 0, %s46
    %s49 = sphi 0, %s48
    %s63 = sphi 0, %s49
    %s67 = sphi 0, %s67
    %s69 = sphi 0, %s67
    %s70 = sphi 0, %s69
    %s84 = sphi 0, %s70
    %s88 = sphi 0, %s88
    %s90 = sphi 0, %s88
    %s91 = sphi 0, %s90
    %s105 = sphi 0, %s91
    %s109 = sphi 0, %s109
    %s111 = sphi 0, %s109
    %s112 = sphi 0, %s111
    %s126 = sphi 0, %s112
    %s130 = sphi 0, %s130
    %s132 = sphi 0, %s130
    %s133 = sphi 0, %s132
    %s147 = sphi 0, %s133
    %s153 = sphi 0, %s155
    %s156 = sphi 0, %s153
    %s157 = sphi 0, %s156
    %s173 = sphi 0, %s157
  $region4: #{tpu_custom_call.1} parent=0 // loop_header_branch
    %15 = sbr.rel (%p13) target = $region8
  $region5: #{tpu_custom_call.1} parent=0 // loop_body
    %s17 = ssub.s32 %s12, 1
    %s18 = ssub.s32 %s12, 2
    %s19 = sadd.s32 %s12, 1
    %s20 = ssub.s32 %s12, %s19
    %p21 = scmp.eq.s32.totalorder %s20, 0
    %s23 = sadd.s32 %s22, 1
    %s24 = scalar_select %p21, %s22, %s23
    %p27 = pneg %p21
    %p28 = scmp.eq.s32.totalorder %s12, 1
    %p29 = por %p27, %p28
    %p30 = scmp.ne.s32.totalorder %s22, %s25
    %p31 = scmp.eq.s32.totalorder %s12, 0
    %p32 = por %p30, %p31
    %p33 = scmp.ne.s32.totalorder %s22, %s25
    %p34 = scmp.eq.s32.totalorder %s17, 1
    %p35 = por %p33, %p34
    %p36 = scmp.ne.s32.totalorder %s25, %s26
    %p37 = scmp.eq.s32.totalorder %s17, 0
    %p38 = por %p36, %p37
    %p39 = scmp.ne.s32.totalorder %s25, %s26
    %p40 = scmp.eq.s32.totalorder %s18, 1
    %p41 = por %p39, %p40
    %p43 = scmp.ne.s32.totalorder %s26, %s42
    %p44 = scmp.eq.s32.totalorder %s18, 0
    %p45 = por %p43, %p44
    %s47 = sadd.s32 %s46, 1
    %p50 = scmp.eq.s32.totalorder %s12, 1
    %p51 = scmp.ne.s32.totalorder %s46, %s48
    %p52 = scmp.eq.s32.totalorder %s12, 0
    %p53 = por %p51, %p52
    %p54 = scmp.ne.s32.totalorder %s46, %s48
    %p55 = scmp.eq.s32.totalorder %s17, 1
    %p56 = por %p54, %p55
    %p57 = scmp.ne.s32.totalorder %s48, %s49
    %p58 = scmp.eq.s32.totalorder %s17, 0
    %p59 = por %p57, %p58
    %p60 = scmp.ne.s32.totalorder %s48, %s49
    %p61 = scmp.eq.s32.totalorder %s18, 1
    %p62 = por %p60, %p61
    %p64 = scmp.ne.s32.totalorder %s49, %s63
    %p65 = scmp.eq.s32.totalorder %s18, 0
    %p66 = por %p64, %p65
    %s68 = sadd.s32 %s67, 1
    %p71 = scmp.eq.s32.totalorder %s12, 1
    %p72 = scmp.ne.s32.totalorder %s67, %s69
    %p73 = scmp.eq.s32.totalorder %s12, 0
    %p74 = por %p72, %p73
    %p75 = scmp.ne.s32.totalorder %s67, %s69
    %p76 = scmp.eq.s32.totalorder %s17, 1
    %p77 = por %p75, %p76
    %p78 = scmp.ne.s32.totalorder %s69, %s70
    %p79 = scmp.eq.s32.totalorder %s17, 0
    %p80 = por %p78, %p79
    %p81 = scmp.ne.s32.totalorder %s69, %s70
    %p82 = scmp.eq.s32.totalorder %s18, 1
    %p83 = por %p81, %p82
    %p85 = scmp.ne.s32.totalorder %s70, %s84
    %p86 = scmp.eq.s32.totalorder %s18, 0
    %p87 = por %p85, %p86
    %s89 = sadd.s32 %s88, 1
    %p92 = scmp.eq.s32.totalorder %s12, 1
    %p93 = scmp.ne.s32.totalorder %s88, %s90
    %p94 = scmp.eq.s32.totalorder %s12, 0
    %p95 = por %p93, %p94
    %p96 = scmp.ne.s32.totalorder %s88, %s90
    %p97 = scmp.eq.s32.totalorder %s17, 1
    %p98 = por %p96, %p97
    %p99 = scmp.ne.s32.totalorder %s90, %s91
    %p100 = scmp.eq.s32.totalorder %s17, 0
    %p101 = por %p99, %p100
    %p102 = scmp.ne.s32.totalorder %s90, %s91
    %p103 = scmp.eq.s32.totalorder %s18, 1
    %p104 = por %p102, %p103
    %p106 = scmp.ne.s32.totalorder %s91, %s105
    %p107 = scmp.eq.s32.totalorder %s18, 0
    %p108 = por %p106, %p107
    %s110 = sadd.s32 %s109, 1
    %p113 = scmp.eq.s32.totalorder %s12, 1
    %p114 = scmp.ne.s32.totalorder %s109, %s111
    %p115 = scmp.eq.s32.totalorder %s12, 0
    %p116 = por %p114, %p115
    %p117 = scmp.ne.s32.totalorder %s109, %s111
    %p118 = scmp.eq.s32.totalorder %s17, 1
    %p119 = por %p117, %p118
    %p120 = scmp.ne.s32.totalorder %s111, %s112
    %p121 = scmp.eq.s32.totalorder %s17, 0
    %p122 = por %p120, %p121
    %p123 = scmp.ne.s32.totalorder %s111, %s112
    %p124 = scmp.eq.s32.totalorder %s18, 1
    %p125 = por %p123, %p124
    %p127 = scmp.ne.s32.totalorder %s112, %s126
    %p128 = scmp.eq.s32.totalorder %s18, 0
    %p129 = por %p127, %p128
    %s131 = sadd.s32 %s130, 1
    %p134 = scmp.eq.s32.totalorder %s12, 1
    %p135 = scmp.ne.s32.totalorder %s130, %s132
    %p136 = scmp.eq.s32.totalorder %s12, 0
    %p137 = por %p135, %p136
    %p138 = scmp.ne.s32.totalorder %s130, %s132
    %p139 = scmp.eq.s32.totalorder %s17, 1
    %p140 = por %p138, %p139
    %p141 = scmp.ne.s32.totalorder %s132, %s133
    %p142 = scmp.eq.s32.totalorder %s17, 0
    %p143 = por %p141, %p142
    %p144 = scmp.ne.s32.totalorder %s132, %s133
    %p145 = scmp.eq.s32.totalorder %s18, 1
    %p146 = por %p144, %p145
    %p148 = scmp.ne.s32.totalorder %s133, %s147
    %p149 = scmp.eq.s32.totalorder %s18, 0
    %p150 = por %p148, %p149
    %s151 = ssub.s32 %s12, %s19
    %p152 = scmp.eq.s32.totalorder %s151, 0
    %s154 = sadd.s32 %s153, 1
    %s155 = scalar_select %p152, %s153, %s154
    %p158 = pneg %p152
    %p159 = scmp.eq.s32.totalorder %s12, 1
    %p160 = por %p158, %p159
    %p161 = scmp.ne.s32.totalorder %s153, %s156
    %p162 = scmp.eq.s32.totalorder %s12, 0
    %p163 = por %p161, %p162
    %p164 = scmp.ne.s32.totalorder %s153, %s156
    %p165 = scmp.eq.s32.totalorder %s17, 1
    %p166 = por %p164, %p165
    %p167 = scmp.ne.s32.totalorder %s156, %s157
    %p168 = scmp.eq.s32.totalorder %s17, 0
    %p169 = por %p167, %p168
    %p170 = scmp.ne.s32.totalorder %s156, %s157
    %p171 = scmp.eq.s32.totalorder %s18, 1
    %p172 = por %p170, %p171
    %p174 = scmp.ne.s32.totalorder %s157, %s173
    %p175 = scmp.eq.s32.totalorder %s18, 0
    %p176 = por %p174, %p175
    %p177 = scmp.le.s32.totalorder 1, %s12
    %p178 = scmp.lt.s32.totalorder %s12, 3
    %p179 = pnand %p177, %p178
    %p180 = pneg %p179
    // Predicated region
    $region9: #{tpu_custom_call.1} parent=5 // pred_check
      _
    $region10: #{tpu_custom_call.1} parent=5 // pred_check_branch
      %182 = sbr.rel (%p179) target = $region12
    $region11: #{tpu_custom_call.1} parent=5 // pred_region
      %s183 = ssub.s32 %s12, 1
      // Predicated region
      $region13: #{tpu_custom_call.1} parent=11 // pred_check
        %p184 = pneg %p59
      $region14: #{tpu_custom_call.1} parent=11 // pred_check_branch
        %186 = sbr.rel (%p184) target = $region16
      $region15: #{tpu_custom_call.1} parent=11 // pred_region
        _
      $region16: #{tpu_custom_call.1} parent=11 // pred_fallthru
        _
      // Predicated region
      $region17: #{tpu_custom_call.1} parent=11 // pred_check
        %p187 = pneg %p80
      $region18: #{tpu_custom_call.1} parent=11 // pred_check_branch
        %189 = sbr.rel (%p187) target = $region20
      $region19: #{tpu_custom_call.1} parent=11 // pred_region
        _
      $region20: #{tpu_custom_call.1} parent=11 // pred_fallthru
        _
      // Predicated region
      $region21: #{tpu_custom_call.1} parent=11 // pred_check
        %p190 = pneg %p101
      $region22: #{tpu_custom_call.1} parent=11 // pred_check_branch
        %192 = sbr.rel (%p190) target = $region24
      $region23: #{tpu_custom_call.1} parent=11 // pred_region
        _
      $region24: #{tpu_custom_call.1} parent=11 // pred_fallthru
        _
      // Predicated region
      $region25: #{tpu_custom_call.1} parent=11 // pred_check
        %p193 = pneg %p122
      $region26: #{tpu_custom_call.1} parent=11 // pred_check_branch
        %195 = sbr.rel (%p193) target = $region28
      $region27: #{tpu_custom_call.1} parent=11 // pred_region
        _
      $region28: #{tpu_custom_call.1} parent=11 // pred_fallthru
        _
      // Predicated region
      $region29: #{tpu_custom_call.1} parent=11 // pred_check
        %p196 = pneg %p143
      $region30: #{tpu_custom_call.1} parent=11 // pred_check_branch
        %198 = sbr.rel (%p196) target = $region32
      $region31: #{tpu_custom_call.1} parent=11 // pred_region
        _
      $region32: #{tpu_custom_call.1} parent=11 // pred_fallthru
        _
    $region12: #{tpu_custom_call.1} parent=5 // pred_fallthru
      _
    %p199 = scmp.lt.s32.totalorder %s12, 2
    // Predicated region
    $region33: #{tpu_custom_call.1} parent=5 // pred_check
      %p200 = pneg %p199
    $region34: #{tpu_custom_call.1} parent=5 // pred_check_branch
      %202 = sbr.rel (%p200) target = $region36
    $region35: #{tpu_custom_call.1} parent=5 // pred_region
      // Predicated region
      $region37: #{tpu_custom_call.1} parent=35 // pred_check
        %p203 = pneg %p32
      $region38: #{tpu_custom_call.1} parent=35 // pred_check_branch
        %205 = sbr.rel (%p203) target = $region40
      $region39: #{tpu_custom_call.1} parent=35 // pred_region
        %p206 = scmp.lt.s32.totalorder %s12, 1
        %s207 = scalar_select %p206, %s12, 1
        %s208 = smul.addr %s207, 32
        %s209 = smul.addr %s208, 8
        %s210 = scalar_lea.vmem %s0, %s209
      $region40: #{tpu_custom_call.1} parent=35 // pred_fallthru
        _
    $region36: #{tpu_custom_call.1} parent=5 // pred_fallthru
      _
    %p211 = scmp.le.s32.totalorder 1, %s12
    %p212 = scmp.lt.s32.totalorder %s12, 3
    %p213 = pnand %p211, %p212
    %p214 = pneg %p213
    // Predicated region
    $region41: #{tpu_custom_call.1} parent=5 // pred_check
      _
    $region42: #{tpu_custom_call.1} parent=5 // pred_check_branch
      %216 = sbr.rel (%p213) target = $region44
    $region43: #{tpu_custom_call.1} parent=5 // pred_region
      %s217 = ssub.s32 %s12, 1
      %p218 = scmp.lt.s32.totalorder %s17, 1
      %s219 = scalar_select %p218, %s17, 1
      %s220 = smul.addr %s219, 32
      %s221 = smul.addr %s220, 8
      %s222 = scalar_lea.vmem %s0, %s221
      %p223 = pneg %p38
      %p224 = pneg %p35
      %p225 = pneg %p59
      %p226 = pneg %p56
      %p227 = pneg %p80
      %p228 = pneg %p77
      %p229 = pneg %p101
      %p230 = pneg %p98
      %p231 = pneg %p122
      %p232 = pneg %p119
      %p233 = pneg %p143
      %p234 = pneg %p140
      %p235 = pneg %p169
      %p236 = pneg %p166
      %p237 = scmp.lt.s32.totalorder %s17, 1
      %s238 = scalar_select %p237, %s17, 1
      %s239 = smul.addr %s238, 32
      %s240 = smul.addr %s239, 8
      %s241 = scalar_lea.vmem %s6, %s240
      %p242 = scmp.lt.s32.totalorder %s17, 1
      %s243 = scalar_select %p242, %s17, 1
      %s244 = smul.addr %s243, 32
      %s245 = smul.addr %s244, 8
      %s246 = scalar_lea.vmem %s0, %s245
      %p247 = scmp.lt.s32.totalorder %s17, 1
      %s248 = scalar_select %p247, %s17, 1
      %s249 = smul.addr %s248, 32
      %s250 = smul.addr %s249, 8
      %s251 = scalar_lea.vmem %s6, %s250
      %v252 = vld [vmem:[%s246] sm:$0xff]
      %v253 = vld [vmem:[%s246 + $0x8] sm:$0xff]
      %v254 = vld [vmem:[%s246 + $0x10] sm:$0xff]
      %v255 = vld [vmem:[%s246 + $0x18] sm:$0xff]
      %v256 = vld [vmem:[%s246 + $0x20] sm:$0xff]
      %v257 = vld [vmem:[%s246 + $0x28] sm:$0xff]
      %v258 = vld [vmem:[%s246 + $0x30] sm:$0xff]
      %v259 = vld [vmem:[%s246 + $0x38] sm:$0xff]
      %v260 = vld [vmem:[%s246 + $0x40] sm:$0xff]
      %v261 = vld [vmem:[%s246 + $0x48] sm:$0xff]
      %v262 = vld [vmem:[%s246 + $0x50] sm:$0xff]
      %v263 = vld [vmem:[%s246 + $0x58] sm:$0xff]
      %v264 = vld [vmem:[%s246 + $0x60] sm:$0xff]
      %v265 = vld [vmem:[%s246 + $0x68] sm:$0xff]
      %v266 = vld [vmem:[%s246 + $0x70] sm:$0xff]
      %v267 = vld [vmem:[%s246 + $0x78] sm:$0xff]
      %v268 = vld [vmem:[%s246 + $0x80] sm:$0xff]
      %v269 = vld [vmem:[%s246 + $0x88] sm:$0xff]
      %v270 = vld [vmem:[%s246 + $0x90] sm:$0xff]
      %v271 = vld [vmem:[%s246 + $0x98] sm:$0xff]
      %v272 = vld [vmem:[%s246 + $0xa0] sm:$0xff]
      %v273 = vld [vmem:[%s246 + $0xa8] sm:$0xff]
      %v274 = vld [vmem:[%s246 + $0xb0] sm:$0xff]
      %v275 = vld [vmem:[%s246 + $0xb8] sm:$0xff]
      %v276 = vld [vmem:[%s246 + $0xc0] sm:$0xff]
      %v277 = vld [vmem:[%s246 + $0xc8] sm:$0xff]
      %v278 = vld [vmem:[%s246 + $0xd0] sm:$0xff]
      %v279 = vld [vmem:[%s246 + $0xd8] sm:$0xff]
      %v280 = vld [vmem:[%s246 + $0xe0] sm:$0xff]
      %v281 = vld [vmem:[%s246 + $0xe8] sm:$0xff]
      %v282 = vld [vmem:[%s246 + $0xf0] sm:$0xff]
      %v283 = vld [vmem:[%s246 + $0xf8] sm:$0xff]
      %v284 = vld [vmem:[%s1] sm:$0x1]
      %v286 = vlaneseq
      %v287 = vshrl.u32 %v286, 7
      %v288 = vsub.s32 0, %v287
      %v289 = vrot.slane %v284, %v288
      %v291 = vmul.f32 %v252, %v289
      %v292 = vmul.f32 %v253, %v289
      %v293 = vmul.f32 %v254, %v289
      %v294 = vmul.f32 %v255, %v289
      %v295 = vmul.f32 %v256, %v289
      %v296 = vmul.f32 %v257, %v289
      %v297 = vmul.f32 %v258, %v289
      %v298 = vmul.f32 %v259, %v289
      %v299 = vmul.f32 %v260, %v289
      %v300 = vmul.f32 %v261, %v289
      %v301 = vmul.f32 %v262, %v289
      %v302 = vmul.f32 %v263, %v289
      %v303 = vmul.f32 %v264, %v289
      %v304 = vmul.f32 %v265, %v289
      %v305 = vmul.f32 %v266, %v289
      %v306 = vmul.f32 %v267, %v289
      %v307 = vmul.f32 %v268, %v289
      %v308 = vmul.f32 %v269, %v289
      %v309 = vmul.f32 %v270, %v289
      %v310 = vmul.f32 %v271, %v289
      %v311 = vmul.f32 %v272, %v289
      %v312 = vmul.f32 %v273, %v289
      %v313 = vmul.f32 %v274, %v289
      %v314 = vmul.f32 %v275, %v289
      %v315 = vmul.f32 %v276, %v289
      %v316 = vmul.f32 %v277, %v289
      %v317 = vmul.f32 %v278, %v289
      %v318 = vmul.f32 %v279, %v289
      %v319 = vmul.f32 %v280, %v289
      %v320 = vmul.f32 %v281, %v289
      %v321 = vmul.f32 %v282, %v289
      %v322 = vmul.f32 %v283, %v289
      %v323 = vld [vmem:[%s2] sm:$0x1]
      %v325 = vlaneseq
      %v326 = vshrl.u32 %v325, 7
      %v327 = vsub.s32 0, %v326
      %v328 = vrot.slane %v323, %v327
      %v330 = vadd.f32 %v291, %v328
      %v331 = vadd.f32 %v292, %v328
      %v332 = vadd.f32 %v293, %v328
      %v333 = vadd.f32 %v294, %v328
      %v334 = vadd.f32 %v295, %v328
      %v335 = vadd.f32 %v296, %v328
      %v336 = vadd.f32 %v297, %v328
      %v337 = vadd.f32 %v298, %v328
      %v338 = vadd.f32 %v299, %v328
      %v339 = vadd.f32 %v300, %v328
      %v340 = vadd.f32 %v301, %v328
      %v341 = vadd.f32 %v302, %v328
      %v342 = vadd.f32 %v303, %v328
      %v343 = vadd.f32 %v304, %v328
      %v344 = vadd.f32 %v305, %v328
      %v345 = vadd.f32 %v306, %v328
      %v346 = vadd.f32 %v307, %v328
      %v347 = vadd.f32 %v308, %v328
      %v348 = vadd.f32 %v309, %v328
      %v349 = vadd.f32 %v310, %v328
      %v350 = vadd.f32 %v311, %v328
      %v351 = vadd.f32 %v312, %v328
      %v352 = vadd.f32 %v313, %v328
      %v353 = vadd.f32 %v314, %v328
      %v354 = vadd.f32 %v315, %v328
      %v355 = vadd.f32 %v316, %v328
      %v356 = vadd.f32 %v317, %v328
      %v357 = vadd.f32 %v318, %v328
      %v358 = vadd.f32 %v319, %v328
      %v359 = vadd.f32 %v320, %v328
      %v360 = vadd.f32 %v321, %v328
      %v361 = vadd.f32 %v322, %v328
      %v362 = vmax.f32 %v330, 0.0
      %v363 = vmax.f32 %v331, 0.0
      %v364 = vmax.f32 %v332, 0.0
      %v365 = vmax.f32 %v333, 0.0
      %v366 = vmax.f32 %v334, 0.0
      %v367 = vmax.f32 %v335, 0.0
      %v368 = vmax.f32 %v336, 0.0
      %v369 = vmax.f32 %v337, 0.0
      %v370 = vmax.f32 %v338, 0.0
      %v371 = vmax.f32 %v339, 0.0
      %v372 = vmax.f32 %v340, 0.0
      %v373 = vmax.f32 %v341, 0.0
      %v374 = vmax.f32 %v342, 0.0
      %v375 = vmax.f32 %v343, 0.0
      %v376 = vmax.f32 %v344, 0.0
      %v377 = vmax.f32 %v345, 0.0
      %v378 = vmax.f32 %v346, 0.0
      %v379 = vmax.f32 %v347, 0.0
      %v380 = vmax.f32 %v348, 0.0
      %v381 = vmax.f32 %v349, 0.0
      %v382 = vmax.f32 %v350, 0.0
      %v383 = vmax.f32 %v351, 0.0
      %v384 = vmax.f32 %v352, 0.0
      %v385 = vmax.f32 %v353, 0.0
      %v386 = vmax.f32 %v354, 0.0
      %v387 = vmax.f32 %v355, 0.0
      %v388 = vmax.f32 %v356, 0.0
      %v389 = vmax.f32 %v357, 0.0
      %v390 = vmax.f32 %v358, 0.0
      %v391 = vmax.f32 %v359, 0.0
      %v392 = vmax.f32 %v360, 0.0
      %v393 = vmax.f32 %v361, 0.0
      %v394 = vld [vmem:[%s3] sm:$0xf]
      %v395 = vld [vmem:[%s4] sm:$0x1]
      %v397 = vlaneseq
      %v398 = vshrl.u32 %v397, 7
      %v399 = vsub.s32 0, %v398
      %v400 = vrot.slane %v395, %v399
      %vm402 = vcmask 31744
      %v404 = vsel %vm402, %v362, 0
      %v407 = vsel %vm402, %v363, 0
      %v410 = vsel %vm402, %v364, 0
      %v413 = vsel %vm402, %v365, 0
      %v416 = vsel %vm402, %v366, 0
      %v419 = vsel %vm402, %v367, 0
      %v422 = vsel %vm402, %v368, 0
      %v425 = vsel %vm402, %v369, 0
      %v428 = vsel %vm402, %v370, 0
      %v431 = vsel %vm402, %v371, 0
      %v434 = vsel %vm402, %v372, 0
      %v437 = vsel %vm402, %v373, 0
      %v440 = vsel %vm402, %v374, 0
      %v443 = vsel %vm402, %v375, 0
      %v446 = vsel %vm402, %v376, 0
      %v449 = vsel %vm402, %v377, 0
      %v452 = vsel %vm402, %v378, 0
      %v455 = vsel %vm402, %v379, 0
      %v458 = vsel %vm402, %v380, 0
      %v461 = vsel %vm402, %v381, 0
      %v464 = vsel %vm402, %v382, 0
      %v467 = vsel %vm402, %v383, 0
      %v470 = vsel %vm402, %v384, 0
      %v473 = vsel %vm402, %v385, 0
      %v476 = vsel %vm402, %v386, 0
      %v479 = vsel %vm402, %v387, 0
      %v482 = vsel %vm402, %v388, 0
      %v485 = vsel %vm402, %v389, 0
      %v488 = vsel %vm402, %v390, 0
      %v491 = vsel %vm402, %v391, 0
      %v494 = vsel %vm402, %v392, 0
      %v497 = vsel %vm402, %v393, 0
      %vm499 = vcmask 1043456
      %v501 = vsel %vm499, %v394, 0
      %503 = vmatprep.subr.mxu0 0.0
      %504 = vmatpush1.msra.mxu0 %v501
      %505 = vmatprep.subr.mxu0 0.0
      %506 = vmatpush1.msra.mxu0 0.0
      %507 = vmatprep.subr.mxu0 0.0
      %508 = vmatpush1.msra.mxu0 0.0
      %509 = vmatprep.subr.mxu0 0.0
      %510 = vmatpush1.msra.mxu0 0.0
      %511 = vmatprep.subr.mxu0 0.0
      %512 = vmatpush1.msra.mxu0 0.0
      %513 = vmatprep.subr.mxu0 0.0
      %514 = vmatpush1.msra.mxu0 0.0
      %515 = vmatprep.subr.mxu0 0.0
      %516 = vmatpush1.msra.mxu0 0.0
      %517 = vmatprep.subr.mxu0 0.0
      %518 = vmatpush1.msra.mxu0 0.0
      %519 = vmatprep.subr.mxu0 0.0
      %520 = vmatpush1.msra.mxu0 0.0
      %521 = vmatprep.subr.mxu0 0.0
      %522 = vmatpush1.msra.mxu0 0.0
      %523 = vmatprep.subr.mxu0 0.0
      %524 = vmatpush1.msra.mxu0 0.0
      %525 = vmatprep.subr.mxu0 0.0
      %526 = vmatpush1.msra.mxu0 0.0
      %527 = vmatprep.subr.mxu0 0.0
      %528 = vmatpush1.msra.mxu0 0.0
      %529 = vmatprep.subr.mxu0 0.0
      %530 = vmatpush1.msra.mxu0 0.0
      %531 = vmatprep.subr.mxu0 0.0
      %532 = vmatpush1.msra.mxu0 0.0
      %533 = vmatprep.subr.mxu0 0.0
      %534 = vmatpush1.msra.mxu0 0.0
      %535 = vmatprep.subr.mxu0 0.0
      %536 = vmatpush1.msra.mxu0 0.0
      %537 = vmatprep.subr.mxu0 0.0
      %538 = vmatpush1.msra.mxu0 0.0
      %539 = vmatprep.subr.mxu0 0.0
      %540 = vmatpush1.msra.mxu0 0.0
      %541 = vmatprep.subr.mxu0 0.0
      %542 = vmatpush1.msra.mxu0 0.0
      %543 = vmatprep.subr.mxu0 0.0
      %544 = vmatpush1.msra.mxu0 0.0
      %545 = vmatprep.subr.mxu0 0.0
      %546 = vmatpush1.msra.mxu0 0.0
      %547 = vmatprep.subr.mxu0 0.0
      %548 = vmatpush1.msra.mxu0 0.0
      %549 = vmatprep.subr.mxu0 0.0
      %550 = vmatpush1.msra.mxu0 0.0
      %551 = vmatprep.subr.mxu0 0.0
      %552 = vmatpush1.msra.mxu0 0.0
      %553 = vmatprep.subr.mxu0 0.0
      %554 = vmatpush1.msra.mxu0 0.0
      %555 = vmatprep.subr.mxu0 0.0
      %556 = vmatpush1.msra.mxu0 0.0
      %557 = vmatprep.subr.mxu0 0.0
      %558 = vmatpush1.msra.mxu0 0.0
      %559 = vmatprep.subr.mxu0 0.0
      %560 = vmatpush1.msra.mxu0 0.0
      %561 = vmatprep.subr.mxu0 0.0
      %562 = vmatpush1.msra.mxu0 0.0
      %563 = vmatprep.subr.mxu0 0.0
      %564 = vmatpush1.msra.mxu0 0.0
      %565 = vmatprep.subr.mxu0 0.0
      %566 = vmatpush1.msra.mxu0 0.0
      %567 = vmatprep.mubr.f32.mxu0 0.0
      %568 = vmatmul.mubr.f32.gmra.mrb[0].mxu0 %v404
      %v569 = vpop.f32.mrb[0].mxu0
      %v570 = vadd.f32 %v400, %v569
      %v571 = vpop.f32.mrb[0].mxu0
      %572 = vmatprep.mubr.f32.mxu0 0.0
      %573 = vmatmul.mubr.f32.gmra.mrb[0].mxu0 %v407
      %v574 = vpop.f32.mrb[0].mxu0
      %v575 = vadd.f32 %v400, %v574
      %v576 = vpop.f32.mrb[0].mxu0
      %577 = vmatprep.mubr.f32.mxu0 0.0
      %578 = vmatmul.mubr.f32.gmra.mrb[0].mxu0 %v410
      %v579 = vpop.f32.mrb[0].mxu0
      %v580 = vadd.f32 %v400, %v579
      %v581 = vpop.f32.mrb[0].mxu0
      %582 = vmatprep.mubr.f32.mxu0 0.0
      %583 = vmatmul.mubr.f32.gmra.mrb[0].mxu0 %v413
      %v584 = vpop.f32.mrb[0].mxu0
      %v585 = vadd.f32 %v400, %v584
      %v586 = vpop.f32.mrb[0].mxu0
      %587 = vmatprep.mubr.f32.mxu0 0.0
      %588 = vmatmul.mubr.f32.gmra.mrb[0].mxu0 %v416
      %v589 = vpop.f32.mrb[0].mxu0
      %v590 = vadd.f32 %v400, %v589
      %v591 = vpop.f32.mrb[0].mxu0
      %592 = vmatprep.mubr.f32.mxu0 0.0
      %593 = vmatmul.mubr.f32.gmra.mrb[0].mxu0 %v419
      %v594 = vpop.f32.mrb[0].mxu0
      %v595 = vadd.f32 %v400, %v594
      %v596 = vpop.f32.mrb[0].mxu0
      %597 = vmatprep.mubr.f32.mxu0 0.0
      %598 = vmatmul.mubr.f32.gmra.mrb[0].mxu0 %v422
      %v599 = vpop.f32.mrb[0].mxu0
      %v600 = vadd.f32 %v400, %v599
      %v601 = vpop.f32.mrb[0].mxu0
      %602 = vmatprep.mubr.f32.mxu0 0.0
      %603 = vmatmul.mubr.f32.gmra.mrb[0].mxu0 %v425
      %v604 = vpop.f32.mrb[0].mxu0
      %v605 = vadd.f32 %v400, %v604
      %v606 = vpop.f32.mrb[0].mxu0
      %607 = vmatprep.mubr.f32.mxu0 0.0
      %608 = vmatmul.mubr.f32.gmra.mrb[0].mxu0 %v428
      %v609 = vpop.f32.mrb[0].mxu0
      %v610 = vadd.f32 %v400, %v609
      %v611 = vpop.f32.mrb[0].mxu0
      %612 = vmatprep.mubr.f32.mxu0 0.0
      %613 = vmatmul.mubr.f32.gmra.mrb[0].mxu0 %v431
      %v614 = vpop.f32.mrb[0].mxu0
      %v615 = vadd.f32 %v400, %v614
      %v616 = vpop.f32.mrb[0].mxu0
      %617 = vmatprep.mubr.f32.mxu0 0.0
      %618 = vmatmul.mubr.f32.gmra.mrb[0].mxu0 %v434
      %v619 = vpop.f32.mrb[0].mxu0
      %v620 = vadd.f32 %v400, %v619
      %v621 = vpop.f32.mrb[0].mxu0
      %622 = vmatprep.mubr.f32.mxu0 0.0
      %623 = vmatmul.mubr.f32.gmra.mrb[0].mxu0 %v437
      %v624 = vpop.f32.mrb[0].mxu0
      %v625 = vadd.f32 %v400, %v624
      %v626 = vpop.f32.mrb[0].mxu0
      %627 = vmatprep.mubr.f32.mxu0 0.0
      %628 = vmatmul.mubr.f32.gmra.mrb[0].mxu0 %v440
      %v629 = vpop.f32.mrb[0].mxu0
      %v630 = vadd.f32 %v400, %v629
      %v631 = vpop.f32.mrb[0].mxu0
      %632 = vmatprep.mubr.f32.mxu0 0.0
      %633 = vmatmul.mubr.f32.gmra.mrb[0].mxu0 %v443
      %v634 = vpop.f32.mrb[0].mxu0
      %v635 = vadd.f32 %v400, %v634
      %v636 = vpop.f32.mrb[0].mxu0
      %637 = vmatprep.mubr.f32.mxu0 0.0
      %638 = vmatmul.mubr.f32.gmra.mrb[0].mxu0 %v446
      %v639 = vpop.f32.mrb[0].mxu0
      %v640 = vadd.f32 %v400, %v639
      %v641 = vpop.f32.mrb[0].mxu0
      %642 = vmatprep.mubr.f32.mxu0 0.0
      %643 = vmatmul.mubr.f32.gmra.mrb[0].mxu0 %v449
      %v644 = vpop.f32.mrb[0].mxu0
      %v645 = vadd.f32 %v400, %v644
      %v646 = vpop.f32.mrb[0].mxu0
      %647 = vmatprep.mubr.f32.mxu0 0.0
      %648 = vmatmul.mubr.f32.gmra.mrb[0].mxu0 %v452
      %v649 = vpop.f32.mrb[0].mxu0
      %v650 = vadd.f32 %v400, %v649
      %v651 = vpop.f32.mrb[0].mxu0
      %652 = vmatprep.mubr.f32.mxu0 0.0
      %653 = vmatmul.mubr.f32.gmra.mrb[0].mxu0 %v455
      %v654 = vpop.f32.mrb[0].mxu0
      %v655 = vadd.f32 %v400, %v654
      %v656 = vpop.f32.mrb[0].mxu0
      %657 = vmatprep.mubr.f32.mxu0 0.0
      %658 = vmatmul.mubr.f32.gmra.mrb[0].mxu0 %v458
      %v659 = vpop.f32.mrb[0].mxu0
      %v660 = vadd.f32 %v400, %v659
      %v661 = vpop.f32.mrb[0].mxu0
      %662 = vmatprep.mubr.f32.mxu0 0.0
      %663 = vmatmul.mubr.f32.gmra.mrb[0].mxu0 %v461
      %v664 = vpop.f32.mrb[0].mxu0
      %v665 = vadd.f32 %v400, %v664
      %v666 = vpop.f32.mrb[0].mxu0
      %667 = vmatprep.mubr.f32.mxu0 0.0
      %668 = vmatmul.mubr.f32.gmra.mrb[0].mxu0 %v464
      %v669 = vpop.f32.mrb[0].mxu0
      %v670 = vadd.f32 %v400, %v669
      %v671 = vpop.f32.mrb[0].mxu0
      %672 = vmatprep.mubr.f32.mxu0 0.0
      %673 = vmatmul.mubr.f32.gmra.mrb[0].mxu0 %v467
      %v674 = vpop.f32.mrb[0].mxu0
      %v675 = vadd.f32 %v400, %v674
      %v676 = vpop.f32.mrb[0].mxu0
      %677 = vmatprep.mubr.f32.mxu0 0.0
      %678 = vmatmul.mubr.f32.gmra.mrb[0].mxu0 %v470
      %v679 = vpop.f32.mrb[0].mxu0
      %v680 = vadd.f32 %v400, %v679
      %v681 = vpop.f32.mrb[0].mxu0
      %682 = vmatprep.mubr.f32.mxu0 0.0
      %683 = vmatmul.mubr.f32.gmra.mrb[0].mxu0 %v473
      %v684 = vpop.f32.mrb[0].mxu0
      %v685 = vadd.f32 %v400, %v684
      %v686 = vpop.f32.mrb[0].mxu0
      %687 = vmatprep.mubr.f32.mxu0 0.0
      %688 = vmatmul.mubr.f32.gmra.mrb[0].mxu0 %v476
      %v689 = vpop.f32.mrb[0].mxu0
      %v690 = vadd.f32 %v400, %v689
      %v691 = vpop.f32.mrb[0].mxu0
      %692 = vmatprep.mubr.f32.mxu0 0.0
      %693 = vmatmul.mubr.f32.gmra.mrb[0].mxu0 %v479
      %v694 = vpop.f32.mrb[0].mxu0
      %v695 = vadd.f32 %v400, %v694
      %v696 = vpop.f32.mrb[0].mxu0
      %697 = vmatprep.mubr.f32.mxu0 0.0
      %698 = vmatmul.mubr.f32.gmra.mrb[0].mxu0 %v482
      %v699 = vpop.f32.mrb[0].mxu0
      %v700 = vadd.f32 %v400, %v699
      %v701 = vpop.f32.mrb[0].mxu0
      %702 = vmatprep.mubr.f32.mxu0 0.0
      %703 = vmatmul.mubr.f32.gmra.mrb[0].mxu0 %v485
      %v704 = vpop.f32.mrb[0].mxu0
      %v705 = vadd.f32 %v400, %v704
      %v706 = vpop.f32.mrb[0].mxu0
      %707 = vmatprep.mubr.f32.mxu0 0.0
      %708 = vmatmul.mubr.f32.gmra.mrb[0].mxu0 %v488
      %v709 = vpop.f32.mrb[0].mxu0
      %v710 = vadd.f32 %v400, %v709
      %v711 = vpop.f32.mrb[0].mxu0
      %712 = vmatprep.mubr.f32.mxu0 0.0
      %713 = vmatmul.mubr.f32.gmra.mrb[0].mxu0 %v491
      %v714 = vpop.f32.mrb[0].mxu0
      %v715 = vadd.f32 %v400, %v714
      %v716 = vpop.f32.mrb[0].mxu0
      %717 = vmatprep.mubr.f32.mxu0 0.0
      %718 = vmatmul.mubr.f32.gmra.mrb[0].mxu0 %v494
      %v719 = vpop.f32.mrb[0].mxu0
      %v720 = vadd.f32 %v400, %v719
      %v721 = vpop.f32.mrb[0].mxu0
      %722 = vmatprep.mubr.f32.mxu0 0.0
      %723 = vmatmul.mubr.f32.gmra.mrb[0].mxu0 %v497
      %v724 = vpop.f32.mrb[0].mxu0
      %v725 = vadd.f32 %v400, %v724
      %v726 = vpop.f32.mrb[0].mxu0
      %727 = vdwg.mxu0
      %v728 = vmax.f32 %v570, 0.0
      %v729 = vmax.f32 %v575, 0.0
      %v730 = vmax.f32 %v580, 0.0
      %v731 = vmax.f32 %v585, 0.0
      %v732 = vmax.f32 %v590, 0.0
      %v733 = vmax.f32 %v595, 0.0
      %v734 = vmax.f32 %v600, 0.0
      %v735 = vmax.f32 %v605, 0.0
      %v736 = vmax.f32 %v610, 0.0
      %v737 = vmax.f32 %v615, 0.0
      %v738 = vmax.f32 %v620, 0.0
      %v739 = vmax.f32 %v625, 0.0
      %v740 = vmax.f32 %v630, 0.0
      %v741 = vmax.f32 %v635, 0.0
      %v742 = vmax.f32 %v640, 0.0
      %v743 = vmax.f32 %v645, 0.0
      %v744 = vmax.f32 %v650, 0.0
      %v745 = vmax.f32 %v655, 0.0
      %v746 = vmax.f32 %v660, 0.0
      %v747 = vmax.f32 %v665, 0.0
      %v748 = vmax.f32 %v670, 0.0
      %v749 = vmax.f32 %v675, 0.0
      %v750 = vmax.f32 %v680, 0.0
      %v751 = vmax.f32 %v685, 0.0
      %v752 = vmax.f32 %v690, 0.0
      %v753 = vmax.f32 %v695, 0.0
      %v754 = vmax.f32 %v700, 0.0
      %v755 = vmax.f32 %v705, 0.0
      %v756 = vmax.f32 %v710, 0.0
      %v757 = vmax.f32 %v715, 0.0
      %v758 = vmax.f32 %v720, 0.0
      %v759 = vmax.f32 %v725, 0.0
      %vm760 = vcmask 130048
      %761 = vst.msk [vmem:[#allocation2] sm:$0xff] %vm760, 0.0
      %762 = vst.msk [vmem:[#allocation2 + $0x8] sm:$0xff] %vm760, 0.0
      %763 = vst.msk [vmem:[#allocation2 + $0x10] sm:$0xff] %vm760, 0.0
      %764 = vst.msk [vmem:[#allocation2 + $0x118] sm:$0xff] %vm760, 0.0
      %765 = vst.msk [vmem:[#allocation2 + $0x120] sm:$0xff] %vm760, 0.0
      %766 = vst.msk [vmem:[#allocation2 + $0x128] sm:$0xff] %vm760, 0.0
      %767 = vst.msk [vmem:[#allocation2 + $0x18] sm:$0xff] %vm760, %v728
      %768 = vst.msk [vmem:[#allocation2 + $0x20] sm:$0xff] %vm760, %v729
      %769 = vst.msk [vmem:[#allocation2 + $0x28] sm:$0xff] %vm760, %v730
      %770 = vst.msk [vmem:[#allocation2 + $0x30] sm:$0xff] %vm760, %v731
      %771 = vst.msk [vmem:[#allocation2 + $0x38] sm:$0xff] %vm760, %v732
      %772 = vst.msk [vmem:[#allocation2 + $0x40] sm:$0xff] %vm760, %v733
      %773 = vst.msk [vmem:[#allocation2 + $0x48] sm:$0xff] %vm760, %v734
      %774 = vst.msk [vmem:[#allocation2 + $0x50] sm:$0xff] %vm760, %v735
      %775 = vst.msk [vmem:[#allocation2 + $0x58] sm:$0xff] %vm760, %v736
      %776 = vst.msk [vmem:[#allocation2 + $0x60] sm:$0xff] %vm760, %v737
      %777 = vst.msk [vmem:[#allocation2 + $0x68] sm:$0xff] %vm760, %v738
      %778 = vst.msk [vmem:[#allocation2 + $0x70] sm:$0xff] %vm760, %v739
      %779 = vst.msk [vmem:[#allocation2 + $0x78] sm:$0xff] %vm760, %v740
      %780 = vst.msk [vmem:[#allocation2 + $0x80] sm:$0xff] %vm760, %v741
      %781 = vst.msk [vmem:[#allocation2 + $0x88] sm:$0xff] %vm760, %v742
      %782 = vst.msk [vmem:[#allocation2 + $0x90] sm:$0xff] %vm760, %v743
      %783 = vst.msk [vmem:[#allocation2 + $0x98] sm:$0xff] %vm760, %v744
      %784 = vst.msk [vmem:[#allocation2 + $0xa0] sm:$0xff] %vm760, %v745
      %785 = vst.msk [vmem:[#allocation2 + $0xa8] sm:$0xff] %vm760, %v746
      %786 = vst.msk [vmem:[#allocation2 + $0xb0] sm:$0xff] %vm760, %v747
      %787 = vst.msk [vmem:[#allocation2 + $0xb8] sm:$0xff] %vm760, %v748
      %788 = vst.msk [vmem:[#allocation2 + $0xc0] sm:$0xff] %vm760, %v749
      %789 = vst.msk [vmem:[#allocation2 + $0xc8] sm:$0xff] %vm760, %v750
      %790 = vst.msk [vmem:[#allocation2 + $0xd0] sm:$0xff] %vm760, %v751
      %791 = vst.msk [vmem:[#allocation2 + $0xd8] sm:$0xff] %vm760, %v752
      %792 = vst.msk [vmem:[#allocation2 + $0xe0] sm:$0xff] %vm760, %v753
      %793 = vst.msk [vmem:[#allocation2 + $0xe8] sm:$0xff] %vm760, %v754
      %794 = vst.msk [vmem:[#allocation2 + $0xf0] sm:$0xff] %vm760, %v755
      %795 = vst.msk [vmem:[#allocation2 + $0xf8] sm:$0xff] %vm760, %v756
      %796 = vst.msk [vmem:[#allocation2 + $0x100] sm:$0xff] %vm760, %v757
      %797 = vst.msk [vmem:[#allocation2 + $0x108] sm:$0xff] %vm760, %v758
      %798 = vst.msk [vmem:[#allocation2 + $0x110] sm:$0xff] %vm760, %v759
      %v799 = vlaneseq
      %v800 = vshrl.u32 %v799, 7
      %v801 = vadd.s32 %v800, 8
      %v802 = vadd.s32 %v800, 16
      %v803 = vadd.s32 %v800, 24
      %v804 = vadd.s32 %v800, 32
      %v805 = vadd.s32 %v800, 40
      %v806 = vadd.s32 %v800, 48
      %v807 = vadd.s32 %v800, 56
      %v808 = vadd.s32 %v800, 64
      %v809 = vadd.s32 %v800, 72
      %v810 = vadd.s32 %v800, 80
      %v811 = vadd.s32 %v800, 88
      %v812 = vadd.s32 %v800, 96
      %v813 = vadd.s32 %v800, 104
      %v814 = vadd.s32 %v800, 112
      %v815 = vadd.s32 %v800, 120
      %v816 = vadd.s32 %v800, 128
      %v817 = vadd.s32 %v800, 136
      %v818 = vadd.s32 %v800, 144
      %v819 = vadd.s32 %v800, 152
      %v820 = vadd.s32 %v800, 160
      %v821 = vadd.s32 %v800, 168
      %v822 = vadd.s32 %v800, 176
      %v823 = vadd.s32 %v800, 184
      %v824 = vadd.s32 %v800, 192
      %v825 = vadd.s32 %v800, 200
      %v826 = vadd.s32 %v800, 208
      %v827 = vadd.s32 %v800, 216
      %v828 = vadd.s32 %v800, 224
      %v829 = vadd.s32 %v800, 232
      %v830 = vadd.s32 %v800, 240
      %v831 = vadd.s32 %v800, 248
      %vm832 = vcmp.lt.s32.totalorder %v800, 0
      %v833 = vsub.s32 0, %v800
      %v834 = vsel %vm832, %v833, %v800
      %v835 = vshrl.u32 %v834, 4
      %v836 = vand.u32 %v834, 15
      %v837 = vsub.s32 0, %v836
      %v838 = vsel %vm832, %v837, %v836
      %vm839 = vcmp.lt.s32.totalorder %v801, 0
      %v840 = vsub.s32 0, %v801
      %v841 = vsel %vm839, %v840, %v801
      %v842 = vshrl.u32 %v841, 4
      %v843 = vand.u32 %v841, 15
      %v844 = vsub.s32 0, %v843
      %v845 = vsel %vm839, %v844, %v843
      %vm846 = vcmp.lt.s32.totalorder %v802, 0
      %v847 = vsub.s32 0, %v802
      %v848 = vsel %vm846, %v847, %v802
      %v849 = vshrl.u32 %v848, 4
      %v850 = vand.u32 %v848, 15
      %v851 = vsub.s32 0, %v850
      %v852 = vsel %vm846, %v851, %v850
      %vm853 = vcmp.lt.s32.totalorder %v803, 0
      %v854 = vsub.s32 0, %v803
      %v855 = vsel %vm853, %v854, %v803
      %v856 = vshrl.u32 %v855, 4
      %v857 = vand.u32 %v855, 15
      %v858 = vsub.s32 0, %v857
      %v859 = vsel %vm853, %v858, %v857
      %vm860 = vcmp.lt.s32.totalorder %v804, 0
      %v861 = vsub.s32 0, %v804
      %v862 = vsel %vm860, %v861, %v804
      %v863 = vshrl.u32 %v862, 4
      %v864 = vand.u32 %v862, 15
      %v865 = vsub.s32 0, %v864
      %v866 = vsel %vm860, %v865, %v864
      %vm867 = vcmp.lt.s32.totalorder %v805, 0
      %v868 = vsub.s32 0, %v805
      %v869 = vsel %vm867, %v868, %v805
      %v870 = vshrl.u32 %v869, 4
      %v871 = vand.u32 %v869, 15
      %v872 = vsub.s32 0, %v871
      %v873 = vsel %vm867, %v872, %v871
      %vm874 = vcmp.lt.s32.totalorder %v806, 0
      %v875 = vsub.s32 0, %v806
      %v876 = vsel %vm874, %v875, %v806
      %v877 = vshrl.u32 %v876, 4
      %v878 = vand.u32 %v876, 15
      %v879 = vsub.s32 0, %v878
      %v880 = vsel %vm874, %v879, %v878
      %vm881 = vcmp.lt.s32.totalorder %v807, 0
      %v882 = vsub.s32 0, %v807
      %v883 = vsel %vm881, %v882, %v807
      %v884 = vshrl.u32 %v883, 4
      %v885 = vand.u32 %v883, 15
      %v886 = vsub.s32 0, %v885
      %v887 = vsel %vm881, %v886, %v885
      %vm888 = vcmp.lt.s32.totalorder %v808, 0
      %v889 = vsub.s32 0, %v808
      %v890 = vsel %vm888, %v889, %v808
      %v891 = vshrl.u32 %v890, 4
      %v892 = vand.u32 %v890, 15
      %v893 = vsub.s32 0, %v892
      %v894 = vsel %vm888, %v893, %v892
      %vm895 = vcmp.lt.s32.totalorder %v809, 0
      %v896 = vsub.s32 0, %v809
      %v897 = vsel %vm895, %v896, %v809
      %v898 = vshrl.u32 %v897, 4
      %v899 = vand.u32 %v897, 15
      %v900 = vsub.s32 0, %v899
      %v901 = vsel %vm895, %v900, %v899
      %vm902 = vcmp.lt.s32.totalorder %v810, 0
      %v903 = vsub.s32 0, %v810
      %v904 = vsel %vm902, %v903, %v810
      %v905 = vshrl.u32 %v904, 4
      %v906 = vand.u32 %v904, 15
      %v907 = vsub.s32 0, %v906
      %v908 = vsel %vm902, %v907, %v906
      %vm909 = vcmp.lt.s32.totalorder %v811, 0
      %v910 = vsub.s32 0, %v811
      %v911 = vsel %vm909, %v910, %v811
      %v912 = vshrl.u32 %v911, 4
      %v913 = vand.u32 %v911, 15
      %v914 = vsub.s32 0, %v913
      %v915 = vsel %vm909, %v914, %v913
      %vm916 = vcmp.lt.s32.totalorder %v812, 0
      %v917 = vsub.s32 0, %v812
      %v918 = vsel %vm916, %v917, %v812
      %v919 = vshrl.u32 %v918, 4
      %v920 = vand.u32 %v918, 15
      %v921 = vsub.s32 0, %v920
      %v922 = vsel %vm916, %v921, %v920
      %vm923 = vcmp.lt.s32.totalorder %v813, 0
      %v924 = vsub.s32 0, %v813
      %v925 = vsel %vm923, %v924, %v813
      %v926 = vshrl.u32 %v925, 4
      %v927 = vand.u32 %v925, 15
      %v928 = vsub.s32 0, %v927
      %v929 = vsel %vm923, %v928, %v927
      %vm930 = vcmp.lt.s32.totalorder %v814, 0
      %v931 = vsub.s32 0, %v814
      %v932 = vsel %vm930, %v931, %v814
      %v933 = vshrl.u32 %v932, 4
      %v934 = vand.u32 %v932, 15
      %v935 = vsub.s32 0, %v934
      %v936 = vsel %vm930, %v935, %v934
      %vm937 = vcmp.lt.s32.totalorder %v815, 0
      %v938 = vsub.s32 0, %v815
      %v939 = vsel %vm937, %v938, %v815
      %v940 = vshrl.u32 %v939, 4
      %v941 = vand.u32 %v939, 15
      %v942 = vsub.s32 0, %v941
      %v943 = vsel %vm937, %v942, %v941
      %vm944 = vcmp.lt.s32.totalorder %v816, 0
      %v945 = vsub.s32 0, %v816
      %v946 = vsel %vm944, %v945, %v816
      %v947 = vshrl.u32 %v946, 4
      %v948 = vand.u32 %v946, 15
      %v949 = vsub.s32 0, %v948
      %v950 = vsel %vm944, %v949, %v948
      %vm951 = vcmp.lt.s32.totalorder %v817, 0
      %v952 = vsub.s32 0, %v817
      %v953 = vsel %vm951, %v952, %v817
      %v954 = vshrl.u32 %v953, 4
      %v955 = vand.u32 %v953, 15
      %v956 = vsub.s32 0, %v955
      %v957 = vsel %vm951, %v956, %v955
      %vm958 = vcmp.lt.s32.totalorder %v818, 0
      %v959 = vsub.s32 0, %v818
      %v960 = vsel %vm958, %v959, %v818
      %v961 = vshrl.u32 %v960, 4
      %v962 = vand.u32 %v960, 15
      %v963 = vsub.s32 0, %v962
      %v964 = vsel %vm958, %v963, %v962
      %vm965 = vcmp.lt.s32.totalorder %v819, 0
      %v966 = vsub.s32 0, %v819
      %v967 = vsel %vm965, %v966, %v819
      %v968 = vshrl.u32 %v967, 4
      %v969 = vand.u32 %v967, 15
      %v970 = vsub.s32 0, %v969
      %v971 = vsel %vm965, %v970, %v969
      %vm972 = vcmp.lt.s32.totalorder %v820, 0
      %v973 = vsub.s32 0, %v820
      %v974 = vsel %vm972, %v973, %v820
      %v975 = vshrl.u32 %v974, 4
      %v976 = vand.u32 %v974, 15
      %v977 = vsub.s32 0, %v976
      %v978 = vsel %vm972, %v977, %v976
      %vm979 = vcmp.lt.s32.totalorder %v821, 0
      %v980 = vsub.s32 0, %v821
      %v981 = vsel %vm979, %v980, %v821
      %v982 = vshrl.u32 %v981, 4
      %v983 = vand.u32 %v981, 15
      %v984 = vsub.s32 0, %v983
      %v985 = vsel %vm979, %v984, %v983
      %vm986 = vcmp.lt.s32.totalorder %v822, 0
      %v987 = vsub.s32 0, %v822
      %v988 = vsel %vm986, %v987, %v822
      %v989 = vshrl.u32 %v988, 4
      %v990 = vand.u32 %v988, 15
      %v991 = vsub.s32 0, %v990
      %v992 = vsel %vm986, %v991, %v990
      %vm993 = vcmp.lt.s32.totalorder %v823, 0
      %v994 = vsub.s32 0, %v823
      %v995 = vsel %vm993, %v994, %v823
      %v996 = vshrl.u32 %v995, 4
      %v997 = vand.u32 %v995, 15
      %v998 = vsub.s32 0, %v997
      %v999 = vsel %vm993, %v998, %v997
      %vm1000 = vcmp.lt.s32.totalorder %v824, 0
      %v1001 = vsub.s32 0, %v824
      %v1002 = vsel %vm1000, %v1001, %v824
      %v1003 = vshrl.u32 %v1002, 4
      %v1004 = vand.u32 %v1002, 15
      %v1005 = vsub.s32 0, %v1004
      %v1006 = vsel %vm1000, %v1005, %v1004
      %vm1007 = vcmp.lt.s32.totalorder %v825, 0
      %v1008 = vsub.s32 0, %v825
      %v1009 = vsel %vm1007, %v1008, %v825
      %v1010 = vshrl.u32 %v1009, 4
      %v1011 = vand.u32 %v1009, 15
      %v1012 = vsub.s32 0, %v1011
      %v1013 = vsel %vm1007, %v1012, %v1011
      %vm1014 = vcmp.lt.s32.totalorder %v826, 0
      %v1015 = vsub.s32 0, %v826
      %v1016 = vsel %vm1014, %v1015, %v826
      %v1017 = vshrl.u32 %v1016, 4
      %v1018 = vand.u32 %v1016, 15
      %v1019 = vsub.s32 0, %v1018
      %v1020 = vsel %vm1014, %v1019, %v1018
      %vm1021 = vcmp.lt.s32.totalorder %v827, 0
      %v1022 = vsub.s32 0, %v827
      %v1023 = vsel %vm1021, %v1022, %v827
      %v1024 = vshrl.u32 %v1023, 4
      %v1025 = vand.u32 %v1023, 15
      %v1026 = vsub.s32 0, %v1025
      %v1027 = vsel %vm1021, %v1026, %v1025
      %vm1028 = vcmp.lt.s32.totalorder %v828, 0
      %v1029 = vsub.s32 0, %v828
      %v1030 = vsel %vm1028, %v1029, %v828
      %v1031 = vshrl.u32 %v1030, 4
      %v1032 = vand.u32 %v1030, 15
      %v1033 = vsub.s32 0, %v1032
      %v1034 = vsel %vm1028, %v1033, %v1032
      %vm1035 = vcmp.lt.s32.totalorder %v829, 0
      %v1036 = vsub.s32 0, %v829
      %v1037 = vsel %vm1035, %v1036, %v829
      %v1038 = vshrl.u32 %v1037, 4
      %v1039 = vand.u32 %v1037, 15
      %v1040 = vsub.s32 0, %v1039
      %v1041 = vsel %vm1035, %v1040, %v1039
      %vm1042 = vcmp.lt.s32.totalorder %v830, 0
      %v1043 = vsub.s32 0, %v830
      %v1044 = vsel %vm1042, %v1043, %v830
      %v1045 = vshrl.u32 %v1044, 4
      %v1046 = vand.u32 %v1044, 15
      %v1047 = vsub.s32 0, %v1046
      %v1048 = vsel %vm1042, %v1047, %v1046
      %vm1049 = vcmp.lt.s32.totalorder %v831, 0
      %v1050 = vsub.s32 0, %v831
      %v1051 = vsel %vm1049, %v1050, %v831
      %v1052 = vshrl.u32 %v1051, 4
      %v1053 = vand.u32 %v1051, 15
      %v1054 = vsub.s32 0, %v1053
      %v1055 = vsel %vm1049, %v1054, %v1053
      %vm1056 = vcmp.ne.s32.totalorder %v838, 0
      %vm1057 = vcmp.ne.s32.totalorder %v845, 0
      %vm1058 = vcmp.ne.s32.totalorder %v852, 0
      %vm1059 = vcmp.ne.s32.totalorder %v859, 0
      %vm1060 = vcmp.ne.s32.totalorder %v866, 0
      %vm1061 = vcmp.ne.s32.totalorder %v873, 0
      %vm1062 = vcmp.ne.s32.totalorder %v880, 0
      %vm1063 = vcmp.ne.s32.totalorder %v887, 0
      %vm1064 = vcmp.ne.s32.totalorder %v894, 0
      %vm1065 = vcmp.ne.s32.totalorder %v901, 0
      %vm1066 = vcmp.ne.s32.totalorder %v908, 0
      %vm1067 = vcmp.ne.s32.totalorder %v915, 0
      %vm1068 = vcmp.ne.s32.totalorder %v922, 0
      %vm1069 = vcmp.ne.s32.totalorder %v929, 0
      %vm1070 = vcmp.ne.s32.totalorder %v936, 0
      %vm1071 = vcmp.ne.s32.totalorder %v943, 0
      %vm1072 = vcmp.ne.s32.totalorder %v950, 0
      %vm1073 = vcmp.ne.s32.totalorder %v957, 0
      %vm1074 = vcmp.ne.s32.totalorder %v964, 0
      %vm1075 = vcmp.ne.s32.totalorder %v971, 0
      %vm1076 = vcmp.ne.s32.totalorder %v978, 0
      %vm1077 = vcmp.ne.s32.totalorder %v985, 0
      %vm1078 = vcmp.ne.s32.totalorder %v992, 0
      %vm1079 = vcmp.ne.s32.totalorder %v999, 0
      %vm1080 = vcmp.ne.s32.totalorder %v1006, 0
      %vm1081 = vcmp.ne.s32.totalorder %v1013, 0
      %vm1082 = vcmp.ne.s32.totalorder %v1020, 0
      %vm1083 = vcmp.ne.s32.totalorder %v1027, 0
      %vm1084 = vcmp.ne.s32.totalorder %v1034, 0
      %vm1085 = vcmp.ne.s32.totalorder %v1041, 0
      %vm1086 = vcmp.ne.s32.totalorder %v1048, 0
      %vm1087 = vcmp.ne.s32.totalorder %v1055, 0
      %vm1088 = vcmp.lt.s32.totalorder %v838, 0
      %vm1089 = vcmp.lt.s32.totalorder %v845, 0
      %vm1090 = vcmp.lt.s32.totalorder %v852, 0
      %vm1091 = vcmp.lt.s32.totalorder %v859, 0
      %vm1092 = vcmp.lt.s32.totalorder %v866, 0
      %vm1093 = vcmp.lt.s32.totalorder %v873, 0
      %vm1094 = vcmp.lt.s32.totalorder %v880, 0
      %vm1095 = vcmp.lt.s32.totalorder %v887, 0
      %vm1096 = vcmp.lt.s32.totalorder %v894, 0
      %vm1097 = vcmp.lt.s32.totalorder %v901, 0
      %vm1098 = vcmp.lt.s32.totalorder %v908, 0
      %vm1099 = vcmp.lt.s32.totalorder %v915, 0
      %vm1100 = vcmp.lt.s32.totalorder %v922, 0
      %vm1101 = vcmp.lt.s32.totalorder %v929, 0
      %vm1102 = vcmp.lt.s32.totalorder %v936, 0
      %vm1103 = vcmp.lt.s32.totalorder %v943, 0
      %vm1104 = vcmp.lt.s32.totalorder %v950, 0
      %vm1105 = vcmp.lt.s32.totalorder %v957, 0
      %vm1106 = vcmp.lt.s32.totalorder %v964, 0
      %vm1107 = vcmp.lt.s32.totalorder %v971, 0
      %vm1108 = vcmp.lt.s32.totalorder %v978, 0
      %vm1109 = vcmp.lt.s32.totalorder %v985, 0
      %vm1110 = vcmp.lt.s32.totalorder %v992, 0
      %vm1111 = vcmp.lt.s32.totalorder %v999, 0
      %vm1112 = vcmp.lt.s32.totalorder %v1006, 0
      %vm1113 = vcmp.lt.s32.totalorder %v1013, 0
      %vm1114 = vcmp.lt.s32.totalorder %v1020, 0
      %vm1115 = vcmp.lt.s32.totalorder %v1027, 0
      %vm1116 = vcmp.lt.s32.totalorder %v1034, 0
      %vm1117 = vcmp.lt.s32.totalorder %v1041, 0
      %vm1118 = vcmp.lt.s32.totalorder %v1048, 0
      %vm1119 = vcmp.lt.s32.totalorder %v1055, 0
      %vm1120 = vmand %vm1088, %vm1056
      %vm1121 = vmand %vm1089, %vm1057
      %vm1122 = vmand %vm1090, %vm1058
      %vm1123 = vmand %vm1091, %vm1059
      %vm1124 = vmand %vm1092, %vm1060
      %vm1125 = vmand %vm1093, %vm1061
      %vm1126 = vmand %vm1094, %vm1062
      %vm1127 = vmand %vm1095, %vm1063
      %vm1128 = vmand %vm1096, %vm1064
      %vm1129 = vmand %vm1097, %vm1065
      %vm1130 = vmand %vm1098, %vm1066
      %vm1131 = vmand %vm1099, %vm1067
      %vm1132 = vmand %vm1100, %vm1068
      %vm1133 = vmand %vm1101, %vm1069
      %vm1134 = vmand %vm1102, %vm1070
      %vm1135 = vmand %vm1103, %vm1071
      %vm1136 = vmand %vm1104, %vm1072
      %vm1137 = vmand %vm1105, %vm1073
      %vm1138 = vmand %vm1106, %vm1074
      %vm1139 = vmand %vm1107, %vm1075
      %vm1140 = vmand %vm1108, %vm1076
      %vm1141 = vmand %vm1109, %vm1077
      %vm1142 = vmand %vm1110, %vm1078
      %vm1143 = vmand %vm1111, %vm1079
      %vm1144 = vmand %vm1112, %vm1080
      %vm1145 = vmand %vm1113, %vm1081
      %vm1146 = vmand %vm1114, %vm1082
      %vm1147 = vmand %vm1115, %vm1083
      %vm1148 = vmand %vm1116, %vm1084
      %vm1149 = vmand %vm1117, %vm1085
      %vm1150 = vmand %vm1118, %vm1086
      %vm1151 = vmand %vm1119, %vm1087
      %v1152 = vadd.s32 %v838, 16
      %v1153 = vadd.s32 %v845, 16
      %v1154 = vadd.s32 %v852, 16
      %v1155 = vadd.s32 %v859, 16
      %v1156 = vadd.s32 %v866, 16
      %v1157 = vadd.s32 %v873, 16
      %v1158 = vadd.s32 %v880, 16
      %v1159 = vadd.s32 %v887, 16
      %v1160 = vadd.s32 %v894, 16
      %v1161 = vadd.s32 %v901, 16
      %v1162 = vadd.s32 %v908, 16
      %v1163 = vadd.s32 %v915, 16
      %v1164 = vadd.s32 %v922, 16
      %v1165 = vadd.s32 %v929, 16
      %v1166 = vadd.s32 %v936, 16
      %v1167 = vadd.s32 %v943, 16
      %v1168 = vadd.s32 %v950, 16
      %v1169 = vadd.s32 %v957, 16
      %v1170 = vadd.s32 %v964, 16
      %v1171 = vadd.s32 %v971, 16
      %v1172 = vadd.s32 %v978, 16
      %v1173 = vadd.s32 %v985, 16
      %v1174 = vadd.s32 %v992, 16
      %v1175 = vadd.s32 %v999, 16
      %v1176 = vadd.s32 %v1006, 16
      %v1177 = vadd.s32 %v1013, 16
      %v1178 = vadd.s32 %v1020, 16
      %v1179 = vadd.s32 %v1027, 16
      %v1180 = vadd.s32 %v1034, 16
      %v1181 = vadd.s32 %v1041, 16
      %v1182 = vadd.s32 %v1048, 16
      %v1183 = vadd.s32 %v1055, 16
      %v1184 = vsel %vm1120, %v1152, %v838
      %v1185 = vsel %vm1121, %v1153, %v845
      %v1186 = vsel %vm1122, %v1154, %v852
      %v1187 = vsel %vm1123, %v1155, %v859
      %v1188 = vsel %vm1124, %v1156, %v866
      %v1189 = vsel %vm1125, %v1157, %v873
      %v1190 = vsel %vm1126, %v1158, %v880
      %v1191 = vsel %vm1127, %v1159, %v887
      %v1192 = vsel %vm1128, %v1160, %v894
      %v1193 = vsel %vm1129, %v1161, %v901
      %v1194 = vsel %vm1130, %v1162, %v908
      %v1195 = vsel %vm1131, %v1163, %v915
      %v1196 = vsel %vm1132, %v1164, %v922
      %v1197 = vsel %vm1133, %v1165, %v929
      %v1198 = vsel %vm1134, %v1166, %v936
      %v1199 = vsel %vm1135, %v1167, %v943
      %v1200 = vsel %vm1136, %v1168, %v950
      %v1201 = vsel %vm1137, %v1169, %v957
      %v1202 = vsel %vm1138, %v1170, %v964
      %v1203 = vsel %vm1139, %v1171, %v971
      %v1204 = vsel %vm1140, %v1172, %v978
      %v1205 = vsel %vm1141, %v1173, %v985
      %v1206 = vsel %vm1142, %v1174, %v992
      %v1207 = vsel %vm1143, %v1175, %v999
      %v1208 = vsel %vm1144, %v1176, %v1006
      %v1209 = vsel %vm1145, %v1177, %v1013
      %v1210 = vsel %vm1146, %v1178, %v1020
      %v1211 = vsel %vm1147, %v1179, %v1027
      %v1212 = vsel %vm1148, %v1180, %v1034
      %v1213 = vsel %vm1149, %v1181, %v1041
      %v1214 = vsel %vm1150, %v1182, %v1048
      %v1215 = vsel %vm1151, %v1183, %v1055
      %vm1216 = vcmp.ge.s32.totalorder %v1184, 1
      %vm1217 = vcmp.ge.s32.totalorder %v1185, 1
      %vm1218 = vcmp.ge.s32.totalorder %v1186, 1
      %vm1219 = vcmp.ge.s32.totalorder %v1187, 1
      %vm1220 = vcmp.ge.s32.totalorder %v1188, 1
      %vm1221 = vcmp.ge.s32.totalorder %v1189, 1
      %vm1222 = vcmp.ge.s32.totalorder %v1190, 1
      %vm1223 = vcmp.ge.s32.totalorder %v1191, 1
      %vm1224 = vcmp.ge.s32.totalorder %v1192, 1
      %vm1225 = vcmp.ge.s32.totalorder %v1193, 1
      %vm1226 = vcmp.ge.s32.totalorder %v1194, 1
      %vm1227 = vcmp.ge.s32.totalorder %v1195, 1
      %vm1228 = vcmp.ge.s32.totalorder %v1196, 1
      %vm1229 = vcmp.ge.s32.totalorder %v1197, 1
      %vm1230 = vcmp.ge.s32.totalorder %v1198, 1
      %vm1231 = vcmp.ge.s32.totalorder %v1199, 1
      %vm1232 = vcmp.ge.s32.totalorder %v1200, 1
      %vm1233 = vcmp.ge.s32.totalorder %v1201, 1
      %vm1234 = vcmp.ge.s32.totalorder %v1202, 1
      %vm1235 = vcmp.ge.s32.totalorder %v1203, 1
      %vm1236 = vcmp.ge.s32.totalorder %v1204, 1
      %vm1237 = vcmp.ge.s32.totalorder %v1205, 1
      %vm1238 = vcmp.ge.s32.totalorder %v1206, 1
      %vm1239 = vcmp.ge.s32.totalorder %v1207, 1
      %vm1240 = vcmp.ge.s32.totalorder %v1208, 1
      %vm1241 = vcmp.ge.s32.totalorder %v1209, 1
      %vm1242 = vcmp.ge.s32.totalorder %v1210, 1
      %vm1243 = vcmp.ge.s32.totalorder %v1211, 1
      %vm1244 = vcmp.ge.s32.totalorder %v1212, 1
      %vm1245 = vcmp.ge.s32.totalorder %v1213, 1
      %vm1246 = vcmp.ge.s32.totalorder %v1214, 1
      %vm1247 = vcmp.ge.s32.totalorder %v1215, 1
      %vm1248 = vcmp.le.s32.totalorder %v1184, 14
      %vm1249 = vcmp.le.s32.totalorder %v1185, 14
      %vm1250 = vcmp.le.s32.totalorder %v1186, 14
      %vm1251 = vcmp.le.s32.totalorder %v1187, 14
      %vm1252 = vcmp.le.s32.totalorder %v1188, 14
      %vm1253 = vcmp.le.s32.totalorder %v1189, 14
      %vm1254 = vcmp.le.s32.totalorder %v1190, 14
      %vm1255 = vcmp.le.s32.totalorder %v1191, 14
      %vm1256 = vcmp.le.s32.totalorder %v1192, 14
      %vm1257 = vcmp.le.s32.totalorder %v1193, 14
      %vm1258 = vcmp.le.s32.totalorder %v1194, 14
      %vm1259 = vcmp.le.s32.totalorder %v1195, 14
      %vm1260 = vcmp.le.s32.totalorder %v1196, 14
      %vm1261 = vcmp.le.s32.totalorder %v1197, 14
      %vm1262 = vcmp.le.s32.totalorder %v1198, 14
      %vm1263 = vcmp.le.s32.totalorder %v1199, 14
      %vm1264 = vcmp.le.s32.totalorder %v1200, 14
      %vm1265 = vcmp.le.s32.totalorder %v1201, 14
      %vm1266 = vcmp.le.s32.totalorder %v1202, 14
      %vm1267 = vcmp.le.s32.totalorder %v1203, 14
      %vm1268 = vcmp.le.s32.totalorder %v1204, 14
      %vm1269 = vcmp.le.s32.totalorder %v1205, 14
      %vm1270 = vcmp.le.s32.totalorder %v1206, 14
      %vm1271 = vcmp.le.s32.totalorder %v1207, 14
      %vm1272 = vcmp.le.s32.totalorder %v1208, 14
      %vm1273 = vcmp.le.s32.totalorder %v1209, 14
      %vm1274 = vcmp.le.s32.totalorder %v1210, 14
      %vm1275 = vcmp.le.s32.totalorder %v1211, 14
      %vm1276 = vcmp.le.s32.totalorder %v1212, 14
      %vm1277 = vcmp.le.s32.totalorder %v1213, 14
      %vm1278 = vcmp.le.s32.totalorder %v1214, 14
      %vm1279 = vcmp.le.s32.totalorder %v1215, 14
      %v1280 = vld [vmem:[#allocation2 + $0x7] sm:$0xff]
      %v1281 = vld [vmem:[#allocation2 + $0xf] sm:$0xff]
      %v1282 = vld [vmem:[#allocation2 + $0x17] sm:$0xff]
      %v1283 = vld [vmem:[#allocation2 + $0x1f] sm:$0xff]
      %v1284 = vld [vmem:[#allocation2 + $0x27] sm:$0xff]
      %v1285 = vld [vmem:[#allocation2 + $0x2f] sm:$0xff]
      %v1286 = vld [vmem:[#allocation2 + $0x37] sm:$0xff]
      %v1287 = vld [vmem:[#allocation2 + $0x3f] sm:$0xff]
      %v1288 = vld [vmem:[#allocation2 + $0x47] sm:$0xff]
      %v1289 = vld [vmem:[#allocation2 + $0x4f] sm:$0xff]
      %v1290 = vld [vmem:[#allocation2 + $0x57] sm:$0xff]
      %v1291 = vld [vmem:[#allocation2 + $0x5f] sm:$0xff]
      %v1292 = vld [vmem:[#allocation2 + $0x67] sm:$0xff]
      %v1293 = vld [vmem:[#allocation2 + $0x6f] sm:$0xff]
      %v1294 = vld [vmem:[#allocation2 + $0x77] sm:$0xff]
      %v1295 = vld [vmem:[#allocation2 + $0x7f] sm:$0xff]
      %v1296 = vld [vmem:[#allocation2 + $0x87] sm:$0xff]
      %v1297 = vld [vmem:[#allocation2 + $0x8f] sm:$0xff]
      %v1298 = vld [vmem:[#allocation2 + $0x97] sm:$0xff]
      %v1299 = vld [vmem:[#allocation2 + $0x9f] sm:$0xff]
      %v1300 = vld [vmem:[#allocation2 + $0xa7] sm:$0xff]
      %v1301 = vld [vmem:[#allocation2 + $0xaf] sm:$0xff]
      %v1302 = vld [vmem:[#allocation2 + $0xb7] sm:$0xff]
      %v1303 = vld [vmem:[#allocation2 + $0xbf] sm:$0xff]
      %v1304 = vld [vmem:[#allocation2 + $0xc7] sm:$0xff]
      %v1305 = vld [vmem:[#allocation2 + $0xcf] sm:$0xff]
      %v1306 = vld [vmem:[#allocation2 + $0xd7] sm:$0xff]
      %v1307 = vld [vmem:[#allocation2 + $0xdf] sm:$0xff]
      %v1308 = vld [vmem:[#allocation2 + $0xe7] sm:$0xff]
      %v1309 = vld [vmem:[#allocation2 + $0xef] sm:$0xff]
      %v1310 = vld [vmem:[#allocation2 + $0xf7] sm:$0xff]
      %v1311 = vld [vmem:[#allocation2 + $0xff] sm:$0xff]
      %v1312 = vsel %vm1216, %v1280, 0.0
      %v1313 = vsel %vm1217, %v1281, 0.0
      %v1314 = vsel %vm1218, %v1282, 0.0
      %v1315 = vsel %vm1219, %v1283, 0.0
      %v1316 = vsel %vm1220, %v1284, 0.0
      %v1317 = vsel %vm1221, %v1285, 0.0
      %v1318 = vsel %vm1222, %v1286, 0.0
      %v1319 = vsel %vm1223, %v1287, 0.0
      %v1320 = vsel %vm1224, %v1288, 0.0
      %v1321 = vsel %vm1225, %v1289, 0.0
      %v1322 = vsel %vm1226, %v1290, 0.0
      %v1323 = vsel %vm1227, %v1291, 0.0
      %v1324 = vsel %vm1228, %v1292, 0.0
      %v1325 = vsel %vm1229, %v1293, 0.0
      %v1326 = vsel %vm1230, %v1294, 0.0
      %v1327 = vsel %vm1231, %v1295, 0.0
      %v1328 = vsel %vm1232, %v1296, 0.0
      %v1329 = vsel %vm1233, %v1297, 0.0
      %v1330 = vsel %vm1234, %v1298, 0.0
      %v1331 = vsel %vm1235, %v1299, 0.0
      %v1332 = vsel %vm1236, %v1300, 0.0
      %v1333 = vsel %vm1237, %v1301, 0.0
      %v1334 = vsel %vm1238, %v1302, 0.0
      %v1335 = vsel %vm1239, %v1303, 0.0
      %v1336 = vsel %vm1240, %v1304, 0.0
      %v1337 = vsel %vm1241, %v1305, 0.0
      %v1338 = vsel %vm1242, %v1306, 0.0
      %v1339 = vsel %vm1243, %v1307, 0.0
      %v1340 = vsel %vm1244, %v1308, 0.0
      %v1341 = vsel %vm1245, %v1309, 0.0
      %v1342 = vsel %vm1246, %v1310, 0.0
      %v1343 = vsel %vm1247, %v1311, 0.0
      %v1344 = vld [vmem:[%s5] sm:$0xff]
      %v1345 = vld [vmem:[%s5 + $0x8] sm:$0xff]
      %v1346 = vld [vmem:[#allocation2 + $0x8] sm:$0xff]
      %v1347 = vld [vmem:[#allocation2 + $0x10] sm:$0xff]
      %v1348 = vld [vmem:[#allocation2 + $0x18] sm:$0xff]
      %v1349 = vld [vmem:[#allocation2 + $0x20] sm:$0xff]
      %v1350 = vld [vmem:[#allocation2 + $0x28] sm:$0xff]
      %v1351 = vld [vmem:[#allocation2 + $0x30] sm:$0xff]
      %v1352 = vld [vmem:[#allocation2 + $0x38] sm:$0xff]
      %v1353 = vld [vmem:[#allocation2 + $0x40] sm:$0xff]
      %v1354 = vld [vmem:[#allocation2 + $0x48] sm:$0xff]
      %v1355 = vld [vmem:[#allocation2 + $0x50] sm:$0xff]
      %v1356 = vld [vmem:[#allocation2 + $0x58] sm:$0xff]
      %v1357 = vld [vmem:[#allocation2 + $0x60] sm:$0xff]
      %v1358 = vld [vmem:[#allocation2 + $0x68] sm:$0xff]
      %v1359 = vld [vmem:[#allocation2 + $0x70] sm:$0xff]
      %v1360 = vld [vmem:[#allocation2 + $0x78] sm:$0xff]
      %v1361 = vld [vmem:[#allocation2 + $0x80] sm:$0xff]
      %v1362 = vld [vmem:[#allocation2 + $0x88] sm:$0xff]
      %v1363 = vld [vmem:[#allocation2 + $0x90] sm:$0xff]
      %v1364 = vld [vmem:[#allocation2 + $0x98] sm:$0xff]
      %v1365 = vld [vmem:[#allocation2 + $0xa0] sm:$0xff]
      %v1366 = vld [vmem:[#allocation2 + $0xa8] sm:$0xff]
      %v1367 = vld [vmem:[#allocation2 + $0xb0] sm:$0xff]
      %v1368 = vld [vmem:[#allocation2 + $0xb8] sm:$0xff]
      %v1369 = vld [vmem:[#allocation2 + $0xc0] sm:$0xff]
      %v1370 = vld [vmem:[#allocation2 + $0xc8] sm:$0xff]
      %v1371 = vld [vmem:[#allocation2 + $0xd0] sm:$0xff]
      %v1372 = vld [vmem:[#allocation2 + $0xd8] sm:$0xff]
      %v1373 = vld [vmem:[#allocation2 + $0xe0] sm:$0xff]
      %v1374 = vld [vmem:[#allocation2 + $0xe8] sm:$0xff]
      %v1375 = vld [vmem:[#allocation2 + $0xf0] sm:$0xff]
      %v1376 = vld [vmem:[#allocation2 + $0xf8] sm:$0xff]
      %v1377 = vld [vmem:[#allocation2 + $0x100] sm:$0xff]
      %s1378 = scalar_lea.vmem %s5, 16
      %v1379 = vld [vmem:[%s1378] sm:$0xff]
      %v1380 = vld [vmem:[%s1378 + $0x8] sm:$0xff]
      %v1382 = vsel %vm760, %v1346, 0
      %v1385 = vsel %vm760, %v1347, 0
      %v1388 = vsel %vm760, %v1348, 0
      %v1391 = vsel %vm760, %v1349, 0
      %v1394 = vsel %vm760, %v1350, 0
      %v1397 = vsel %vm760, %v1351, 0
      %v1400 = vsel %vm760, %v1352, 0
      %v1403 = vsel %vm760, %v1353, 0
      %v1406 = vsel %vm760, %v1354, 0
      %v1409 = vsel %vm760, %v1355, 0
      %v1412 = vsel %vm760, %v1356, 0
      %v1415 = vsel %vm760, %v1357, 0
      %v1418 = vsel %vm760, %v1358, 0
      %v1421 = vsel %vm760, %v1359, 0
      %v1424 = vsel %vm760, %v1360, 0
      %v1427 = vsel %vm760, %v1361, 0
      %v1430 = vsel %vm760, %v1362, 0
      %v1433 = vsel %vm760, %v1363, 0
      %v1436 = vsel %vm760, %v1364, 0
      %v1439 = vsel %vm760, %v1365, 0
      %v1442 = vsel %vm760, %v1366, 0
      %v1445 = vsel %vm760, %v1367, 0
      %v1448 = vsel %vm760, %v1368, 0
      %v1451 = vsel %vm760, %v1369, 0
      %v1454 = vsel %vm760, %v1370, 0
      %v1457 = vsel %vm760, %v1371, 0
      %v1460 = vsel %vm760, %v1372, 0
      %v1463 = vsel %vm760, %v1373, 0
      %v1466 = vsel %vm760, %v1374, 0
      %v1469 = vsel %vm760, %v1375, 0
      %v1472 = vsel %vm760, %v1376, 0
      %v1475 = vsel %vm760, %v1377, 0
      %1477 = vmatprep.subr.mxu0 0.0
      %1478 = vmatpush1.msra.mxu0 %v1379
      %1479 = vmatprep.subr.mxu0 0.0
      %1480 = vmatpush1.msra.mxu0 %v1380
      %1481 = vmatprep.subr.mxu0 0.0
      %1482 = vmatpush1.msra.mxu0 0.0
      %1483 = vmatprep.subr.mxu0 0.0
      %1484 = vmatpush1.msra.mxu0 0.0
      %1485 = vmatprep.subr.mxu0 0.0
      %1486 = vmatpush1.msra.mxu0 0.0
      %1487 = vmatprep.subr.mxu0 0.0
      %1488 = vmatpush1.msra.mxu0 0.0
      %1489 = vmatprep.subr.mxu0 0.0
      %1490 = vmatpush1.msra.mxu0 0.0
      %1491 = vmatprep.subr.mxu0 0.0
      %1492 = vmatpush1.msra.mxu0 0.0
      %1493 = vmatprep.subr.mxu0 0.0
      %1494 = vmatpush1.msra.mxu0 0.0
      %1495 = vmatprep.subr.mxu0 0.0
      %1496 = vmatpush1.msra.mxu0 0.0
      %1497 = vmatprep.subr.mxu0 0.0
      %1498 = vmatpush1.msra.mxu0 0.0
      %1499 = vmatprep.subr.mxu0 0.0
      %1500 = vmatpush1.msra.mxu0 0.0
      %1501 = vmatprep.subr.mxu0 0.0
      %1502 = vmatpush1.msra.mxu0 0.0
      %1503 = vmatprep.subr.mxu0 0.0
      %1504 = vmatpush1.msra.mxu0 0.0
      %1505 = vmatprep.subr.mxu0 0.0
      %1506 = vmatpush1.msra.mxu0 0.0
      %1507 = vmatprep.subr.mxu0 0.0
      %1508 = vmatpush1.msra.mxu0 0.0
      %1509 = vmatprep.subr.mxu0 0.0
      %1510 = vmatpush1.msra.mxu0 0.0
      %1511 = vmatprep.subr.mxu0 0.0
      %1512 = vmatpush1.msra.mxu0 0.0
      %1513 = vmatprep.subr.mxu0 0.0
      %1514 = vmatpush1.msra.mxu0 0.0
      %1515 = vmatprep.subr.mxu0 0.0
      %1516 = vmatpush1.msra.mxu0 0.0
      %1517 = vmatprep.subr.mxu0 0.0
      %1518 = vmatpush1.msra.mxu0 0.0
      %1519 = vmatprep.subr.mxu0 0.0
      %1520 = vmatpush1.msra.mxu0 0.0
      %1521 = vmatprep.subr.mxu0 0.0
      %1522 = vmatpush1.msra.mxu0 0.0
      %1523 = vmatprep.subr.mxu0 0.0
      %1524 = vmatpush1.msra.mxu0 0.0
      %1525 = vmatprep.subr.mxu0 0.0
      %1526 = vmatpush1.msra.mxu0 0.0
      %1527 = vmatprep.subr.mxu0 0.0
      %1528 = vmatpush1.msra.mxu0 0.0
      %1529 = vmatprep.subr.mxu0 0.0
      %1530 = vmatpush1.msra.mxu0 0.0
      %1531 = vmatprep.subr.mxu0 0.0
      %1532 = vmatpush1.msra.mxu0 0.0
      %1533 = vmatprep.subr.mxu0 0.0
      %1534 = vmatpush1.msra.mxu0 0.0
      %1535 = vmatprep.subr.mxu0 0.0
      %1536 = vmatpush1.msra.mxu0 0.0
      %1537 = vmatprep.subr.mxu0 0.0
      %1538 = vmatpush1.msra.mxu0 0.0
      %1539 = vmatprep.subr.mxu0 0.0
      %1540 = vmatpush1.msra.mxu0 0.0
      %1541 = vmatprep.mubr.f32.mxu0 0.0
      %1542 = vmatmul.mubr.f32.gmra.mrb[0].mxu0 %v1382
      %v1543 = vpop.f32.mrb[0].mxu0
      %v1544 = vadd.f32 0.0, %v1543
      %v1545 = vpop.f32.mrb[0].mxu0
      %1546 = vmatprep.mubr.f32.mxu0 0.0
      %1547 = vmatmul.mubr.f32.gmra.mrb[0].mxu0 %v1385
      %v1548 = vpop.f32.mrb[0].mxu0
      %v1549 = vadd.f32 0.0, %v1548
      %v1550 = vpop.f32.mrb[0].mxu0
      %1551 = vmatprep.mubr.f32.mxu0 0.0
      %1552 = vmatmul.mubr.f32.gmra.mrb[0].mxu0 %v1388
      %v1553 = vpop.f32.mrb[0].mxu0
      %v1554 = vadd.f32 0.0, %v1553
      %v1555 = vpop.f32.mrb[0].mxu0
      %1556 = vmatprep.mubr.f32.mxu0 0.0
      %1557 = vmatmul.mubr.f32.gmra.mrb[0].mxu0 %v1391
      %v1558 = vpop.f32.mrb[0].mxu0
      %v1559 = vadd.f32 0.0, %v1558
      %v1560 = vpop.f32.mrb[0].mxu0
      %1561 = vmatprep.mubr.f32.mxu0 0.0
      %1562 = vmatmul.mubr.f32.gmra.mrb[0].mxu0 %v1394
      %v1563 = vpop.f32.mrb[0].mxu0
      %v1564 = vadd.f32 0.0, %v1563
      %v1565 = vpop.f32.mrb[0].mxu0
      %1566 = vmatprep.mubr.f32.mxu0 0.0
      %1567 = vmatmul.mubr.f32.gmra.mrb[0].mxu0 %v1397
      %v1568 = vpop.f32.mrb[0].mxu0
      %v1569 = vadd.f32 0.0, %v1568
      %v1570 = vpop.f32.mrb[0].mxu0
      %1571 = vmatprep.mubr.f32.mxu0 0.0
      %1572 = vmatmul.mubr.f32.gmra.mrb[0].mxu0 %v1400
      %v1573 = vpop.f32.mrb[0].mxu0
      %v1574 = vadd.f32 0.0, %v1573
      %v1575 = vpop.f32.mrb[0].mxu0
      %1576 = vmatprep.mubr.f32.mxu0 0.0
      %1577 = vmatmul.mubr.f32.gmra.mrb[0].mxu0 %v1403
      %v1578 = vpop.f32.mrb[0].mxu0
      %v1579 = vadd.f32 0.0, %v1578
      %v1580 = vpop.f32.mrb[0].mxu0
      %1581 = vmatprep.mubr.f32.mxu0 0.0
      %1582 = vmatmul.mubr.f32.gmra.mrb[0].mxu0 %v1406
      %v1583 = vpop.f32.mrb[0].mxu0
      %v1584 = vadd.f32 0.0, %v1583
      %v1585 = vpop.f32.mrb[0].mxu0
      %1586 = vmatprep.mubr.f32.mxu0 0.0
      %1587 = vmatmul.mubr.f32.gmra.mrb[0].mxu0 %v1409
      %v1588 = vpop.f32.mrb[0].mxu0
      %v1589 = vadd.f32 0.0, %v1588
      %v1590 = vpop.f32.mrb[0].mxu0
      %1591 = vmatprep.mubr.f32.mxu0 0.0
      %1592 = vmatmul.mubr.f32.gmra.mrb[0].mxu0 %v1412
      %v1593 = vpop.f32.mrb[0].mxu0
      %v1594 = vadd.f32 0.0, %v1593
      %v1595 = vpop.f32.mrb[0].mxu0
      %1596 = vmatprep.mubr.f32.mxu0 0.0
      %1597 = vmatmul.mubr.f32.gmra.mrb[0].mxu0 %v1415
      %v1598 = vpop.f32.mrb[0].mxu0
      %v1599 = vadd.f32 0.0, %v1598
      %v1600 = vpop.f32.mrb[0].mxu0
      %1601 = vmatprep.mubr.f32.mxu0 0.0
      %1602 = vmatmul.mubr.f32.gmra.mrb[0].mxu0 %v1418
      %v1603 = vpop.f32.mrb[0].mxu0
      %v1604 = vadd.f32 0.0, %v1603
      %v1605 = vpop.f32.mrb[0].mxu0
      %1606 = vmatprep.mubr.f32.mxu0 0.0
      %1607 = vmatmul.mubr.f32.gmra.mrb[0].mxu0 %v1421
      %v1608 = vpop.f32.mrb[0].mxu0
      %v1609 = vadd.f32 0.0, %v1608
      %v1610 = vpop.f32.mrb[0].mxu0
      %1611 = vmatprep.mubr.f32.mxu0 0.0
      %1612 = vmatmul.mubr.f32.gmra.mrb[0].mxu0 %v1424
      %v1613 = vpop.f32.mrb[0].mxu0
      %v1614 = vadd.f32 0.0, %v1613
      %v1615 = vpop.f32.mrb[0].mxu0
      %1616 = vmatprep.mubr.f32.mxu0 0.0
      %1617 = vmatmul.mubr.f32.gmra.mrb[0].mxu0 %v1427
      %v1618 = vpop.f32.mrb[0].mxu0
      %v1619 = vadd.f32 0.0, %v1618
      %v1620 = vpop.f32.mrb[0].mxu0
      %1621 = vmatprep.mubr.f32.mxu0 0.0
      %1622 = vmatmul.mubr.f32.gmra.mrb[0].mxu0 %v1430
      %v1623 = vpop.f32.mrb[0].mxu0
      %v1624 = vadd.f32 0.0, %v1623
      %v1625 = vpop.f32.mrb[0].mxu0
      %1626 = vmatprep.mubr.f32.mxu0 0.0
      %1627 = vmatmul.mubr.f32.gmra.mrb[0].mxu0 %v1433
      %v1628 = vpop.f32.mrb[0].mxu0
      %v1629 = vadd.f32 0.0, %v1628
      %v1630 = vpop.f32.mrb[0].mxu0
      %1631 = vmatprep.mubr.f32.mxu0 0.0
      %1632 = vmatmul.mubr.f32.gmra.mrb[0].mxu0 %v1436
      %v1633 = vpop.f32.mrb[0].mxu0
      %v1634 = vadd.f32 0.0, %v1633
      %v1635 = vpop.f32.mrb[0].mxu0
      %1636 = vmatprep.mubr.f32.mxu0 0.0
      %1637 = vmatmul.mubr.f32.gmra.mrb[0].mxu0 %v1439
      %v1638 = vpop.f32.mrb[0].mxu0
      %v1639 = vadd.f32 0.0, %v1638
      %v1640 = vpop.f32.mrb[0].mxu0
      %1641 = vmatprep.mubr.f32.mxu0 0.0
      %1642 = vmatmul.mubr.f32.gmra.mrb[0].mxu0 %v1442
      %v1643 = vpop.f32.mrb[0].mxu0
      %v1644 = vadd.f32 0.0, %v1643
      %v1645 = vpop.f32.mrb[0].mxu0
      %1646 = vmatprep.mubr.f32.mxu0 0.0
      %1647 = vmatmul.mubr.f32.gmra.mrb[0].mxu0 %v1445
      %v1648 = vpop.f32.mrb[0].mxu0
      %v1649 = vadd.f32 0.0, %v1648
      %v1650 = vpop.f32.mrb[0].mxu0
      %1651 = vmatprep.mubr.f32.mxu0 0.0
      %1652 = vmatmul.mubr.f32.gmra.mrb[0].mxu0 %v1448
      %v1653 = vpop.f32.mrb[0].mxu0
      %v1654 = vadd.f32 0.0, %v1653
      %v1655 = vpop.f32.mrb[0].mxu0
      %1656 = vmatprep.mubr.f32.mxu0 0.0
      %1657 = vmatmul.mubr.f32.gmra.mrb[0].mxu0 %v1451
      %v1658 = vpop.f32.mrb[0].mxu0
      %v1659 = vadd.f32 0.0, %v1658
      %v1660 = vpop.f32.mrb[0].mxu0
      %1661 = vmatprep.mubr.f32.mxu0 0.0
      %1662 = vmatmul.mubr.f32.gmra.mrb[0].mxu0 %v1454
      %v1663 = vpop.f32.mrb[0].mxu0
      %v1664 = vadd.f32 0.0, %v1663
      %v1665 = vpop.f32.mrb[0].mxu0
      %1666 = vmatprep.mubr.f32.mxu0 0.0
      %1667 = vmatmul.mubr.f32.gmra.mrb[0].mxu0 %v1457
      %v1668 = vpop.f32.mrb[0].mxu0
      %v1669 = vadd.f32 0.0, %v1668
      %v1670 = vpop.f32.mrb[0].mxu0
      %1671 = vmatprep.mubr.f32.mxu0 0.0
      %1672 = vmatmul.mubr.f32.gmra.mrb[0].mxu0 %v1460
      %v1673 = vpop.f32.mrb[0].mxu0
      %v1674 = vadd.f32 0.0, %v1673
      %v1675 = vpop.f32.mrb[0].mxu0
      %1676 = vmatprep.mubr.f32.mxu0 0.0
      %1677 = vmatmul.mubr.f32.gmra.mrb[0].mxu0 %v1463
      %v1678 = vpop.f32.mrb[0].mxu0
      %v1679 = vadd.f32 0.0, %v1678
      %v1680 = vpop.f32.mrb[0].mxu0
      %1681 = vmatprep.mubr.f32.mxu0 0.0
      %1682 = vmatmul.mubr.f32.gmra.mrb[0].mxu0 %v1466
      %v1683 = vpop.f32.mrb[0].mxu0
      %v1684 = vadd.f32 0.0, %v1683
      %v1685 = vpop.f32.mrb[0].mxu0
      %1686 = vmatprep.mubr.f32.mxu0 0.0
      %1687 = vmatmul.mubr.f32.gmra.mrb[0].mxu0 %v1469
      %v1688 = vpop.f32.mrb[0].mxu0
      %v1689 = vadd.f32 0.0, %v1688
      %v1690 = vpop.f32.mrb[0].mxu0
      %1691 = vmatprep.mubr.f32.mxu0 0.0
      %1692 = vmatmul.mubr.f32.gmra.mrb[0].mxu0 %v1472
      %v1693 = vpop.f32.mrb[0].mxu0
      %v1694 = vadd.f32 0.0, %v1693
      %v1695 = vpop.f32.mrb[0].mxu0
      %1696 = vmatprep.mubr.f32.mxu0 0.0
      %1697 = vmatmul.mubr.f32.gmra.mrb[0].mxu0 %v1475
      %v1698 = vpop.f32.mrb[0].mxu0
      %v1699 = vadd.f32 0.0, %v1698
      %v1700 = vpop.f32.mrb[0].mxu0
      %1701 = vdwg.mxu0
      %v1703 = vsel %vm760, %v1312, 0
      %v1706 = vsel %vm760, %v1313, 0
      %v1709 = vsel %vm760, %v1314, 0
      %v1712 = vsel %vm760, %v1315, 0
      %v1715 = vsel %vm760, %v1316, 0
      %v1718 = vsel %vm760, %v1317, 0
      %v1721 = vsel %vm760, %v1318, 0
      %v1724 = vsel %vm760, %v1319, 0
      %v1727 = vsel %vm760, %v1320, 0
      %v1730 = vsel %vm760, %v1321, 0
      %v1733 = vsel %vm760, %v1322, 0
      %v1736 = vsel %vm760, %v1323, 0
      %v1739 = vsel %vm760, %v1324, 0
      %v1742 = vsel %vm760, %v1325, 0
      %v1745 = vsel %vm760, %v1326, 0
      %v1748 = vsel %vm760, %v1327, 0
      %v1751 = vsel %vm760, %v1328, 0
      %v1754 = vsel %vm760, %v1329, 0
      %v1757 = vsel %vm760, %v1330, 0
      %v1760 = vsel %vm760, %v1331, 0
      %v1763 = vsel %vm760, %v1332, 0
      %v1766 = vsel %vm760, %v1333, 0
      %v1769 = vsel %vm760, %v1334, 0
      %v1772 = vsel %vm760, %v1335, 0
      %v1775 = vsel %vm760, %v1336, 0
      %v1778 = vsel %vm760, %v1337, 0
      %v1781 = vsel %vm760, %v1338, 0
      %v1784 = vsel %vm760, %v1339, 0
      %v1787 = vsel %vm760, %v1340, 0
      %v1790 = vsel %vm760, %v1341, 0
      %v1793 = vsel %vm760, %v1342, 0
      %v1796 = vsel %vm760, %v1343, 0
      %1798 = vmatprep.subr.mxu0 0.0
      %1799 = vmatpush1.msra.mxu0 %v1344
      %1800 = vmatprep.subr.mxu0 0.0
      %1801 = vmatpush1.msra.mxu0 %v1345
      %1802 = vmatprep.subr.mxu0 0.0
      %1803 = vmatpush1.msra.mxu0 0.0
      %1804 = vmatprep.subr.mxu0 0.0
      %1805 = vmatpush1.msra.mxu0 0.0
      %1806 = vmatprep.subr.mxu0 0.0
      %1807 = vmatpush1.msra.mxu0 0.0
      %1808 = vmatprep.subr.mxu0 0.0
      %1809 = vmatpush1.msra.mxu0 0.0
      %1810 = vmatprep.subr.mxu0 0.0
      %1811 = vmatpush1.msra.mxu0 0.0
      %1812 = vmatprep.subr.mxu0 0.0
      %1813 = vmatpush1.msra.mxu0 0.0
      %1814 = vmatprep.subr.mxu0 0.0
      %1815 = vmatpush1.msra.mxu0 0.0
      %1816 = vmatprep.subr.mxu0 0.0
      %1817 = vmatpush1.msra.mxu0 0.0
      %1818 = vmatprep.subr.mxu0 0.0
      %1819 = vmatpush1.msra.mxu0 0.0
      %1820 = vmatprep.subr.mxu0 0.0
      %1821 = vmatpush1.msra.mxu0 0.0
      %1822 = vmatprep.subr.mxu0 0.0
      %1823 = vmatpush1.msra.mxu0 0.0
      %1824 = vmatprep.subr.mxu0 0.0
      %1825 = vmatpush1.msra.mxu0 0.0
      %1826 = vmatprep.subr.mxu0 0.0
      %1827 = vmatpush1.msra.mxu0 0.0
      %1828 = vmatprep.subr.mxu0 0.0
      %1829 = vmatpush1.msra.mxu0 0.0
      %1830 = vmatprep.subr.mxu0 0.0
      %1831 = vmatpush1.msra.mxu0 0.0
      %1832 = vmatprep.subr.mxu0 0.0
      %1833 = vmatpush1.msra.mxu0 0.0
      %1834 = vmatprep.subr.mxu0 0.0
      %1835 = vmatpush1.msra.mxu0 0.0
      %1836 = vmatprep.subr.mxu0 0.0
      %1837 = vmatpush1.msra.mxu0 0.0
      %1838 = vmatprep.subr.mxu0 0.0
      %1839 = vmatpush1.msra.mxu0 0.0
      %1840 = vmatprep.subr.mxu0 0.0
      %1841 = vmatpush1.msra.mxu0 0.0
      %1842 = vmatprep.subr.mxu0 0.0
      %1843 = vmatpush1.msra.mxu0 0.0
      %1844 = vmatprep.subr.mxu0 0.0
      %1845 = vmatpush1.msra.mxu0 0.0
      %1846 = vmatprep.subr.mxu0 0.0
      %1847 = vmatpush1.msra.mxu0 0.0
      %1848 = vmatprep.subr.mxu0 0.0
      %1849 = vmatpush1.msra.mxu0 0.0
      %1850 = vmatprep.subr.mxu0 0.0
      %1851 = vmatpush1.msra.mxu0 0.0
      %1852 = vmatprep.subr.mxu0 0.0
      %1853 = vmatpush1.msra.mxu0 0.0
      %1854 = vmatprep.subr.mxu0 0.0
      %1855 = vmatpush1.msra.mxu0 0.0
      %1856 = vmatprep.subr.mxu0 0.0
      %1857 = vmatpush1.msra.mxu0 0.0
      %1858 = vmatprep.subr.mxu0 0.0
      %1859 = vmatpush1.msra.mxu0 0.0
      %1860 = vmatprep.subr.mxu0 0.0
      %1861 = vmatpush1.msra.mxu0 0.0
      %1862 = vmatprep.mubr.f32.mxu0 0.0
      %1863 = vmatmul.mubr.f32.gmra.mrb[0].mxu0 %v1703
      %v1864 = vpop.f32.mrb[0].mxu0
      %v1865 = vadd.f32 %v1544, %v1864
      %v1866 = vpop.f32.mrb[0].mxu0
      %1867 = vmatprep.mubr.f32.mxu0 0.0
      %1868 = vmatmul.mubr.f32.gmra.mrb[0].mxu0 %v1706
      %v1869 = vpop.f32.mrb[0].mxu0
      %v1870 = vadd.f32 %v1549, %v1869
      %v1871 = vpop.f32.mrb[0].mxu0
      %1872 = vmatprep.mubr.f32.mxu0 0.0
      %1873 = vmatmul.mubr.f32.gmra.mrb[0].mxu0 %v1709
      %v1874 = vpop.f32.mrb[0].mxu0
      %v1875 = vadd.f32 %v1554, %v1874
      %v1876 = vpop.f32.mrb[0].mxu0
      %1877 = vmatprep.mubr.f32.mxu0 0.0
      %1878 = vmatmul.mubr.f32.gmra.mrb[0].mxu0 %v1712
      %v1879 = vpop.f32.mrb[0].mxu0
      %v1880 = vadd.f32 %v1559, %v1879
      %v1881 = vpop.f32.mrb[0].mxu0
      %1882 = vmatprep.mubr.f32.mxu0 0.0
      %1883 = vmatmul.mubr.f32.gmra.mrb[0].mxu0 %v1715
      %v1884 = vpop.f32.mrb[0].mxu0
      %v1885 = vadd.f32 %v1564, %v1884
      %v1886 = vpop.f32.mrb[0].mxu0
      %1887 = vmatprep.mubr.f32.mxu0 0.0
      %1888 = vmatmul.mubr.f32.gmra.mrb[0].mxu0 %v1718
      %v1889 = vpop.f32.mrb[0].mxu0
      %v1890 = vadd.f32 %v1569, %v1889
      %v1891 = vpop.f32.mrb[0].mxu0
      %1892 = vmatprep.mubr.f32.mxu0 0.0
      %1893 = vmatmul.mubr.f32.gmra.mrb[0].mxu0 %v1721
      %v1894 = vpop.f32.mrb[0].mxu0
      %v1895 = vadd.f32 %v1574, %v1894
      %v1896 = vpop.f32.mrb[0].mxu0
      %1897 = vmatprep.mubr.f32.mxu0 0.0
      %1898 = vmatmul.mubr.f32.gmra.mrb[0].mxu0 %v1724
      %v1899 = vpop.f32.mrb[0].mxu0
      %v1900 = vadd.f32 %v1579, %v1899
      %v1901 = vpop.f32.mrb[0].mxu0
      %1902 = vmatprep.mubr.f32.mxu0 0.0
      %1903 = vmatmul.mubr.f32.gmra.mrb[0].mxu0 %v1727
      %v1904 = vpop.f32.mrb[0].mxu0
      %v1905 = vadd.f32 %v1584, %v1904
      %v1906 = vpop.f32.mrb[0].mxu0
      %1907 = vmatprep.mubr.f32.mxu0 0.0
      %1908 = vmatmul.mubr.f32.gmra.mrb[0].mxu0 %v1730
      %v1909 = vpop.f32.mrb[0].mxu0
      %v1910 = vadd.f32 %v1589, %v1909
      %v1911 = vpop.f32.mrb[0].mxu0
      %1912 = vmatprep.mubr.f32.mxu0 0.0
      %1913 = vmatmul.mubr.f32.gmra.mrb[0].mxu0 %v1733
      %v1914 = vpop.f32.mrb[0].mxu0
      %v1915 = vadd.f32 %v1594, %v1914
      %v1916 = vpop.f32.mrb[0].mxu0
      %1917 = vmatprep.mubr.f32.mxu0 0.0
      %1918 = vmatmul.mubr.f32.gmra.mrb[0].mxu0 %v1736
      %v1919 = vpop.f32.mrb[0].mxu0
      %v1920 = vadd.f32 %v1599, %v1919
      %v1921 = vpop.f32.mrb[0].mxu0
      %1922 = vmatprep.mubr.f32.mxu0 0.0
      %1923 = vmatmul.mubr.f32.gmra.mrb[0].mxu0 %v1739
      %v1924 = vpop.f32.mrb[0].mxu0
      %v1925 = vadd.f32 %v1604, %v1924
      %v1926 = vpop.f32.mrb[0].mxu0
      %1927 = vmatprep.mubr.f32.mxu0 0.0
      %1928 = vmatmul.mubr.f32.gmra.mrb[0].mxu0 %v1742
      %v1929 = vpop.f32.mrb[0].mxu0
      %v1930 = vadd.f32 %v1609, %v1929
      %v1931 = vpop.f32.mrb[0].mxu0
      %1932 = vmatprep.mubr.f32.mxu0 0.0
      %1933 = vmatmul.mubr.f32.gmra.mrb[0].mxu0 %v1745
      %v1934 = vpop.f32.mrb[0].mxu0
      %v1935 = vadd.f32 %v1614, %v1934
      %v1936 = vpop.f32.mrb[0].mxu0
      %1937 = vmatprep.mubr.f32.mxu0 0.0
      %1938 = vmatmul.mubr.f32.gmra.mrb[0].mxu0 %v1748
      %v1939 = vpop.f32.mrb[0].mxu0
      %v1940 = vadd.f32 %v1619, %v1939
      %v1941 = vpop.f32.mrb[0].mxu0
      %1942 = vmatprep.mubr.f32.mxu0 0.0
      %1943 = vmatmul.mubr.f32.gmra.mrb[0].mxu0 %v1751
      %v1944 = vpop.f32.mrb[0].mxu0
      %v1945 = vadd.f32 %v1624, %v1944
      %v1946 = vpop.f32.mrb[0].mxu0
      %1947 = vmatprep.mubr.f32.mxu0 0.0
      %1948 = vmatmul.mubr.f32.gmra.mrb[0].mxu0 %v1754
      %v1949 = vpop.f32.mrb[0].mxu0
      %v1950 = vadd.f32 %v1629, %v1949
      %v1951 = vpop.f32.mrb[0].mxu0
      %1952 = vmatprep.mubr.f32.mxu0 0.0
      %1953 = vmatmul.mubr.f32.gmra.mrb[0].mxu0 %v1757
      %v1954 = vpop.f32.mrb[0].mxu0
      %v1955 = vadd.f32 %v1634, %v1954
      %v1956 = vpop.f32.mrb[0].mxu0
      %1957 = vmatprep.mubr.f32.mxu0 0.0
      %1958 = vmatmul.mubr.f32.gmra.mrb[0].mxu0 %v1760
      %v1959 = vpop.f32.mrb[0].mxu0
      %v1960 = vadd.f32 %v1639, %v1959
      %v1961 = vpop.f32.mrb[0].mxu0
      %1962 = vmatprep.mubr.f32.mxu0 0.0
      %1963 = vmatmul.mubr.f32.gmra.mrb[0].mxu0 %v1763
      %v1964 = vpop.f32.mrb[0].mxu0
      %v1965 = vadd.f32 %v1644, %v1964
      %v1966 = vpop.f32.mrb[0].mxu0
      %1967 = vmatprep.mubr.f32.mxu0 0.0
      %1968 = vmatmul.mubr.f32.gmra.mrb[0].mxu0 %v1766
      %v1969 = vpop.f32.mrb[0].mxu0
      %v1970 = vadd.f32 %v1649, %v1969
      %v1971 = vpop.f32.mrb[0].mxu0
      %1972 = vmatprep.mubr.f32.mxu0 0.0
      %1973 = vmatmul.mubr.f32.gmra.mrb[0].mxu0 %v1769
      %v1974 = vpop.f32.mrb[0].mxu0
      %v1975 = vadd.f32 %v1654, %v1974
      %v1976 = vpop.f32.mrb[0].mxu0
      %1977 = vmatprep.mubr.f32.mxu0 0.0
      %1978 = vmatmul.mubr.f32.gmra.mrb[0].mxu0 %v1772
      %v1979 = vpop.f32.mrb[0].mxu0
      %v1980 = vadd.f32 %v1659, %v1979
      %v1981 = vpop.f32.mrb[0].mxu0
      %1982 = vmatprep.mubr.f32.mxu0 0.0
      %1983 = vmatmul.mubr.f32.gmra.mrb[0].mxu0 %v1775
      %v1984 = vpop.f32.mrb[0].mxu0
      %v1985 = vadd.f32 %v1664, %v1984
      %v1986 = vpop.f32.mrb[0].mxu0
      %1987 = vmatprep.mubr.f32.mxu0 0.0
      %1988 = vmatmul.mubr.f32.gmra.mrb[0].mxu0 %v1778
      %v1989 = vpop.f32.mrb[0].mxu0
      %v1990 = vadd.f32 %v1669, %v1989
      %v1991 = vpop.f32.mrb[0].mxu0
      %1992 = vmatprep.mubr.f32.mxu0 0.0
      %1993 = vmatmul.mubr.f32.gmra.mrb[0].mxu0 %v1781
      %v1994 = vpop.f32.mrb[0].mxu0
      %v1995 = vadd.f32 %v1674, %v1994
      %v1996 = vpop.f32.mrb[0].mxu0
      %1997 = vmatprep.mubr.f32.mxu0 0.0
      %1998 = vmatmul.mubr.f32.gmra.mrb[0].mxu0 %v1784
      %v1999 = vpop.f32.mrb[0].mxu0
      %v2000 = vadd.f32 %v1679, %v1999
      %v2001 = vpop.f32.mrb[0].mxu0
      %2002 = vmatprep.mubr.f32.mxu0 0.0
      %2003 = vmatmul.mubr.f32.gmra.mrb[0].mxu0 %v1787
      %v2004 = vpop.f32.mrb[0].mxu0
      %v2005 = vadd.f32 %v1684, %v2004
      %v2006 = vpop.f32.mrb[0].mxu0
      %2007 = vmatprep.mubr.f32.mxu0 0.0
      %2008 = vmatmul.mubr.f32.gmra.mrb[0].mxu0 %v1790
      %v2009 = vpop.f32.mrb[0].mxu0
      %v2010 = vadd.f32 %v1689, %v2009
      %v2011 = vpop.f32.mrb[0].mxu0
      %2012 = vmatprep.mubr.f32.mxu0 0.0
      %2013 = vmatmul.mubr.f32.gmra.mrb[0].mxu0 %v1793
      %v2014 = vpop.f32.mrb[0].mxu0
      %v2015 = vadd.f32 %v1694, %v2014
      %v2016 = vpop.f32.mrb[0].mxu0
      %2017 = vmatprep.mubr.f32.mxu0 0.0
      %2018 = vmatmul.mubr.f32.gmra.mrb[0].mxu0 %v1796
      %v2019 = vpop.f32.mrb[0].mxu0
      %v2020 = vadd.f32 %v1699, %v2019
      %v2021 = vpop.f32.mrb[0].mxu0
      %2022 = vdwg.mxu0
      %v2023 = vld [vmem:[#allocation2 + $0x9] sm:$0xff]
      %v2024 = vld [vmem:[#allocation2 + $0x11] sm:$0xff]
      %v2025 = vld [vmem:[#allocation2 + $0x19] sm:$0xff]
      %v2026 = vld [vmem:[#allocation2 + $0x21] sm:$0xff]
      %v2027 = vld [vmem:[#allocation2 + $0x29] sm:$0xff]
      %v2028 = vld [vmem:[#allocation2 + $0x31] sm:$0xff]
      %v2029 = vld [vmem:[#allocation2 + $0x39] sm:$0xff]
      %v2030 = vld [vmem:[#allocation2 + $0x41] sm:$0xff]
      %v2031 = vld [vmem:[#allocation2 + $0x49] sm:$0xff]
      %v2032 = vld [vmem:[#allocation2 + $0x51] sm:$0xff]
      %v2033 = vld [vmem:[#allocation2 + $0x59] sm:$0xff]
      %v2034 = vld [vmem:[#allocation2 + $0x61] sm:$0xff]
      %v2035 = vld [vmem:[#allocation2 + $0x69] sm:$0xff]
      %v2036 = vld [vmem:[#allocation2 + $0x71] sm:$0xff]
      %v2037 = vld [vmem:[#allocation2 + $0x79] sm:$0xff]
      %v2038 = vld [vmem:[#allocation2 + $0x81] sm:$0xff]
      %v2039 = vld [vmem:[#allocation2 + $0x89] sm:$0xff]
      %v2040 = vld [vmem:[#allocation2 + $0x91] sm:$0xff]
      %v2041 = vld [vmem:[#allocation2 + $0x99] sm:$0xff]
      %v2042 = vld [vmem:[#allocation2 + $0xa1] sm:$0xff]
      %v2043 = vld [vmem:[#allocation2 + $0xa9] sm:$0xff]
      %v2044 = vld [vmem:[#allocation2 + $0xb1] sm:$0xff]
      %v2045 = vld [vmem:[#allocation2 + $0xb9] sm:$0xff]
      %v2046 = vld [vmem:[#allocation2 + $0xc1] sm:$0xff]
      %v2047 = vld [vmem:[#allocation2 + $0xc9] sm:$0xff]
      %v2048 = vld [vmem:[#allocation2 + $0xd1] sm:$0xff]
      %v2049 = vld [vmem:[#allocation2 + $0xd9] sm:$0xff]
      %v2050 = vld [vmem:[#allocation2 + $0xe1] sm:$0xff]
      %v2051 = vld [vmem:[#allocation2 + $0xe9] sm:$0xff]
      %v2052 = vld [vmem:[#allocation2 + $0xf1] sm:$0xff]
      %v2053 = vld [vmem:[#allocation2 + $0xf9] sm:$0xff]
      %v2054 = vld [vmem:[#allocation2 + $0x101] sm:$0xff]
      %v2055 = vsel %vm1248, %v2023, 0.0
      %v2056 = vsel %vm1249, %v2024, 0.0
      %v2057 = vsel %vm1250, %v2025, 0.0
      %v2058 = vsel %vm1251, %v2026, 0.0
      %v2059 = vsel %vm1252, %v2027, 0.0
      %v2060 = vsel %vm1253, %v2028, 0.0
      %v2061 = vsel %vm1254, %v2029, 0.0
      %v2062 = vsel %vm1255, %v2030, 0.0
      %v2063 = vsel %vm1256, %v2031, 0.0
      %v2064 = vsel %vm1257, %v2032, 0.0
      %v2065 = vsel %vm1258, %v2033, 0.0
      %v2066 = vsel %vm1259, %v2034, 0.0
      %v2067 = vsel %vm1260, %v2035, 0.0
      %v2068 = vsel %vm1261, %v2036, 0.0
      %v2069 = vsel %vm1262, %v2037, 0.0
      %v2070 = vsel %vm1263, %v2038, 0.0
      %v2071 = vsel %vm1264, %v2039, 0.0
      %v2072 = vsel %vm1265, %v2040, 0.0
      %v2073 = vsel %vm1266, %v2041, 0.0
      %v2074 = vsel %vm1267, %v2042, 0.0
      %v2075 = vsel %vm1268, %v2043, 0.0
      %v2076 = vsel %vm1269, %v2044, 0.0
      %v2077 = vsel %vm1270, %v2045, 0.0
      %v2078 = vsel %vm1271, %v2046, 0.0
      %v2079 = vsel %vm1272, %v2047, 0.0
      %v2080 = vsel %vm1273, %v2048, 0.0
      %v2081 = vsel %vm1274, %v2049, 0.0
      %v2082 = vsel %vm1275, %v2050, 0.0
      %v2083 = vsel %vm1276, %v2051, 0.0
      %v2084 = vsel %vm1277, %v2052, 0.0
      %v2085 = vsel %vm1278, %v2053, 0.0
      %v2086 = vsel %vm1279, %v2054, 0.0
      %s2087 = scalar_lea.vmem %s5, 32
      %v2088 = vld [vmem:[%s2087] sm:$0xff]
      %v2089 = vld [vmem:[%s2087 + $0x8] sm:$0xff]
      %v2091 = vsel %vm760, %v2055, 0
      %v2094 = vsel %vm760, %v2056, 0
      %v2097 = vsel %vm760, %v2057, 0
      %v2100 = vsel %vm760, %v2058, 0
      %v2103 = vsel %vm760, %v2059, 0
      %v2106 = vsel %vm760, %v2060, 0
      %v2109 = vsel %vm760, %v2061, 0
      %v2112 = vsel %vm760, %v2062, 0
      %v2115 = vsel %vm760, %v2063, 0
      %v2118 = vsel %vm760, %v2064, 0
      %v2121 = vsel %vm760, %v2065, 0
      %v2124 = vsel %vm760, %v2066, 0
      %v2127 = vsel %vm760, %v2067, 0
      %v2130 = vsel %vm760, %v2068, 0
      %v2133 = vsel %vm760, %v2069, 0
      %v2136 = vsel %vm760, %v2070, 0
      %v2139 = vsel %vm760, %v2071, 0
      %v2142 = vsel %vm760, %v2072, 0
      %v2145 = vsel %vm760, %v2073, 0
      %v2148 = vsel %vm760, %v2074, 0
      %v2151 = vsel %vm760, %v2075, 0
      %v2154 = vsel %vm760, %v2076, 0
      %v2157 = vsel %vm760, %v2077, 0
      %v2160 = vsel %vm760, %v2078, 0
      %v2163 = vsel %vm760, %v2079, 0
      %v2166 = vsel %vm760, %v2080, 0
      %v2169 = vsel %vm760, %v2081, 0
      %v2172 = vsel %vm760, %v2082, 0
      %v2175 = vsel %vm760, %v2083, 0
      %v2178 = vsel %vm760, %v2084, 0
      %v2181 = vsel %vm760, %v2085, 0
      %v2184 = vsel %vm760, %v2086, 0
      %2186 = vmatprep.subr.mxu0 0.0
      %2187 = vmatpush1.msra.mxu0 %v2088
      %2188 = vmatprep.subr.mxu0 0.0
      %2189 = vmatpush1.msra.mxu0 %v2089
      %2190 = vmatprep.subr.mxu0 0.0
      %2191 = vmatpush1.msra.mxu0 0.0
      %2192 = vmatprep.subr.mxu0 0.0
      %2193 = vmatpush1.msra.mxu0 0.0
      %2194 = vmatprep.subr.mxu0 0.0
      %2195 = vmatpush1.msra.mxu0 0.0
      %2196 = vmatprep.subr.mxu0 0.0
      %2197 = vmatpush1.msra.mxu0 0.0
      %2198 = vmatprep.subr.mxu0 0.0
      %2199 = vmatpush1.msra.mxu0 0.0
      %2200 = vmatprep.subr.mxu0 0.0
      %2201 = vmatpush1.msra.mxu0 0.0
      %2202 = vmatprep.subr.mxu0 0.0
      %2203 = vmatpush1.msra.mxu0 0.0
      %2204 = vmatprep.subr.mxu0 0.0
      %2205 = vmatpush1.msra.mxu0 0.0
      %2206 = vmatprep.subr.mxu0 0.0
      %2207 = vmatpush1.msra.mxu0 0.0
      %2208 = vmatprep.subr.mxu0 0.0
      %2209 = vmatpush1.msra.mxu0 0.0
      %2210 = vmatprep.subr.mxu0 0.0
      %2211 = vmatpush1.msra.mxu0 0.0
      %2212 = vmatprep.subr.mxu0 0.0
      %2213 = vmatpush1.msra.mxu0 0.0
      %2214 = vmatprep.subr.mxu0 0.0
      %2215 = vmatpush1.msra.mxu0 0.0
      %2216 = vmatprep.subr.mxu0 0.0
      %2217 = vmatpush1.msra.mxu0 0.0
      %2218 = vmatprep.subr.mxu0 0.0
      %2219 = vmatpush1.msra.mxu0 0.0
      %2220 = vmatprep.subr.mxu0 0.0
      %2221 = vmatpush1.msra.mxu0 0.0
      %2222 = vmatprep.subr.mxu0 0.0
      %2223 = vmatpush1.msra.mxu0 0.0
      %2224 = vmatprep.subr.mxu0 0.0
      %2225 = vmatpush1.msra.mxu0 0.0
      %2226 = vmatprep.subr.mxu0 0.0
      %2227 = vmatpush1.msra.mxu0 0.0
      %2228 = vmatprep.subr.mxu0 0.0
      %2229 = vmatpush1.msra.mxu0 0.0
      %2230 = vmatprep.subr.mxu0 0.0
      %2231 = vmatpush1.msra.mxu0 0.0
      %2232 = vmatprep.subr.mxu0 0.0
      %2233 = vmatpush1.msra.mxu0 0.0
      %2234 = vmatprep.subr.mxu0 0.0
      %2235 = vmatpush1.msra.mxu0 0.0
      %2236 = vmatprep.subr.mxu0 0.0
      %2237 = vmatpush1.msra.mxu0 0.0
      %2238 = vmatprep.subr.mxu0 0.0
      %2239 = vmatpush1.msra.mxu0 0.0
      %2240 = vmatprep.subr.mxu0 0.0
      %2241 = vmatpush1.msra.mxu0 0.0
      %2242 = vmatprep.subr.mxu0 0.0
      %2243 = vmatpush1.msra.mxu0 0.0
      %2244 = vmatprep.subr.mxu0 0.0
      %2245 = vmatpush1.msra.mxu0 0.0
      %2246 = vmatprep.subr.mxu0 0.0
      %2247 = vmatpush1.msra.mxu0 0.0
      %2248 = vmatprep.subr.mxu0 0.0
      %2249 = vmatpush1.msra.mxu0 0.0
      %2250 = vmatprep.mubr.f32.mxu0 0.0
      %2251 = vmatmul.mubr.f32.gmra.mrb[0].mxu0 %v2091
      %v2252 = vpop.f32.mrb[0].mxu0
      %v2253 = vadd.f32 0.0, %v2252
      %v2254 = vpop.f32.mrb[0].mxu0
      %2255 = vmatprep.mubr.f32.mxu0 0.0
      %2256 = vmatmul.mubr.f32.gmra.mrb[0].mxu0 %v2094
      %v2257 = vpop.f32.mrb[0].mxu0
      %v2258 = vadd.f32 0.0, %v2257
      %v2259 = vpop.f32.mrb[0].mxu0
      %2260 = vmatprep.mubr.f32.mxu0 0.0
      %2261 = vmatmul.mubr.f32.gmra.mrb[0].mxu0 %v2097
      %v2262 = vpop.f32.mrb[0].mxu0
      %v2263 = vadd.f32 0.0, %v2262
      %v2264 = vpop.f32.mrb[0].mxu0
      %2265 = vmatprep.mubr.f32.mxu0 0.0
      %2266 = vmatmul.mubr.f32.gmra.mrb[0].mxu0 %v2100
      %v2267 = vpop.f32.mrb[0].mxu0
      %v2268 = vadd.f32 0.0, %v2267
      %v2269 = vpop.f32.mrb[0].mxu0
      %2270 = vmatprep.mubr.f32.mxu0 0.0
      %2271 = vmatmul.mubr.f32.gmra.mrb[0].mxu0 %v2103
      %v2272 = vpop.f32.mrb[0].mxu0
      %v2273 = vadd.f32 0.0, %v2272
      %v2274 = vpop.f32.mrb[0].mxu0
      %2275 = vmatprep.mubr.f32.mxu0 0.0
      %2276 = vmatmul.mubr.f32.gmra.mrb[0].mxu0 %v2106
      %v2277 = vpop.f32.mrb[0].mxu0
      %v2278 = vadd.f32 0.0, %v2277
      %v2279 = vpop.f32.mrb[0].mxu0
      %2280 = vmatprep.mubr.f32.mxu0 0.0
      %2281 = vmatmul.mubr.f32.gmra.mrb[0].mxu0 %v2109
      %v2282 = vpop.f32.mrb[0].mxu0
      %v2283 = vadd.f32 0.0, %v2282
      %v2284 = vpop.f32.mrb[0].mxu0
      %2285 = vmatprep.mubr.f32.mxu0 0.0
      %2286 = vmatmul.mubr.f32.gmra.mrb[0].mxu0 %v2112
      %v2287 = vpop.f32.mrb[0].mxu0
      %v2288 = vadd.f32 0.0, %v2287
      %v2289 = vpop.f32.mrb[0].mxu0
      %2290 = vmatprep.mubr.f32.mxu0 0.0
      %2291 = vmatmul.mubr.f32.gmra.mrb[0].mxu0 %v2115
      %v2292 = vpop.f32.mrb[0].mxu0
      %v2293 = vadd.f32 0.0, %v2292
      %v2294 = vpop.f32.mrb[0].mxu0
      %2295 = vmatprep.mubr.f32.mxu0 0.0
      %2296 = vmatmul.mubr.f32.gmra.mrb[0].mxu0 %v2118
      %v2297 = vpop.f32.mrb[0].mxu0
      %v2298 = vadd.f32 0.0, %v2297
      %v2299 = vpop.f32.mrb[0].mxu0
      %2300 = vmatprep.mubr.f32.mxu0 0.0
      %2301 = vmatmul.mubr.f32.gmra.mrb[0].mxu0 %v2121
      %v2302 = vpop.f32.mrb[0].mxu0
      %v2303 = vadd.f32 0.0, %v2302
      %v2304 = vpop.f32.mrb[0].mxu0
      %2305 = vmatprep.mubr.f32.mxu0 0.0
      %2306 = vmatmul.mubr.f32.gmra.mrb[0].mxu0 %v2124
      %v2307 = vpop.f32.mrb[0].mxu0
      %v2308 = vadd.f32 0.0, %v2307
      %v2309 = vpop.f32.mrb[0].mxu0
      %2310 = vmatprep.mubr.f32.mxu0 0.0
      %2311 = vmatmul.mubr.f32.gmra.mrb[0].mxu0 %v2127
      %v2312 = vpop.f32.mrb[0].mxu0
      %v2313 = vadd.f32 0.0, %v2312
      %v2314 = vpop.f32.mrb[0].mxu0
      %2315 = vmatprep.mubr.f32.mxu0 0.0
      %2316 = vmatmul.mubr.f32.gmra.mrb[0].mxu0 %v2130
      %v2317 = vpop.f32.mrb[0].mxu0
      %v2318 = vadd.f32 0.0, %v2317
      %v2319 = vpop.f32.mrb[0].mxu0
      %2320 = vmatprep.mubr.f32.mxu0 0.0
      %2321 = vmatmul.mubr.f32.gmra.mrb[0].mxu0 %v2133
      %v2322 = vpop.f32.mrb[0].mxu0
      %v2323 = vadd.f32 0.0, %v2322
      %v2324 = vpop.f32.mrb[0].mxu0
      %2325 = vmatprep.mubr.f32.mxu0 0.0
      %2326 = vmatmul.mubr.f32.gmra.mrb[0].mxu0 %v2136
      %v2327 = vpop.f32.mrb[0].mxu0
      %v2328 = vadd.f32 0.0, %v2327
      %v2329 = vpop.f32.mrb[0].mxu0
      %2330 = vmatprep.mubr.f32.mxu0 0.0
      %2331 = vmatmul.mubr.f32.gmra.mrb[0].mxu0 %v2139
      %v2332 = vpop.f32.mrb[0].mxu0
      %v2333 = vadd.f32 0.0, %v2332
      %v2334 = vpop.f32.mrb[0].mxu0
      %2335 = vmatprep.mubr.f32.mxu0 0.0
      %2336 = vmatmul.mubr.f32.gmra.mrb[0].mxu0 %v2142
      %v2337 = vpop.f32.mrb[0].mxu0
      %v2338 = vadd.f32 0.0, %v2337
      %v2339 = vpop.f32.mrb[0].mxu0
      %2340 = vmatprep.mubr.f32.mxu0 0.0
      %2341 = vmatmul.mubr.f32.gmra.mrb[0].mxu0 %v2145
      %v2342 = vpop.f32.mrb[0].mxu0
      %v2343 = vadd.f32 0.0, %v2342
      %v2344 = vpop.f32.mrb[0].mxu0
      %2345 = vmatprep.mubr.f32.mxu0 0.0
      %2346 = vmatmul.mubr.f32.gmra.mrb[0].mxu0 %v2148
      %v2347 = vpop.f32.mrb[0].mxu0
      %v2348 = vadd.f32 0.0, %v2347
      %v2349 = vpop.f32.mrb[0].mxu0
      %2350 = vmatprep.mubr.f32.mxu0 0.0
      %2351 = vmatmul.mubr.f32.gmra.mrb[0].mxu0 %v2151
      %v2352 = vpop.f32.mrb[0].mxu0
      %v2353 = vadd.f32 0.0, %v2352
      %v2354 = vpop.f32.mrb[0].mxu0
      %2355 = vmatprep.mubr.f32.mxu0 0.0
      %2356 = vmatmul.mubr.f32.gmra.mrb[0].mxu0 %v2154
      %v2357 = vpop.f32.mrb[0].mxu0
      %v2358 = vadd.f32 0.0, %v2357
      %v2359 = vpop.f32.mrb[0].mxu0
      %2360 = vmatprep.mubr.f32.mxu0 0.0
      %2361 = vmatmul.mubr.f32.gmra.mrb[0].mxu0 %v2157
      %v2362 = vpop.f32.mrb[0].mxu0
      %v2363 = vadd.f32 0.0, %v2362
      %v2364 = vpop.f32.mrb[0].mxu0
      %2365 = vmatprep.mubr.f32.mxu0 0.0
      %2366 = vmatmul.mubr.f32.gmra.mrb[0].mxu0 %v2160
      %v2367 = vpop.f32.mrb[0].mxu0
      %v2368 = vadd.f32 0.0, %v2367
      %v2369 = vpop.f32.mrb[0].mxu0
      %2370 = vmatprep.mubr.f32.mxu0 0.0
      %2371 = vmatmul.mubr.f32.gmra.mrb[0].mxu0 %v2163
      %v2372 = vpop.f32.mrb[0].mxu0
      %v2373 = vadd.f32 0.0, %v2372
      %v2374 = vpop.f32.mrb[0].mxu0
      %2375 = vmatprep.mubr.f32.mxu0 0.0
      %2376 = vmatmul.mubr.f32.gmra.mrb[0].mxu0 %v2166
      %v2377 = vpop.f32.mrb[0].mxu0
      %v2378 = vadd.f32 0.0, %v2377
      %v2379 = vpop.f32.mrb[0].mxu0
      %2380 = vmatprep.mubr.f32.mxu0 0.0
      %2381 = vmatmul.mubr.f32.gmra.mrb[0].mxu0 %v2169
      %v2382 = vpop.f32.mrb[0].mxu0
      %v2383 = vadd.f32 0.0, %v2382
      %v2384 = vpop.f32.mrb[0].mxu0
      %2385 = vmatprep.mubr.f32.mxu0 0.0
      %2386 = vmatmul.mubr.f32.gmra.mrb[0].mxu0 %v2172
      %v2387 = vpop.f32.mrb[0].mxu0
      %v2388 = vadd.f32 0.0, %v2387
      %v2389 = vpop.f32.mrb[0].mxu0
      %2390 = vmatprep.mubr.f32.mxu0 0.0
      %2391 = vmatmul.mubr.f32.gmra.mrb[0].mxu0 %v2175
      %v2392 = vpop.f32.mrb[0].mxu0
      %v2393 = vadd.f32 0.0, %v2392
      %v2394 = vpop.f32.mrb[0].mxu0
      %2395 = vmatprep.mubr.f32.mxu0 0.0
      %2396 = vmatmul.mubr.f32.gmra.mrb[0].mxu0 %v2178
      %v2397 = vpop.f32.mrb[0].mxu0
      %v2398 = vadd.f32 0.0, %v2397
      %v2399 = vpop.f32.mrb[0].mxu0
      %2400 = vmatprep.mubr.f32.mxu0 0.0
      %2401 = vmatmul.mubr.f32.gmra.mrb[0].mxu0 %v2181
      %v2402 = vpop.f32.mrb[0].mxu0
      %v2403 = vadd.f32 0.0, %v2402
      %v2404 = vpop.f32.mrb[0].mxu0
      %2405 = vmatprep.mubr.f32.mxu0 0.0
      %2406 = vmatmul.mubr.f32.gmra.mrb[0].mxu0 %v2184
      %v2407 = vpop.f32.mrb[0].mxu0
      %v2408 = vadd.f32 0.0, %v2407
      %v2409 = vpop.f32.mrb[0].mxu0
      %2410 = vdwg.mxu0
      %v2411 = vadd.f32 %v1865, %v2253
      %v2412 = vadd.f32 %v1870, %v2258
      %v2413 = vadd.f32 %v1875, %v2263
      %v2414 = vadd.f32 %v1880, %v2268
      %v2415 = vadd.f32 %v1885, %v2273
      %v2416 = vadd.f32 %v1890, %v2278
      %v2417 = vadd.f32 %v1895, %v2283
      %v2418 = vadd.f32 %v1900, %v2288
      %v2419 = vadd.f32 %v1905, %v2293
      %v2420 = vadd.f32 %v1910, %v2298
      %v2421 = vadd.f32 %v1915, %v2303
      %v2422 = vadd.f32 %v1920, %v2308
      %v2423 = vadd.f32 %v1925, %v2313
      %v2424 = vadd.f32 %v1930, %v2318
      %v2425 = vadd.f32 %v1935, %v2323
      %v2426 = vadd.f32 %v1940, %v2328
      %v2427 = vadd.f32 %v1945, %v2333
      %v2428 = vadd.f32 %v1950, %v2338
      %v2429 = vadd.f32 %v1955, %v2343
      %v2430 = vadd.f32 %v1960, %v2348
      %v2431 = vadd.f32 %v1965, %v2353
      %v2432 = vadd.f32 %v1970, %v2358
      %v2433 = vadd.f32 %v1975, %v2363
      %v2434 = vadd.f32 %v1980, %v2368
      %v2435 = vadd.f32 %v1985, %v2373
      %v2436 = vadd.f32 %v1990, %v2378
      %v2437 = vadd.f32 %v1995, %v2383
      %v2438 = vadd.f32 %v2000, %v2388
      %v2439 = vadd.f32 %v2005, %v2393
      %v2440 = vadd.f32 %v2010, %v2398
      %v2441 = vadd.f32 %v2015, %v2403
      %v2442 = vadd.f32 %v2020, %v2408
      %v2443 = vld [vmem:[#allocation2 + $0x17] sm:$0xff]
      %v2444 = vld [vmem:[#allocation2 + $0x1f] sm:$0xff]
      %v2445 = vld [vmem:[#allocation2 + $0x27] sm:$0xff]
      %v2446 = vld [vmem:[#allocation2 + $0x2f] sm:$0xff]
      %v2447 = vld [vmem:[#allocation2 + $0x37] sm:$0xff]
      %v2448 = vld [vmem:[#allocation2 + $0x3f] sm:$0xff]
      %v2449 = vld [vmem:[#allocation2 + $0x47] sm:$0xff]
      %v2450 = vld [vmem:[#allocation2 + $0x4f] sm:$0xff]
      %v2451 = vld [vmem:[#allocation2 + $0x57] sm:$0xff]
      %v2452 = vld [vmem:[#allocation2 + $0x5f] sm:$0xff]
      %v2453 = vld [vmem:[#allocation2 + $0x67] sm:$0xff]
      %v2454 = vld [vmem:[#allocation2 + $0x6f] sm:$0xff]
      %v2455 = vld [vmem:[#allocation2 + $0x77] sm:$0xff]
      %v2456 = vld [vmem:[#allocation2 + $0x7f] sm:$0xff]
      %v2457 = vld [vmem:[#allocation2 + $0x87] sm:$0xff]
      %v2458 = vld [vmem:[#allocation2 + $0x8f] sm:$0xff]
      %v2459 = vld [vmem:[#allocation2 + $0x97] sm:$0xff]
      %v2460 = vld [vmem:[#allocation2 + $0x9f] sm:$0xff]
      %v2461 = vld [vmem:[#allocation2 + $0xa7] sm:$0xff]
      %v2462 = vld [vmem:[#allocation2 + $0xaf] sm:$0xff]
      %v2463 = vld [vmem:[#allocation2 + $0xb7] sm:$0xff]
      %v2464 = vld [vmem:[#allocation2 + $0xbf] sm:$0xff]
      %v2465 = vld [vmem:[#allocation2 + $0xc7] sm:$0xff]
      %v2466 = vld [vmem:[#allocation2 + $0xcf] sm:$0xff]
      %v2467 = vld [vmem:[#allocation2 + $0xd7] sm:$0xff]
      %v2468 = vld [vmem:[#allocation2 + $0xdf] sm:$0xff]
      %v2469 = vld [vmem:[#allocation2 + $0xe7] sm:$0xff]
      %v2470 = vld [vmem:[#allocation2 + $0xef] sm:$0xff]
      %v2471 = vld [vmem:[#allocation2 + $0xf7] sm:$0xff]
      %v2472 = vld [vmem:[#allocation2 + $0xff] sm:$0xff]
      %v2473 = vld [vmem:[#allocation2 + $0x107] sm:$0xff]
      %v2474 = vld [vmem:[#allocation2 + $0x10f] sm:$0xff]
      %v2475 = vsel %vm1216, %v2443, 0.0
      %v2476 = vsel %vm1217, %v2444, 0.0
      %v2477 = vsel %vm1218, %v2445, 0.0
      %v2478 = vsel %vm1219, %v2446, 0.0
      %v2479 = vsel %vm1220, %v2447, 0.0
      %v2480 = vsel %vm1221, %v2448, 0.0
      %v2481 = vsel %vm1222, %v2449, 0.0
      %v2482 = vsel %vm1223, %v2450, 0.0
      %v2483 = vsel %vm1224, %v2451, 0.0
      %v2484 = vsel %vm1225, %v2452, 0.0
      %v2485 = vsel %vm1226, %v2453, 0.0
      %v2486 = vsel %vm1227, %v2454, 0.0
      %v2487 = vsel %vm1228, %v2455, 0.0
      %v2488 = vsel %vm1229, %v2456, 0.0
      %v2489 = vsel %vm1230, %v2457, 0.0
      %v2490 = vsel %vm1231, %v2458, 0.0
      %v2491 = vsel %vm1232, %v2459, 0.0
      %v2492 = vsel %vm1233, %v2460, 0.0
      %v2493 = vsel %vm1234, %v2461, 0.0
      %v2494 = vsel %vm1235, %v2462, 0.0
      %v2495 = vsel %vm1236, %v2463, 0.0
      %v2496 = vsel %vm1237, %v2464, 0.0
      %v2497 = vsel %vm1238, %v2465, 0.0
      %v2498 = vsel %vm1239, %v2466, 0.0
      %v2499 = vsel %vm1240, %v2467, 0.0
      %v2500 = vsel %vm1241, %v2468, 0.0
      %v2501 = vsel %vm1242, %v2469, 0.0
      %v2502 = vsel %vm1243, %v2470, 0.0
      %v2503 = vsel %vm1244, %v2471, 0.0
      %v2504 = vsel %vm1245, %v2472, 0.0
      %v2505 = vsel %vm1246, %v2473, 0.0
      %v2506 = vsel %vm1247, %v2474, 0.0
      %s2507 = scalar_lea.vmem %s5, 48
      %v2508 = vld [vmem:[%s2507] sm:$0xff]
      %v2509 = vld [vmem:[%s2507 + $0x8] sm:$0xff]
      %v2511 = vsel %vm760, %v2475, 0
      %v2514 = vsel %vm760, %v2476, 0
      %v2517 = vsel %vm760, %v2477, 0
      %v2520 = vsel %vm760, %v2478, 0
      %v2523 = vsel %vm760, %v2479, 0
      %v2526 = vsel %vm760, %v2480, 0
      %v2529 = vsel %vm760, %v2481, 0
      %v2532 = vsel %vm760, %v2482, 0
      %v2535 = vsel %vm760, %v2483, 0
      %v2538 = vsel %vm760, %v2484, 0
      %v2541 = vsel %vm760, %v2485, 0
      %v2544 = vsel %vm760, %v2486, 0
      %v2547 = vsel %vm760, %v2487, 0
      %v2550 = vsel %vm760, %v2488, 0
      %v2553 = vsel %vm760, %v2489, 0
      %v2556 = vsel %vm760, %v2490, 0
      %v2559 = vsel %vm760, %v2491, 0
      %v2562 = vsel %vm760, %v2492, 0
      %v2565 = vsel %vm760, %v2493, 0
      %v2568 = vsel %vm760, %v2494, 0
      %v2571 = vsel %vm760, %v2495, 0
      %v2574 = vsel %vm760, %v2496, 0
      %v2577 = vsel %vm760, %v2497, 0
      %v2580 = vsel %vm760, %v2498, 0
      %v2583 = vsel %vm760, %v2499, 0
      %v2586 = vsel %vm760, %v2500, 0
      %v2589 = vsel %vm760, %v2501, 0
      %v2592 = vsel %vm760, %v2502, 0
      %v2595 = vsel %vm760, %v2503, 0
      %v2598 = vsel %vm760, %v2504, 0
      %v2601 = vsel %vm760, %v2505, 0
      %v2604 = vsel %vm760, %v2506, 0
      %2606 = vmatprep.subr.mxu0 0.0
      %2607 = vmatpush1.msra.mxu0 %v2508
      %2608 = vmatprep.subr.mxu0 0.0
      %2609 = vmatpush1.msra.mxu0 %v2509
      %2610 = vmatprep.subr.mxu0 0.0
      %2611 = vmatpush1.msra.mxu0 0.0
      %2612 = vmatprep.subr.mxu0 0.0
      %2613 = vmatpush1.msra.mxu0 0.0
      %2614 = vmatprep.subr.mxu0 0.0
      %2615 = vmatpush1.msra.mxu0 0.0
      %2616 = vmatprep.subr.mxu0 0.0
      %2617 = vmatpush1.msra.mxu0 0.0
      %2618 = vmatprep.subr.mxu0 0.0
      %2619 = vmatpush1.msra.mxu0 0.0
      %2620 = vmatprep.subr.mxu0 0.0
      %2621 = vmatpush1.msra.mxu0 0.0
      %2622 = vmatprep.subr.mxu0 0.0
      %2623 = vmatpush1.msra.mxu0 0.0
      %2624 = vmatprep.subr.mxu0 0.0
      %2625 = vmatpush1.msra.mxu0 0.0
      %2626 = vmatprep.subr.mxu0 0.0
      %2627 = vmatpush1.msra.mxu0 0.0
      %2628 = vmatprep.subr.mxu0 0.0
      %2629 = vmatpush1.msra.mxu0 0.0
      %2630 = vmatprep.subr.mxu0 0.0
      %2631 = vmatpush1.msra.mxu0 0.0
      %2632 = vmatprep.subr.mxu0 0.0
      %2633 = vmatpush1.msra.mxu0 0.0
      %2634 = vmatprep.subr.mxu0 0.0
      %2635 = vmatpush1.msra.mxu0 0.0
      %2636 = vmatprep.subr.mxu0 0.0
      %2637 = vmatpush1.msra.mxu0 0.0
      %2638 = vmatprep.subr.mxu0 0.0
      %2639 = vmatpush1.msra.mxu0 0.0
      %2640 = vmatprep.subr.mxu0 0.0
      %2641 = vmatpush1.msra.mxu0 0.0
      %2642 = vmatprep.subr.mxu0 0.0
      %2643 = vmatpush1.msra.mxu0 0.0
      %2644 = vmatprep.subr.mxu0 0.0
      %2645 = vmatpush1.msra.mxu0 0.0
      %2646 = vmatprep.subr.mxu0 0.0
      %2647 = vmatpush1.msra.mxu0 0.0
      %2648 = vmatprep.subr.mxu0 0.0
      %2649 = vmatpush1.msra.mxu0 0.0
      %2650 = vmatprep.subr.mxu0 0.0
      %2651 = vmatpush1.msra.mxu0 0.0
      %2652 = vmatprep.subr.mxu0 0.0
      %2653 = vmatpush1.msra.mxu0 0.0
      %2654 = vmatprep.subr.mxu0 0.0
      %2655 = vmatpush1.msra.mxu0 0.0
      %2656 = vmatprep.subr.mxu0 0.0
      %2657 = vmatpush1.msra.mxu0 0.0
      %2658 = vmatprep.subr.mxu0 0.0
      %2659 = vmatpush1.msra.mxu0 0.0
      %2660 = vmatprep.subr.mxu0 0.0
      %2661 = vmatpush1.msra.mxu0 0.0
      %2662 = vmatprep.subr.mxu0 0.0
      %2663 = vmatpush1.msra.mxu0 0.0
      %2664 = vmatprep.subr.mxu0 0.0
      %2665 = vmatpush1.msra.mxu0 0.0
      %2666 = vmatprep.subr.mxu0 0.0
      %2667 = vmatpush1.msra.mxu0 0.0
      %2668 = vmatprep.subr.mxu0 0.0
      %2669 = vmatpush1.msra.mxu0 0.0
      %2670 = vmatprep.mubr.f32.mxu0 0.0
      %2671 = vmatmul.mubr.f32.gmra.mrb[0].mxu0 %v2511
      %v2672 = vpop.f32.mrb[0].mxu0
      %v2673 = vadd.f32 0.0, %v2672
      %v2674 = vpop.f32.mrb[0].mxu0
      %2675 = vmatprep.mubr.f32.mxu0 0.0
      %2676 = vmatmul.mubr.f32.gmra.mrb[0].mxu0 %v2514
      %v2677 = vpop.f32.mrb[0].mxu0
      %v2678 = vadd.f32 0.0, %v2677
      %v2679 = vpop.f32.mrb[0].mxu0
      %2680 = vmatprep.mubr.f32.mxu0 0.0
      %2681 = vmatmul.mubr.f32.gmra.mrb[0].mxu0 %v2517
      %v2682 = vpop.f32.mrb[0].mxu0
      %v2683 = vadd.f32 0.0, %v2682
      %v2684 = vpop.f32.mrb[0].mxu0
      %2685 = vmatprep.mubr.f32.mxu0 0.0
      %2686 = vmatmul.mubr.f32.gmra.mrb[0].mxu0 %v2520
      %v2687 = vpop.f32.mrb[0].mxu0
      %v2688 = vadd.f32 0.0, %v2687
      %v2689 = vpop.f32.mrb[0].mxu0
      %2690 = vmatprep.mubr.f32.mxu0 0.0
      %2691 = vmatmul.mubr.f32.gmra.mrb[0].mxu0 %v2523
      %v2692 = vpop.f32.mrb[0].mxu0
      %v2693 = vadd.f32 0.0, %v2692
      %v2694 = vpop.f32.mrb[0].mxu0
      %2695 = vmatprep.mubr.f32.mxu0 0.0
      %2696 = vmatmul.mubr.f32.gmra.mrb[0].mxu0 %v2526
      %v2697 = vpop.f32.mrb[0].mxu0
      %v2698 = vadd.f32 0.0, %v2697
      %v2699 = vpop.f32.mrb[0].mxu0
      %2700 = vmatprep.mubr.f32.mxu0 0.0
      %2701 = vmatmul.mubr.f32.gmra.mrb[0].mxu0 %v2529
      %v2702 = vpop.f32.mrb[0].mxu0
      %v2703 = vadd.f32 0.0, %v2702
      %v2704 = vpop.f32.mrb[0].mxu0
      %2705 = vmatprep.mubr.f32.mxu0 0.0
      %2706 = vmatmul.mubr.f32.gmra.mrb[0].mxu0 %v2532
      %v2707 = vpop.f32.mrb[0].mxu0
      %v2708 = vadd.f32 0.0, %v2707
      %v2709 = vpop.f32.mrb[0].mxu0
      %2710 = vmatprep.mubr.f32.mxu0 0.0
      %2711 = vmatmul.mubr.f32.gmra.mrb[0].mxu0 %v2535
      %v2712 = vpop.f32.mrb[0].mxu0
      %v2713 = vadd.f32 0.0, %v2712
      %v2714 = vpop.f32.mrb[0].mxu0
      %2715 = vmatprep.mubr.f32.mxu0 0.0
      %2716 = vmatmul.mubr.f32.gmra.mrb[0].mxu0 %v2538
      %v2717 = vpop.f32.mrb[0].mxu0
      %v2718 = vadd.f32 0.0, %v2717
      %v2719 = vpop.f32.mrb[0].mxu0
      %2720 = vmatprep.mubr.f32.mxu0 0.0
      %2721 = vmatmul.mubr.f32.gmra.mrb[0].mxu0 %v2541
      %v2722 = vpop.f32.mrb[0].mxu0
      %v2723 = vadd.f32 0.0, %v2722
      %v2724 = vpop.f32.mrb[0].mxu0
      %2725 = vmatprep.mubr.f32.mxu0 0.0
      %2726 = vmatmul.mubr.f32.gmra.mrb[0].mxu0 %v2544
      %v2727 = vpop.f32.mrb[0].mxu0
      %v2728 = vadd.f32 0.0, %v2727
      %v2729 = vpop.f32.mrb[0].mxu0
      %2730 = vmatprep.mubr.f32.mxu0 0.0
      %2731 = vmatmul.mubr.f32.gmra.mrb[0].mxu0 %v2547
      %v2732 = vpop.f32.mrb[0].mxu0
      %v2733 = vadd.f32 0.0, %v2732
      %v2734 = vpop.f32.mrb[0].mxu0
      %2735 = vmatprep.mubr.f32.mxu0 0.0
      %2736 = vmatmul.mubr.f32.gmra.mrb[0].mxu0 %v2550
      %v2737 = vpop.f32.mrb[0].mxu0
      %v2738 = vadd.f32 0.0, %v2737
      %v2739 = vpop.f32.mrb[0].mxu0
      %2740 = vmatprep.mubr.f32.mxu0 0.0
      %2741 = vmatmul.mubr.f32.gmra.mrb[0].mxu0 %v2553
      %v2742 = vpop.f32.mrb[0].mxu0
      %v2743 = vadd.f32 0.0, %v2742
      %v2744 = vpop.f32.mrb[0].mxu0
      %2745 = vmatprep.mubr.f32.mxu0 0.0
      %2746 = vmatmul.mubr.f32.gmra.mrb[0].mxu0 %v2556
      %v2747 = vpop.f32.mrb[0].mxu0
      %v2748 = vadd.f32 0.0, %v2747
      %v2749 = vpop.f32.mrb[0].mxu0
      %2750 = vmatprep.mubr.f32.mxu0 0.0
      %2751 = vmatmul.mubr.f32.gmra.mrb[0].mxu0 %v2559
      %v2752 = vpop.f32.mrb[0].mxu0
      %v2753 = vadd.f32 0.0, %v2752
      %v2754 = vpop.f32.mrb[0].mxu0
      %2755 = vmatprep.mubr.f32.mxu0 0.0
      %2756 = vmatmul.mubr.f32.gmra.mrb[0].mxu0 %v2562
      %v2757 = vpop.f32.mrb[0].mxu0
      %v2758 = vadd.f32 0.0, %v2757
      %v2759 = vpop.f32.mrb[0].mxu0
      %2760 = vmatprep.mubr.f32.mxu0 0.0
      %2761 = vmatmul.mubr.f32.gmra.mrb[0].mxu0 %v2565
      %v2762 = vpop.f32.mrb[0].mxu0
      %v2763 = vadd.f32 0.0, %v2762
      %v2764 = vpop.f32.mrb[0].mxu0
      %2765 = vmatprep.mubr.f32.mxu0 0.0
      %2766 = vmatmul.mubr.f32.gmra.mrb[0].mxu0 %v2568
      %v2767 = vpop.f32.mrb[0].mxu0
      %v2768 = vadd.f32 0.0, %v2767
      %v2769 = vpop.f32.mrb[0].mxu0
      %2770 = vmatprep.mubr.f32.mxu0 0.0
      %2771 = vmatmul.mubr.f32.gmra.mrb[0].mxu0 %v2571
      %v2772 = vpop.f32.mrb[0].mxu0
      %v2773 = vadd.f32 0.0, %v2772
      %v2774 = vpop.f32.mrb[0].mxu0
      %2775 = vmatprep.mubr.f32.mxu0 0.0
      %2776 = vmatmul.mubr.f32.gmra.mrb[0].mxu0 %v2574
      %v2777 = vpop.f32.mrb[0].mxu0
      %v2778 = vadd.f32 0.0, %v2777
      %v2779 = vpop.f32.mrb[0].mxu0
      %2780 = vmatprep.mubr.f32.mxu0 0.0
      %2781 = vmatmul.mubr.f32.gmra.mrb[0].mxu0 %v2577
      %v2782 = vpop.f32.mrb[0].mxu0
      %v2783 = vadd.f32 0.0, %v2782
      %v2784 = vpop.f32.mrb[0].mxu0
      %2785 = vmatprep.mubr.f32.mxu0 0.0
      %2786 = vmatmul.mubr.f32.gmra.mrb[0].mxu0 %v2580
      %v2787 = vpop.f32.mrb[0].mxu0
      %v2788 = vadd.f32 0.0, %v2787
      %v2789 = vpop.f32.mrb[0].mxu0
      %2790 = vmatprep.mubr.f32.mxu0 0.0
      %2791 = vmatmul.mubr.f32.gmra.mrb[0].mxu0 %v2583
      %v2792 = vpop.f32.mrb[0].mxu0
      %v2793 = vadd.f32 0.0, %v2792
      %v2794 = vpop.f32.mrb[0].mxu0
      %2795 = vmatprep.mubr.f32.mxu0 0.0
      %2796 = vmatmul.mubr.f32.gmra.mrb[0].mxu0 %v2586
      %v2797 = vpop.f32.mrb[0].mxu0
      %v2798 = vadd.f32 0.0, %v2797
      %v2799 = vpop.f32.mrb[0].mxu0
      %2800 = vmatprep.mubr.f32.mxu0 0.0
      %2801 = vmatmul.mubr.f32.gmra.mrb[0].mxu0 %v2589
      %v2802 = vpop.f32.mrb[0].mxu0
      %v2803 = vadd.f32 0.0, %v2802
      %v2804 = vpop.f32.mrb[0].mxu0
      %2805 = vmatprep.mubr.f32.mxu0 0.0
      %2806 = vmatmul.mubr.f32.gmra.mrb[0].mxu0 %v2592
      %v2807 = vpop.f32.mrb[0].mxu0
      %v2808 = vadd.f32 0.0, %v2807
      %v2809 = vpop.f32.mrb[0].mxu0
      %2810 = vmatprep.mubr.f32.mxu0 0.0
      %2811 = vmatmul.mubr.f32.gmra.mrb[0].mxu0 %v2595
      %v2812 = vpop.f32.mrb[0].mxu0
      %v2813 = vadd.f32 0.0, %v2812
      %v2814 = vpop.f32.mrb[0].mxu0
      %2815 = vmatprep.mubr.f32.mxu0 0.0
      %2816 = vmatmul.mubr.f32.gmra.mrb[0].mxu0 %v2598
      %v2817 = vpop.f32.mrb[0].mxu0
      %v2818 = vadd.f32 0.0, %v2817
      %v2819 = vpop.f32.mrb[0].mxu0
      %2820 = vmatprep.mubr.f32.mxu0 0.0
      %2821 = vmatmul.mubr.f32.gmra.mrb[0].mxu0 %v2601
      %v2822 = vpop.f32.mrb[0].mxu0
      %v2823 = vadd.f32 0.0, %v2822
      %v2824 = vpop.f32.mrb[0].mxu0
      %2825 = vmatprep.mubr.f32.mxu0 0.0
      %2826 = vmatmul.mubr.f32.gmra.mrb[0].mxu0 %v2604
      %v2827 = vpop.f32.mrb[0].mxu0
      %v2828 = vadd.f32 0.0, %v2827
      %v2829 = vpop.f32.mrb[0].mxu0
      %2830 = vdwg.mxu0
      %v2831 = vadd.f32 %v2411, %v2673
      %v2832 = vadd.f32 %v2412, %v2678
      %v2833 = vadd.f32 %v2413, %v2683
      %v2834 = vadd.f32 %v2414, %v2688
      %v2835 = vadd.f32 %v2415, %v2693
      %v2836 = vadd.f32 %v2416, %v2698
      %v2837 = vadd.f32 %v2417, %v2703
      %v2838 = vadd.f32 %v2418, %v2708
      %v2839 = vadd.f32 %v2419, %v2713
      %v2840 = vadd.f32 %v2420, %v2718
      %v2841 = vadd.f32 %v2421, %v2723
      %v2842 = vadd.f32 %v2422, %v2728
      %v2843 = vadd.f32 %v2423, %v2733
      %v2844 = vadd.f32 %v2424, %v2738
      %v2845 = vadd.f32 %v2425, %v2743
      %v2846 = vadd.f32 %v2426, %v2748
      %v2847 = vadd.f32 %v2427, %v2753
      %v2848 = vadd.f32 %v2428, %v2758
      %v2849 = vadd.f32 %v2429, %v2763
      %v2850 = vadd.f32 %v2430, %v2768
      %v2851 = vadd.f32 %v2431, %v2773
      %v2852 = vadd.f32 %v2432, %v2778
      %v2853 = vadd.f32 %v2433, %v2783
      %v2854 = vadd.f32 %v2434, %v2788
      %v2855 = vadd.f32 %v2435, %v2793
      %v2856 = vadd.f32 %v2436, %v2798
      %v2857 = vadd.f32 %v2437, %v2803
      %v2858 = vadd.f32 %v2438, %v2808
      %v2859 = vadd.f32 %v2439, %v2813
      %v2860 = vadd.f32 %v2440, %v2818
      %v2861 = vadd.f32 %v2441, %v2823
      %v2862 = vadd.f32 %v2442, %v2828
      %v2863 = vld [vmem:[#allocation2 + $0x18] sm:$0xff]
      %v2864 = vld [vmem:[#allocation2 + $0x20] sm:$0xff]
      %v2865 = vld [vmem:[#allocation2 + $0x28] sm:$0xff]
      %v2866 = vld [vmem:[#allocation2 + $0x30] sm:$0xff]
      %v2867 = vld [vmem:[#allocation2 + $0x38] sm:$0xff]
      %v2868 = vld [vmem:[#allocation2 + $0x40] sm:$0xff]
      %v2869 = vld [vmem:[#allocation2 + $0x48] sm:$0xff]
      %v2870 = vld [vmem:[#allocation2 + $0x50] sm:$0xff]
      %v2871 = vld [vmem:[#allocation2 + $0x58] sm:$0xff]
      %v2872 = vld [vmem:[#allocation2 + $0x60] sm:$0xff]
      %v2873 = vld [vmem:[#allocation2 + $0x68] sm:$0xff]
      %v2874 = vld [vmem:[#allocation2 + $0x70] sm:$0xff]
      %v2875 = vld [vmem:[#allocation2 + $0x78] sm:$0xff]
      %v2876 = vld [vmem:[#allocation2 + $0x80] sm:$0xff]
      %v2877 = vld [vmem:[#allocation2 + $0x88] sm:$0xff]
      %v2878 = vld [vmem:[#allocation2 + $0x90] sm:$0xff]
      %v2879 = vld [vmem:[#allocation2 + $0x98] sm:$0xff]
      %v2880 = vld [vmem:[#allocation2 + $0xa0] sm:$0xff]
      %v2881 = vld [vmem:[#allocation2 + $0xa8] sm:$0xff]
      %v2882 = vld [vmem:[#allocation2 + $0xb0] sm:$0xff]
      %v2883 = vld [vmem:[#allocation2 + $0xb8] sm:$0xff]
      %v2884 = vld [vmem:[#allocation2 + $0xc0] sm:$0xff]
      %v2885 = vld [vmem:[#allocation2 + $0xc8] sm:$0xff]
      %v2886 = vld [vmem:[#allocation2 + $0xd0] sm:$0xff]
      %v2887 = vld [vmem:[#allocation2 + $0xd8] sm:$0xff]
      %v2888 = vld [vmem:[#allocation2 + $0xe0] sm:$0xff]
      %v2889 = vld [vmem:[#allocation2 + $0xe8] sm:$0xff]
      %v2890 = vld [vmem:[#allocation2 + $0xf0] sm:$0xff]
      %v2891 = vld [vmem:[#allocation2 + $0xf8] sm:$0xff]
      %v2892 = vld [vmem:[#allocation2 + $0x100] sm:$0xff]
      %v2893 = vld [vmem:[#allocation2 + $0x108] sm:$0xff]
      %v2894 = vld [vmem:[#allocation2 + $0x110] sm:$0xff]
      %s2895 = scalar_lea.vmem %s5, 64
      %v2896 = vld [vmem:[%s2895] sm:$0xff]
      %v2897 = vld [vmem:[%s2895 + $0x8] sm:$0xff]
      %v2899 = vsel %vm760, %v2863, 0
      %v2902 = vsel %vm760, %v2864, 0
      %v2905 = vsel %vm760, %v2865, 0
      %v2908 = vsel %vm760, %v2866, 0
      %v2911 = vsel %vm760, %v2867, 0
      %v2914 = vsel %vm760, %v2868, 0
      %v2917 = vsel %vm760, %v2869, 0
      %v2920 = vsel %vm760, %v2870, 0
      %v2923 = vsel %vm760, %v2871, 0
      %v2926 = vsel %vm760, %v2872, 0
      %v2929 = vsel %vm760, %v2873, 0
      %v2932 = vsel %vm760, %v2874, 0
      %v2935 = vsel %vm760, %v2875, 0
      %v2938 = vsel %vm760, %v2876, 0
      %v2941 = vsel %vm760, %v2877, 0
      %v2944 = vsel %vm760, %v2878, 0
      %v2947 = vsel %vm760, %v2879, 0
      %v2950 = vsel %vm760, %v2880, 0
      %v2953 = vsel %vm760, %v2881, 0
      %v2956 = vsel %vm760, %v2882, 0
      %v2959 = vsel %vm760, %v2883, 0
      %v2962 = vsel %vm760, %v2884, 0
      %v2965 = vsel %vm760, %v2885, 0
      %v2968 = vsel %vm760, %v2886, 0
      %v2971 = vsel %vm760, %v2887, 0
      %v2974 = vsel %vm760, %v2888, 0
      %v2977 = vsel %vm760, %v2889, 0
      %v2980 = vsel %vm760, %v2890, 0
      %v2983 = vsel %vm760, %v2891, 0
      %v2986 = vsel %vm760, %v2892, 0
      %v2989 = vsel %vm760, %v2893, 0
      %v2992 = vsel %vm760, %v2894, 0
      %2994 = vmatprep.subr.mxu0 0.0
      %2995 = vmatpush1.msra.mxu0 %v2896
      %2996 = vmatprep.subr.mxu0 0.0
      %2997 = vmatpush1.msra.mxu0 %v2897
      %2998 = vmatprep.subr.mxu0 0.0
      %2999 = vmatpush1.msra.mxu0 0.0
      %3000 = vmatprep.subr.mxu0 0.0
      %3001 = vmatpush1.msra.mxu0 0.0
      %3002 = vmatprep.subr.mxu0 0.0
      %3003 = vmatpush1.msra.mxu0 0.0
      %3004 = vmatprep.subr.mxu0 0.0
      %3005 = vmatpush1.msra.mxu0 0.0
      %3006 = vmatprep.subr.mxu0 0.0
      %3007 = vmatpush1.msra.mxu0 0.0
      %3008 = vmatprep.subr.mxu0 0.0
      %3009 = vmatpush1.msra.mxu0 0.0
      %3010 = vmatprep.subr.mxu0 0.0
      %3011 = vmatpush1.msra.mxu0 0.0
      %3012 = vmatprep.subr.mxu0 0.0
      %3013 = vmatpush1.msra.mxu0 0.0
      %3014 = vmatprep.subr.mxu0 0.0
      %3015 = vmatpush1.msra.mxu0 0.0
      %3016 = vmatprep.subr.mxu0 0.0
      %3017 = vmatpush1.msra.mxu0 0.0
      %3018 = vmatprep.subr.mxu0 0.0
      %3019 = vmatpush1.msra.mxu0 0.0
      %3020 = vmatprep.subr.mxu0 0.0
      %3021 = vmatpush1.msra.mxu0 0.0
      %3022 = vmatprep.subr.mxu0 0.0
      %3023 = vmatpush1.msra.mxu0 0.0
      %3024 = vmatprep.subr.mxu0 0.0
      %3025 = vmatpush1.msra.mxu0 0.0
      %3026 = vmatprep.subr.mxu0 0.0
      %3027 = vmatpush1.msra.mxu0 0.0
      %3028 = vmatprep.subr.mxu0 0.0
      %3029 = vmatpush1.msra.mxu0 0.0
      %3030 = vmatprep.subr.mxu0 0.0
      %3031 = vmatpush1.msra.mxu0 0.0
      %3032 = vmatprep.subr.mxu0 0.0
      %3033 = vmatpush1.msra.mxu0 0.0
      %3034 = vmatprep.subr.mxu0 0.0
      %3035 = vmatpush1.msra.mxu0 0.0
      %3036 = vmatprep.subr.mxu0 0.0
      %3037 = vmatpush1.msra.mxu0 0.0
      %3038 = vmatprep.subr.mxu0 0.0
      %3039 = vmatpush1.msra.mxu0 0.0
      %3040 = vmatprep.subr.mxu0 0.0
      %3041 = vmatpush1.msra.mxu0 0.0
      %3042 = vmatprep.subr.mxu0 0.0
      %3043 = vmatpush1.msra.mxu0 0.0
      %3044 = vmatprep.subr.mxu0 0.0
      %3045 = vmatpush1.msra.mxu0 0.0
      %3046 = vmatprep.subr.mxu0 0.0
      %3047 = vmatpush1.msra.mxu0 0.0
      %3048 = vmatprep.subr.mxu0 0.0
      %3049 = vmatpush1.msra.mxu0 0.0
      %3050 = vmatprep.subr.mxu0 0.0
      %3051 = vmatpush1.msra.mxu0 0.0
      %3052 = vmatprep.subr.mxu0 0.0
      %3053 = vmatpush1.msra.mxu0 0.0
      %3054 = vmatprep.subr.mxu0 0.0
      %3055 = vmatpush1.msra.mxu0 0.0
      %3056 = vmatprep.subr.mxu0 0.0
      %3057 = vmatpush1.msra.mxu0 0.0
      %3058 = vmatprep.mubr.f32.mxu0 0.0
      %3059 = vmatmul.mubr.f32.gmra.mrb[0].mxu0 %v2899
      %v3060 = vpop.f32.mrb[0].mxu0
      %v3061 = vadd.f32 0.0, %v3060
      %v3062 = vpop.f32.mrb[0].mxu0
      %3063 = vmatprep.mubr.f32.mxu0 0.0
      %3064 = vmatmul.mubr.f32.gmra.mrb[0].mxu0 %v2902
      %v3065 = vpop.f32.mrb[0].mxu0
      %v3066 = vadd.f32 0.0, %v3065
      %v3067 = vpop.f32.mrb[0].mxu0
      %3068 = vmatprep.mubr.f32.mxu0 0.0
      %3069 = vmatmul.mubr.f32.gmra.mrb[0].mxu0 %v2905
      %v3070 = vpop.f32.mrb[0].mxu0
      %v3071 = vadd.f32 0.0, %v3070
      %v3072 = vpop.f32.mrb[0].mxu0
      %3073 = vmatprep.mubr.f32.mxu0 0.0
      %3074 = vmatmul.mubr.f32.gmra.mrb[0].mxu0 %v2908
      %v3075 = vpop.f32.mrb[0].mxu0
      %v3076 = vadd.f32 0.0, %v3075
      %v3077 = vpop.f32.mrb[0].mxu0
      %3078 = vmatprep.mubr.f32.mxu0 0.0
      %3079 = vmatmul.mubr.f32.gmra.mrb[0].mxu0 %v2911
      %v3080 = vpop.f32.mrb[0].mxu0
      %v3081 = vadd.f32 0.0, %v3080
      %v3082 = vpop.f32.mrb[0].mxu0
      %3083 = vmatprep.mubr.f32.mxu0 0.0
      %3084 = vmatmul.mubr.f32.gmra.mrb[0].mxu0 %v2914
      %v3085 = vpop.f32.mrb[0].mxu0
      %v3086 = vadd.f32 0.0, %v3085
      %v3087 = vpop.f32.mrb[0].mxu0
      %3088 = vmatprep.mubr.f32.mxu0 0.0
      %3089 = vmatmul.mubr.f32.gmra.mrb[0].mxu0 %v2917
      %v3090 = vpop.f32.mrb[0].mxu0
      %v3091 = vadd.f32 0.0, %v3090
      %v3092 = vpop.f32.mrb[0].mxu0
      %3093 = vmatprep.mubr.f32.mxu0 0.0
      %3094 = vmatmul.mubr.f32.gmra.mrb[0].mxu0 %v2920
      %v3095 = vpop.f32.mrb[0].mxu0
      %v3096 = vadd.f32 0.0, %v3095
      %v3097 = vpop.f32.mrb[0].mxu0
      %3098 = vmatprep.mubr.f32.mxu0 0.0
      %3099 = vmatmul.mubr.f32.gmra.mrb[0].mxu0 %v2923
      %v3100 = vpop.f32.mrb[0].mxu0
      %v3101 = vadd.f32 0.0, %v3100
      %v3102 = vpop.f32.mrb[0].mxu0
      %3103 = vmatprep.mubr.f32.mxu0 0.0
      %3104 = vmatmul.mubr.f32.gmra.mrb[0].mxu0 %v2926
      %v3105 = vpop.f32.mrb[0].mxu0
      %v3106 = vadd.f32 0.0, %v3105
      %v3107 = vpop.f32.mrb[0].mxu0
      %3108 = vmatprep.mubr.f32.mxu0 0.0
      %3109 = vmatmul.mubr.f32.gmra.mrb[0].mxu0 %v2929
      %v3110 = vpop.f32.mrb[0].mxu0
      %v3111 = vadd.f32 0.0, %v3110
      %v3112 = vpop.f32.mrb[0].mxu0
      %3113 = vmatprep.mubr.f32.mxu0 0.0
      %3114 = vmatmul.mubr.f32.gmra.mrb[0].mxu0 %v2932
      %v3115 = vpop.f32.mrb[0].mxu0
      %v3116 = vadd.f32 0.0, %v3115
      %v3117 = vpop.f32.mrb[0].mxu0
      %3118 = vmatprep.mubr.f32.mxu0 0.0
      %3119 = vmatmul.mubr.f32.gmra.mrb[0].mxu0 %v2935
      %v3120 = vpop.f32.mrb[0].mxu0
      %v3121 = vadd.f32 0.0, %v3120
      %v3122 = vpop.f32.mrb[0].mxu0
      %3123 = vmatprep.mubr.f32.mxu0 0.0
      %3124 = vmatmul.mubr.f32.gmra.mrb[0].mxu0 %v2938
      %v3125 = vpop.f32.mrb[0].mxu0
      %v3126 = vadd.f32 0.0, %v3125
      %v3127 = vpop.f32.mrb[0].mxu0
      %3128 = vmatprep.mubr.f32.mxu0 0.0
      %3129 = vmatmul.mubr.f32.gmra.mrb[0].mxu0 %v2941
      %v3130 = vpop.f32.mrb[0].mxu0
      %v3131 = vadd.f32 0.0, %v3130
      %v3132 = vpop.f32.mrb[0].mxu0
      %3133 = vmatprep.mubr.f32.mxu0 0.0
      %3134 = vmatmul.mubr.f32.gmra.mrb[0].mxu0 %v2944
      %v3135 = vpop.f32.mrb[0].mxu0
      %v3136 = vadd.f32 0.0, %v3135
      %v3137 = vpop.f32.mrb[0].mxu0
      %3138 = vmatprep.mubr.f32.mxu0 0.0
      %3139 = vmatmul.mubr.f32.gmra.mrb[0].mxu0 %v2947
      %v3140 = vpop.f32.mrb[0].mxu0
      %v3141 = vadd.f32 0.0, %v3140
      %v3142 = vpop.f32.mrb[0].mxu0
      %3143 = vmatprep.mubr.f32.mxu0 0.0
      %3144 = vmatmul.mubr.f32.gmra.mrb[0].mxu0 %v2950
      %v3145 = vpop.f32.mrb[0].mxu0
      %v3146 = vadd.f32 0.0, %v3145
      %v3147 = vpop.f32.mrb[0].mxu0
      %3148 = vmatprep.mubr.f32.mxu0 0.0
      %3149 = vmatmul.mubr.f32.gmra.mrb[0].mxu0 %v2953
      %v3150 = vpop.f32.mrb[0].mxu0
      %v3151 = vadd.f32 0.0, %v3150
      %v3152 = vpop.f32.mrb[0].mxu0
      %3153 = vmatprep.mubr.f32.mxu0 0.0
      %3154 = vmatmul.mubr.f32.gmra.mrb[0].mxu0 %v2956
      %v3155 = vpop.f32.mrb[0].mxu0
      %v3156 = vadd.f32 0.0, %v3155
      %v3157 = vpop.f32.mrb[0].mxu0
      %3158 = vmatprep.mubr.f32.mxu0 0.0
      %3159 = vmatmul.mubr.f32.gmra.mrb[0].mxu0 %v2959
      %v3160 = vpop.f32.mrb[0].mxu0
      %v3161 = vadd.f32 0.0, %v3160
      %v3162 = vpop.f32.mrb[0].mxu0
      %3163 = vmatprep.mubr.f32.mxu0 0.0
      %3164 = vmatmul.mubr.f32.gmra.mrb[0].mxu0 %v2962
      %v3165 = vpop.f32.mrb[0].mxu0
      %v3166 = vadd.f32 0.0, %v3165
      %v3167 = vpop.f32.mrb[0].mxu0
      %3168 = vmatprep.mubr.f32.mxu0 0.0
      %3169 = vmatmul.mubr.f32.gmra.mrb[0].mxu0 %v2965
      %v3170 = vpop.f32.mrb[0].mxu0
      %v3171 = vadd.f32 0.0, %v3170
      %v3172 = vpop.f32.mrb[0].mxu0
      %3173 = vmatprep.mubr.f32.mxu0 0.0
      %3174 = vmatmul.mubr.f32.gmra.mrb[0].mxu0 %v2968
      %v3175 = vpop.f32.mrb[0].mxu0
      %v3176 = vadd.f32 0.0, %v3175
      %v3177 = vpop.f32.mrb[0].mxu0
      %3178 = vmatprep.mubr.f32.mxu0 0.0
      %3179 = vmatmul.mubr.f32.gmra.mrb[0].mxu0 %v2971
      %v3180 = vpop.f32.mrb[0].mxu0
      %v3181 = vadd.f32 0.0, %v3180
      %v3182 = vpop.f32.mrb[0].mxu0
      %3183 = vmatprep.mubr.f32.mxu0 0.0
      %3184 = vmatmul.mubr.f32.gmra.mrb[0].mxu0 %v2974
      %v3185 = vpop.f32.mrb[0].mxu0
      %v3186 = vadd.f32 0.0, %v3185
      %v3187 = vpop.f32.mrb[0].mxu0
      %3188 = vmatprep.mubr.f32.mxu0 0.0
      %3189 = vmatmul.mubr.f32.gmra.mrb[0].mxu0 %v2977
      %v3190 = vpop.f32.mrb[0].mxu0
      %v3191 = vadd.f32 0.0, %v3190
      %v3192 = vpop.f32.mrb[0].mxu0
      %3193 = vmatprep.mubr.f32.mxu0 0.0
      %3194 = vmatmul.mubr.f32.gmra.mrb[0].mxu0 %v2980
      %v3195 = vpop.f32.mrb[0].mxu0
      %v3196 = vadd.f32 0.0, %v3195
      %v3197 = vpop.f32.mrb[0].mxu0
      %3198 = vmatprep.mubr.f32.mxu0 0.0
      %3199 = vmatmul.mubr.f32.gmra.mrb[0].mxu0 %v2983
      %v3200 = vpop.f32.mrb[0].mxu0
      %v3201 = vadd.f32 0.0, %v3200
      %v3202 = vpop.f32.mrb[0].mxu0
      %3203 = vmatprep.mubr.f32.mxu0 0.0
      %3204 = vmatmul.mubr.f32.gmra.mrb[0].mxu0 %v2986
      %v3205 = vpop.f32.mrb[0].mxu0
      %v3206 = vadd.f32 0.0, %v3205
      %v3207 = vpop.f32.mrb[0].mxu0
      %3208 = vmatprep.mubr.f32.mxu0 0.0
      %3209 = vmatmul.mubr.f32.gmra.mrb[0].mxu0 %v2989
      %v3210 = vpop.f32.mrb[0].mxu0
      %v3211 = vadd.f32 0.0, %v3210
      %v3212 = vpop.f32.mrb[0].mxu0
      %3213 = vmatprep.mubr.f32.mxu0 0.0
      %3214 = vmatmul.mubr.f32.gmra.mrb[0].mxu0 %v2992
      %v3215 = vpop.f32.mrb[0].mxu0
      %v3216 = vadd.f32 0.0, %v3215
      %v3217 = vpop.f32.mrb[0].mxu0
      %3218 = vdwg.mxu0
      %v3219 = vadd.f32 %v2831, %v3061
      %v3220 = vadd.f32 %v2832, %v3066
      %v3221 = vadd.f32 %v2833, %v3071
      %v3222 = vadd.f32 %v2834, %v3076
      %v3223 = vadd.f32 %v2835, %v3081
      %v3224 = vadd.f32 %v2836, %v3086
      %v3225 = vadd.f32 %v2837, %v3091
      %v3226 = vadd.f32 %v2838, %v3096
      %v3227 = vadd.f32 %v2839, %v3101
      %v3228 = vadd.f32 %v2840, %v3106
      %v3229 = vadd.f32 %v2841, %v3111
      %v3230 = vadd.f32 %v2842, %v3116
      %v3231 = vadd.f32 %v2843, %v3121
      %v3232 = vadd.f32 %v2844, %v3126
      %v3233 = vadd.f32 %v2845, %v3131
      %v3234 = vadd.f32 %v2846, %v3136
      %v3235 = vadd.f32 %v2847, %v3141
      %v3236 = vadd.f32 %v2848, %v3146
      %v3237 = vadd.f32 %v2849, %v3151
      %v3238 = vadd.f32 %v2850, %v3156
      %v3239 = vadd.f32 %v2851, %v3161
      %v3240 = vadd.f32 %v2852, %v3166
      %v3241 = vadd.f32 %v2853, %v3171
      %v3242 = vadd.f32 %v2854, %v3176
      %v3243 = vadd.f32 %v2855, %v3181
      %v3244 = vadd.f32 %v2856, %v3186
      %v3245 = vadd.f32 %v2857, %v3191
      %v3246 = vadd.f32 %v2858, %v3196
      %v3247 = vadd.f32 %v2859, %v3201
      %v3248 = vadd.f32 %v2860, %v3206
      %v3249 = vadd.f32 %v2861, %v3211
      %v3250 = vadd.f32 %v2862, %v3216
      %v3251 = vld [vmem:[#allocation2 + $0x19] sm:$0xff]
      %v3252 = vld [vmem:[#allocation2 + $0x21] sm:$0xff]
      %v3253 = vld [vmem:[#allocation2 + $0x29] sm:$0xff]
      %v3254 = vld [vmem:[#allocation2 + $0x31] sm:$0xff]
      %v3255 = vld [vmem:[#allocation2 + $0x39] sm:$0xff]
      %v3256 = vld [vmem:[#allocation2 + $0x41] sm:$0xff]
      %v3257 = vld [vmem:[#allocation2 + $0x49] sm:$0xff]
      %v3258 = vld [vmem:[#allocation2 + $0x51] sm:$0xff]
      %v3259 = vld [vmem:[#allocation2 + $0x59] sm:$0xff]
      %v3260 = vld [vmem:[#allocation2 + $0x61] sm:$0xff]
      %v3261 = vld [vmem:[#allocation2 + $0x69] sm:$0xff]
      %v3262 = vld [vmem:[#allocation2 + $0x71] sm:$0xff]
      %v3263 = vld [vmem:[#allocation2 + $0x79] sm:$0xff]
      %v3264 = vld [vmem:[#allocation2 + $0x81] sm:$0xff]
      %v3265 = vld [vmem:[#allocation2 + $0x89] sm:$0xff]
      %v3266 = vld [vmem:[#allocation2 + $0x91] sm:$0xff]
      %v3267 = vld [vmem:[#allocation2 + $0x99] sm:$0xff]
      %v3268 = vld [vmem:[#allocation2 + $0xa1] sm:$0xff]
      %v3269 = vld [vmem:[#allocation2 + $0xa9] sm:$0xff]
      %v3270 = vld [vmem:[#allocation2 + $0xb1] sm:$0xff]
      %v3271 = vld [vmem:[#allocation2 + $0xb9] sm:$0xff]
      %v3272 = vld [vmem:[#allocation2 + $0xc1] sm:$0xff]
      %v3273 = vld [vmem:[#allocation2 + $0xc9] sm:$0xff]
      %v3274 = vld [vmem:[#allocation2 + $0xd1] sm:$0xff]
      %v3275 = vld [vmem:[#allocation2 + $0xd9] sm:$0xff]
      %v3276 = vld [vmem:[#allocation2 + $0xe1] sm:$0xff]
      %v3277 = vld [vmem:[#allocation2 + $0xe9] sm:$0xff]
      %v3278 = vld [vmem:[#allocation2 + $0xf1] sm:$0xff]
      %v3279 = vld [vmem:[#allocation2 + $0xf9] sm:$0xff]
      %v3280 = vld [vmem:[#allocation2 + $0x101] sm:$0xff]
      %v3281 = vld [vmem:[#allocation2 + $0x109] sm:$0xff]
      %v3282 = vld [vmem:[#allocation2 + $0x111] sm:$0xff]
      %v3283 = vsel %vm1248, %v3251, 0.0
      %v3284 = vsel %vm1249, %v3252, 0.0
      %v3285 = vsel %vm1250, %v3253, 0.0
      %v3286 = vsel %vm1251, %v3254, 0.0
      %v3287 = vsel %vm1252, %v3255, 0.0
      %v3288 = vsel %vm1253, %v3256, 0.0
      %v3289 = vsel %vm1254, %v3257, 0.0
      %v3290 = vsel %vm1255, %v3258, 0.0
      %v3291 = vsel %vm1256, %v3259, 0.0
      %v3292 = vsel %vm1257, %v3260, 0.0
      %v3293 = vsel %vm1258, %v3261, 0.0
      %v3294 = vsel %vm1259, %v3262, 0.0
      %v3295 = vsel %vm1260, %v3263, 0.0
      %v3296 = vsel %vm1261, %v3264, 0.0
      %v3297 = vsel %vm1262, %v3265, 0.0
      %v3298 = vsel %vm1263, %v3266, 0.0
      %v3299 = vsel %vm1264, %v3267, 0.0
      %v3300 = vsel %vm1265, %v3268, 0.0
      %v3301 = vsel %vm1266, %v3269, 0.0
      %v3302 = vsel %vm1267, %v3270, 0.0
      %v3303 = vsel %vm1268, %v3271, 0.0
      %v3304 = vsel %vm1269, %v3272, 0.0
      %v3305 = vsel %vm1270, %v3273, 0.0
      %v3306 = vsel %vm1271, %v3274, 0.0
      %v3307 = vsel %vm1272, %v3275, 0.0
      %v3308 = vsel %vm1273, %v3276, 0.0
      %v3309 = vsel %vm1274, %v3277, 0.0
      %v3310 = vsel %vm1275, %v3278, 0.0
      %v3311 = vsel %vm1276, %v3279, 0.0
      %v3312 = vsel %vm1277, %v3280, 0.0
      %v3313 = vsel %vm1278, %v3281, 0.0
      %v3314 = vsel %vm1279, %v3282, 0.0
      %s3315 = scalar_lea.vmem %s5, 80
      %v3316 = vld [vmem:[%s3315] sm:$0xff]
      %v3317 = vld [vmem:[%s3315 + $0x8] sm:$0xff]
      %v3319 = vsel %vm760, %v3283, 0
      %v3322 = vsel %vm760, %v3284, 0
      %v3325 = vsel %vm760, %v3285, 0
      %v3328 = vsel %vm760, %v3286, 0
      %v3331 = vsel %vm760, %v3287, 0
      %v3334 = vsel %vm760, %v3288, 0
      %v3337 = vsel %vm760, %v3289, 0
      %v3340 = vsel %vm760, %v3290, 0
      %v3343 = vsel %vm760, %v3291, 0
      %v3346 = vsel %vm760, %v3292, 0
      %v3349 = vsel %vm760, %v3293, 0
      %v3352 = vsel %vm760, %v3294, 0
      %v3355 = vsel %vm760, %v3295, 0
      %v3358 = vsel %vm760, %v3296, 0
      %v3361 = vsel %vm760, %v3297, 0
      %v3364 = vsel %vm760, %v3298, 0
      %v3367 = vsel %vm760, %v3299, 0
      %v3370 = vsel %vm760, %v3300, 0
      %v3373 = vsel %vm760, %v3301, 0
      %v3376 = vsel %vm760, %v3302, 0
      %v3379 = vsel %vm760, %v3303, 0
      %v3382 = vsel %vm760, %v3304, 0
      %v3385 = vsel %vm760, %v3305, 0
      %v3388 = vsel %vm760, %v3306, 0
      %v3391 = vsel %vm760, %v3307, 0
      %v3394 = vsel %vm760, %v3308, 0
      %v3397 = vsel %vm760, %v3309, 0
      %v3400 = vsel %vm760, %v3310, 0
      %v3403 = vsel %vm760, %v3311, 0
      %v3406 = vsel %vm760, %v3312, 0
      %v3409 = vsel %vm760, %v3313, 0
      %v3412 = vsel %vm760, %v3314, 0
      %3414 = vmatprep.subr.mxu0 0.0
      %3415 = vmatpush1.msra.mxu0 %v3316
      %3416 = vmatprep.subr.mxu0 0.0
      %3417 = vmatpush1.msra.mxu0 %v3317
      %3418 = vmatprep.subr.mxu0 0.0
      %3419 = vmatpush1.msra.mxu0 0.0
      %3420 = vmatprep.subr.mxu0 0.0
      %3421 = vmatpush1.msra.mxu0 0.0
      %3422 = vmatprep.subr.mxu0 0.0
      %3423 = vmatpush1.msra.mxu0 0.0
      %3424 = vmatprep.subr.mxu0 0.0
      %3425 = vmatpush1.msra.mxu0 0.0
      %3426 = vmatprep.subr.mxu0 0.0
      %3427 = vmatpush1.msra.mxu0 0.0
      %3428 = vmatprep.subr.mxu0 0.0
      %3429 = vmatpush1.msra.mxu0 0.0
      %3430 = vmatprep.subr.mxu0 0.0
      %3431 = vmatpush1.msra.mxu0 0.0
      %3432 = vmatprep.subr.mxu0 0.0
      %3433 = vmatpush1.msra.mxu0 0.0
      %3434 = vmatprep.subr.mxu0 0.0
      %3435 = vmatpush1.msra.mxu0 0.0
      %3436 = vmatprep.subr.mxu0 0.0
      %3437 = vmatpush1.msra.mxu0 0.0
      %3438 = vmatprep.subr.mxu0 0.0
      %3439 = vmatpush1.msra.mxu0 0.0
      %3440 = vmatprep.subr.mxu0 0.0
      %3441 = vmatpush1.msra.mxu0 0.0
      %3442 = vmatprep.subr.mxu0 0.0
      %3443 = vmatpush1.msra.mxu0 0.0
      %3444 = vmatprep.subr.mxu0 0.0
      %3445 = vmatpush1.msra.mxu0 0.0
      %3446 = vmatprep.subr.mxu0 0.0
      %3447 = vmatpush1.msra.mxu0 0.0
      %3448 = vmatprep.subr.mxu0 0.0
      %3449 = vmatpush1.msra.mxu0 0.0
      %3450 = vmatprep.subr.mxu0 0.0
      %3451 = vmatpush1.msra.mxu0 0.0
      %3452 = vmatprep.subr.mxu0 0.0
      %3453 = vmatpush1.msra.mxu0 0.0
      %3454 = vmatprep.subr.mxu0 0.0
      %3455 = vmatpush1.msra.mxu0 0.0
      %3456 = vmatprep.subr.mxu0 0.0
      %3457 = vmatpush1.msra.mxu0 0.0
      %3458 = vmatprep.subr.mxu0 0.0
      %3459 = vmatpush1.msra.mxu0 0.0
      %3460 = vmatprep.subr.mxu0 0.0
      %3461 = vmatpush1.msra.mxu0 0.0
      %3462 = vmatprep.subr.mxu0 0.0
      %3463 = vmatpush1.msra.mxu0 0.0
      %3464 = vmatprep.subr.mxu0 0.0
      %3465 = vmatpush1.msra.mxu0 0.0
      %3466 = vmatprep.subr.mxu0 0.0
      %3467 = vmatpush1.msra.mxu0 0.0
      %3468 = vmatprep.subr.mxu0 0.0
      %3469 = vmatpush1.msra.mxu0 0.0
      %3470 = vmatprep.subr.mxu0 0.0
      %3471 = vmatpush1.msra.mxu0 0.0
      %3472 = vmatprep.subr.mxu0 0.0
      %3473 = vmatpush1.msra.mxu0 0.0
      %3474 = vmatprep.subr.mxu0 0.0
      %3475 = vmatpush1.msra.mxu0 0.0
      %3476 = vmatprep.subr.mxu0 0.0
      %3477 = vmatpush1.msra.mxu0 0.0
      %3478 = vmatprep.mubr.f32.mxu0 0.0
      %3479 = vmatmul.mubr.f32.gmra.mrb[0].mxu0 %v3319
      %v3480 = vpop.f32.mrb[0].mxu0
      %v3481 = vadd.f32 0.0, %v3480
      %v3482 = vpop.f32.mrb[0].mxu0
      %3483 = vmatprep.mubr.f32.mxu0 0.0
      %3484 = vmatmul.mubr.f32.gmra.mrb[0].mxu0 %v3322
      %v3485 = vpop.f32.mrb[0].mxu0
      %v3486 = vadd.f32 0.0, %v3485
      %v3487 = vpop.f32.mrb[0].mxu0
      %3488 = vmatprep.mubr.f32.mxu0 0.0
      %3489 = vmatmul.mubr.f32.gmra.mrb[0].mxu0 %v3325
      %v3490 = vpop.f32.mrb[0].mxu0
      %v3491 = vadd.f32 0.0, %v3490
      %v3492 = vpop.f32.mrb[0].mxu0
      %3493 = vmatprep.mubr.f32.mxu0 0.0
      %3494 = vmatmul.mubr.f32.gmra.mrb[0].mxu0 %v3328
      %v3495 = vpop.f32.mrb[0].mxu0
      %v3496 = vadd.f32 0.0, %v3495
      %v3497 = vpop.f32.mrb[0].mxu0
      %3498 = vmatprep.mubr.f32.mxu0 0.0
      %3499 = vmatmul.mubr.f32.gmra.mrb[0].mxu0 %v3331
      %v3500 = vpop.f32.mrb[0].mxu0
      %v3501 = vadd.f32 0.0, %v3500
      %v3502 = vpop.f32.mrb[0].mxu0
      %3503 = vmatprep.mubr.f32.mxu0 0.0
      %3504 = vmatmul.mubr.f32.gmra.mrb[0].mxu0 %v3334
      %v3505 = vpop.f32.mrb[0].mxu0
      %v3506 = vadd.f32 0.0, %v3505
      %v3507 = vpop.f32.mrb[0].mxu0
      %3508 = vmatprep.mubr.f32.mxu0 0.0
      %3509 = vmatmul.mubr.f32.gmra.mrb[0].mxu0 %v3337
      %v3510 = vpop.f32.mrb[0].mxu0
      %v3511 = vadd.f32 0.0, %v3510
      %v3512 = vpop.f32.mrb[0].mxu0
      %3513 = vmatprep.mubr.f32.mxu0 0.0
      %3514 = vmatmul.mubr.f32.gmra.mrb[0].mxu0 %v3340
      %v3515 = vpop.f32.mrb[0].mxu0
      %v3516 = vadd.f32 0.0, %v3515
      %v3517 = vpop.f32.mrb[0].mxu0
      %3518 = vmatprep.mubr.f32.mxu0 0.0
      %3519 = vmatmul.mubr.f32.gmra.mrb[0].mxu0 %v3343
      %v3520 = vpop.f32.mrb[0].mxu0
      %v3521 = vadd.f32 0.0, %v3520
      %v3522 = vpop.f32.mrb[0].mxu0
      %3523 = vmatprep.mubr.f32.mxu0 0.0
      %3524 = vmatmul.mubr.f32.gmra.mrb[0].mxu0 %v3346
      %v3525 = vpop.f32.mrb[0].mxu0
      %v3526 = vadd.f32 0.0, %v3525
      %v3527 = vpop.f32.mrb[0].mxu0
      %3528 = vmatprep.mubr.f32.mxu0 0.0
      %3529 = vmatmul.mubr.f32.gmra.mrb[0].mxu0 %v3349
      %v3530 = vpop.f32.mrb[0].mxu0
      %v3531 = vadd.f32 0.0, %v3530
      %v3532 = vpop.f32.mrb[0].mxu0
      %3533 = vmatprep.mubr.f32.mxu0 0.0
      %3534 = vmatmul.mubr.f32.gmra.mrb[0].mxu0 %v3352
      %v3535 = vpop.f32.mrb[0].mxu0
      %v3536 = vadd.f32 0.0, %v3535
      %v3537 = vpop.f32.mrb[0].mxu0
      %3538 = vmatprep.mubr.f32.mxu0 0.0
      %3539 = vmatmul.mubr.f32.gmra.mrb[0].mxu0 %v3355
      %v3540 = vpop.f32.mrb[0].mxu0
      %v3541 = vadd.f32 0.0, %v3540
      %v3542 = vpop.f32.mrb[0].mxu0
      %3543 = vmatprep.mubr.f32.mxu0 0.0
      %3544 = vmatmul.mubr.f32.gmra.mrb[0].mxu0 %v3358
      %v3545 = vpop.f32.mrb[0].mxu0
      %v3546 = vadd.f32 0.0, %v3545
      %v3547 = vpop.f32.mrb[0].mxu0
      %3548 = vmatprep.mubr.f32.mxu0 0.0
      %3549 = vmatmul.mubr.f32.gmra.mrb[0].mxu0 %v3361
      %v3550 = vpop.f32.mrb[0].mxu0
      %v3551 = vadd.f32 0.0, %v3550
      %v3552 = vpop.f32.mrb[0].mxu0
      %3553 = vmatprep.mubr.f32.mxu0 0.0
      %3554 = vmatmul.mubr.f32.gmra.mrb[0].mxu0 %v3364
      %v3555 = vpop.f32.mrb[0].mxu0
      %v3556 = vadd.f32 0.0, %v3555
      %v3557 = vpop.f32.mrb[0].mxu0
      %3558 = vmatprep.mubr.f32.mxu0 0.0
      %3559 = vmatmul.mubr.f32.gmra.mrb[0].mxu0 %v3367
      %v3560 = vpop.f32.mrb[0].mxu0
      %v3561 = vadd.f32 0.0, %v3560
      %v3562 = vpop.f32.mrb[0].mxu0
      %3563 = vmatprep.mubr.f32.mxu0 0.0
      %3564 = vmatmul.mubr.f32.gmra.mrb[0].mxu0 %v3370
      %v3565 = vpop.f32.mrb[0].mxu0
      %v3566 = vadd.f32 0.0, %v3565
      %v3567 = vpop.f32.mrb[0].mxu0
      %3568 = vmatprep.mubr.f32.mxu0 0.0
      %3569 = vmatmul.mubr.f32.gmra.mrb[0].mxu0 %v3373
      %v3570 = vpop.f32.mrb[0].mxu0
      %v3571 = vadd.f32 0.0, %v3570
      %v3572 = vpop.f32.mrb[0].mxu0
      %3573 = vmatprep.mubr.f32.mxu0 0.0
      %3574 = vmatmul.mubr.f32.gmra.mrb[0].mxu0 %v3376
      %v3575 = vpop.f32.mrb[0].mxu0
      %v3576 = vadd.f32 0.0, %v3575
      %v3577 = vpop.f32.mrb[0].mxu0
      %3578 = vmatprep.mubr.f32.mxu0 0.0
      %3579 = vmatmul.mubr.f32.gmra.mrb[0].mxu0 %v3379
      %v3580 = vpop.f32.mrb[0].mxu0
      %v3581 = vadd.f32 0.0, %v3580
      %v3582 = vpop.f32.mrb[0].mxu0
      %3583 = vmatprep.mubr.f32.mxu0 0.0
      %3584 = vmatmul.mubr.f32.gmra.mrb[0].mxu0 %v3382
      %v3585 = vpop.f32.mrb[0].mxu0
      %v3586 = vadd.f32 0.0, %v3585
      %v3587 = vpop.f32.mrb[0].mxu0
      %3588 = vmatprep.mubr.f32.mxu0 0.0
      %3589 = vmatmul.mubr.f32.gmra.mrb[0].mxu0 %v3385
      %v3590 = vpop.f32.mrb[0].mxu0
      %v3591 = vadd.f32 0.0, %v3590
      %v3592 = vpop.f32.mrb[0].mxu0
      %3593 = vmatprep.mubr.f32.mxu0 0.0
      %3594 = vmatmul.mubr.f32.gmra.mrb[0].mxu0 %v3388
      %v3595 = vpop.f32.mrb[0].mxu0
      %v3596 = vadd.f32 0.0, %v3595
      %v3597 = vpop.f32.mrb[0].mxu0
      %3598 = vmatprep.mubr.f32.mxu0 0.0
      %3599 = vmatmul.mubr.f32.gmra.mrb[0].mxu0 %v3391
      %v3600 = vpop.f32.mrb[0].mxu0
      %v3601 = vadd.f32 0.0, %v3600
      %v3602 = vpop.f32.mrb[0].mxu0
      %3603 = vmatprep.mubr.f32.mxu0 0.0
      %3604 = vmatmul.mubr.f32.gmra.mrb[0].mxu0 %v3394
      %v3605 = vpop.f32.mrb[0].mxu0
      %v3606 = vadd.f32 0.0, %v3605
      %v3607 = vpop.f32.mrb[0].mxu0
      %3608 = vmatprep.mubr.f32.mxu0 0.0
      %3609 = vmatmul.mubr.f32.gmra.mrb[0].mxu0 %v3397
      %v3610 = vpop.f32.mrb[0].mxu0
      %v3611 = vadd.f32 0.0, %v3610
      %v3612 = vpop.f32.mrb[0].mxu0
      %3613 = vmatprep.mubr.f32.mxu0 0.0
      %3614 = vmatmul.mubr.f32.gmra.mrb[0].mxu0 %v3400
      %v3615 = vpop.f32.mrb[0].mxu0
      %v3616 = vadd.f32 0.0, %v3615
      %v3617 = vpop.f32.mrb[0].mxu0
      %3618 = vmatprep.mubr.f32.mxu0 0.0
      %3619 = vmatmul.mubr.f32.gmra.mrb[0].mxu0 %v3403
      %v3620 = vpop.f32.mrb[0].mxu0
      %v3621 = vadd.f32 0.0, %v3620
      %v3622 = vpop.f32.mrb[0].mxu0
      %3623 = vmatprep.mubr.f32.mxu0 0.0
      %3624 = vmatmul.mubr.f32.gmra.mrb[0].mxu0 %v3406
      %v3625 = vpop.f32.mrb[0].mxu0
      %v3626 = vadd.f32 0.0, %v3625
      %v3627 = vpop.f32.mrb[0].mxu0
      %3628 = vmatprep.mubr.f32.mxu0 0.0
      %3629 = vmatmul.mubr.f32.gmra.mrb[0].mxu0 %v3409
      %v3630 = vpop.f32.mrb[0].mxu0
      %v3631 = vadd.f32 0.0, %v3630
      %v3632 = vpop.f32.mrb[0].mxu0
      %3633 = vmatprep.mubr.f32.mxu0 0.0
      %3634 = vmatmul.mubr.f32.gmra.mrb[0].mxu0 %v3412
      %v3635 = vpop.f32.mrb[0].mxu0
      %v3636 = vadd.f32 0.0, %v3635
      %v3637 = vpop.f32.mrb[0].mxu0
      %3638 = vdwg.mxu0
      %v3639 = vadd.f32 %v3219, %v3481
      %v3640 = vadd.f32 %v3220, %v3486
      %v3641 = vadd.f32 %v3221, %v3491
      %v3642 = vadd.f32 %v3222, %v3496
      %v3643 = vadd.f32 %v3223, %v3501
      %v3644 = vadd.f32 %v3224, %v3506
      %v3645 = vadd.f32 %v3225, %v3511
      %v3646 = vadd.f32 %v3226, %v3516
      %v3647 = vadd.f32 %v3227, %v3521
      %v3648 = vadd.f32 %v3228, %v3526
      %v3649 = vadd.f32 %v3229, %v3531
      %v3650 = vadd.f32 %v3230, %v3536
      %v3651 = vadd.f32 %v3231, %v3541
      %v3652 = vadd.f32 %v3232, %v3546
      %v3653 = vadd.f32 %v3233, %v3551
      %v3654 = vadd.f32 %v3234, %v3556
      %v3655 = vadd.f32 %v3235, %v3561
      %v3656 = vadd.f32 %v3236, %v3566
      %v3657 = vadd.f32 %v3237, %v3571
      %v3658 = vadd.f32 %v3238, %v3576
      %v3659 = vadd.f32 %v3239, %v3581
      %v3660 = vadd.f32 %v3240, %v3586
      %v3661 = vadd.f32 %v3241, %v3591
      %v3662 = vadd.f32 %v3242, %v3596
      %v3663 = vadd.f32 %v3243, %v3601
      %v3664 = vadd.f32 %v3244, %v3606
      %v3665 = vadd.f32 %v3245, %v3611
      %v3666 = vadd.f32 %v3246, %v3616
      %v3667 = vadd.f32 %v3247, %v3621
      %v3668 = vadd.f32 %v3248, %v3626
      %v3669 = vadd.f32 %v3249, %v3631
      %v3670 = vadd.f32 %v3250, %v3636
      %v3671 = vld [vmem:[#allocation2 + $0x27] sm:$0xff]
      %v3672 = vld [vmem:[#allocation2 + $0x2f] sm:$0xff]
      %v3673 = vld [vmem:[#allocation2 + $0x37] sm:$0xff]
      %v3674 = vld [vmem:[#allocation2 + $0x3f] sm:$0xff]
      %v3675 = vld [vmem:[#allocation2 + $0x47] sm:$0xff]
      %v3676 = vld [vmem:[#allocation2 + $0x4f] sm:$0xff]
      %v3677 = vld [vmem:[#allocation2 + $0x57] sm:$0xff]
      %v3678 = vld [vmem:[#allocation2 + $0x5f] sm:$0xff]
      %v3679 = vld [vmem:[#allocation2 + $0x67] sm:$0xff]
      %v3680 = vld [vmem:[#allocation2 + $0x6f] sm:$0xff]
      %v3681 = vld [vmem:[#allocation2 + $0x77] sm:$0xff]
      %v3682 = vld [vmem:[#allocation2 + $0x7f] sm:$0xff]
      %v3683 = vld [vmem:[#allocation2 + $0x87] sm:$0xff]
      %v3684 = vld [vmem:[#allocation2 + $0x8f] sm:$0xff]
      %v3685 = vld [vmem:[#allocation2 + $0x97] sm:$0xff]
      %v3686 = vld [vmem:[#allocation2 + $0x9f] sm:$0xff]
      %v3687 = vld [vmem:[#allocation2 + $0xa7] sm:$0xff]
      %v3688 = vld [vmem:[#allocation2 + $0xaf] sm:$0xff]
      %v3689 = vld [vmem:[#allocation2 + $0xb7] sm:$0xff]
      %v3690 = vld [vmem:[#allocation2 + $0xbf] sm:$0xff]
      %v3691 = vld [vmem:[#allocation2 + $0xc7] sm:$0xff]
      %v3692 = vld [vmem:[#allocation2 + $0xcf] sm:$0xff]
      %v3693 = vld [vmem:[#allocation2 + $0xd7] sm:$0xff]
      %v3694 = vld [vmem:[#allocation2 + $0xdf] sm:$0xff]
      %v3695 = vld [vmem:[#allocation2 + $0xe7] sm:$0xff]
      %v3696 = vld [vmem:[#allocation2 + $0xef] sm:$0xff]
      %v3697 = vld [vmem:[#allocation2 + $0xf7] sm:$0xff]
      %v3698 = vld [vmem:[#allocation2 + $0xff] sm:$0xff]
      %v3699 = vld [vmem:[#allocation2 + $0x107] sm:$0xff]
      %v3700 = vld [vmem:[#allocation2 + $0x10f] sm:$0xff]
      %v3701 = vld [vmem:[#allocation2 + $0x117] sm:$0xff]
      %v3702 = vld [vmem:[#allocation2 + $0x11f] sm:$0xff]
      %v3703 = vsel %vm1216, %v3671, 0.0
      %v3704 = vsel %vm1217, %v3672, 0.0
      %v3705 = vsel %vm1218, %v3673, 0.0
      %v3706 = vsel %vm1219, %v3674, 0.0
      %v3707 = vsel %vm1220, %v3675, 0.0
      %v3708 = vsel %vm1221, %v3676, 0.0
      %v3709 = vsel %vm1222, %v3677, 0.0
      %v3710 = vsel %vm1223, %v3678, 0.0
      %v3711 = vsel %vm1224, %v3679, 0.0
      %v3712 = vsel %vm1225, %v3680, 0.0
      %v3713 = vsel %vm1226, %v3681, 0.0
      %v3714 = vsel %vm1227, %v3682, 0.0
      %v3715 = vsel %vm1228, %v3683, 0.0
      %v3716 = vsel %vm1229, %v3684, 0.0
      %v3717 = vsel %vm1230, %v3685, 0.0
      %v3718 = vsel %vm1231, %v3686, 0.0
      %v3719 = vsel %vm1232, %v3687, 0.0
      %v3720 = vsel %vm1233, %v3688, 0.0
      %v3721 = vsel %vm1234, %v3689, 0.0
      %v3722 = vsel %vm1235, %v3690, 0.0
      %v3723 = vsel %vm1236, %v3691, 0.0
      %v3724 = vsel %vm1237, %v3692, 0.0
      %v3725 = vsel %vm1238, %v3693, 0.0
      %v3726 = vsel %vm1239, %v3694, 0.0
      %v3727 = vsel %vm1240, %v3695, 0.0
      %v3728 = vsel %vm1241, %v3696, 0.0
      %v3729 = vsel %vm1242, %v3697, 0.0
      %v3730 = vsel %vm1243, %v3698, 0.0
      %v3731 = vsel %vm1244, %v3699, 0.0
      %v3732 = vsel %vm1245, %v3700, 0.0
      %v3733 = vsel %vm1246, %v3701, 0.0
      %v3734 = vsel %vm1247, %v3702, 0.0
      %s3735 = scalar_lea.vmem %s5, 96
      %v3736 = vld [vmem:[%s3735] sm:$0xff]
      %v3737 = vld [vmem:[%s3735 + $0x8] sm:$0xff]
      %v3739 = vsel %vm760, %v3703, 0
      %v3742 = vsel %vm760, %v3704, 0
      %v3745 = vsel %vm760, %v3705, 0
      %v3748 = vsel %vm760, %v3706, 0
      %v3751 = vsel %vm760, %v3707, 0
      %v3754 = vsel %vm760, %v3708, 0
      %v3757 = vsel %vm760, %v3709, 0
      %v3760 = vsel %vm760, %v3710, 0
      %v3763 = vsel %vm760, %v3711, 0
      %v3766 = vsel %vm760, %v3712, 0
      %v3769 = vsel %vm760, %v3713, 0
      %v3772 = vsel %vm760, %v3714, 0
      %v3775 = vsel %vm760, %v3715, 0
      %v3778 = vsel %vm760, %v3716, 0
      %v3781 = vsel %vm760, %v3717, 0
      %v3784 = vsel %vm760, %v3718, 0
      %v3787 = vsel %vm760, %v3719, 0
      %v3790 = vsel %vm760, %v3720, 0
      %v3793 = vsel %vm760, %v3721, 0
      %v3796 = vsel %vm760, %v3722, 0
      %v3799 = vsel %vm760, %v3723, 0
      %v3802 = vsel %vm760, %v3724, 0
      %v3805 = vsel %vm760, %v3725, 0
      %v3808 = vsel %vm760, %v3726, 0
      %v3811 = vsel %vm760, %v3727, 0
      %v3814 = vsel %vm760, %v3728, 0
      %v3817 = vsel %vm760, %v3729, 0
      %v3820 = vsel %vm760, %v3730, 0
      %v3823 = vsel %vm760, %v3731, 0
      %v3826 = vsel %vm760, %v3732, 0
      %v3829 = vsel %vm760, %v3733, 0
      %v3832 = vsel %vm760, %v3734, 0
      %3834 = vmatprep.subr.mxu0 0.0
      %3835 = vmatpush1.msra.mxu0 %v3736
      %3836 = vmatprep.subr.mxu0 0.0
      %3837 = vmatpush1.msra.mxu0 %v3737
      %3838 = vmatprep.subr.mxu0 0.0
      %3839 = vmatpush1.msra.mxu0 0.0
      %3840 = vmatprep.subr.mxu0 0.0
      %3841 = vmatpush1.msra.mxu0 0.0
      %3842 = vmatprep.subr.mxu0 0.0
      %3843 = vmatpush1.msra.mxu0 0.0
      %3844 = vmatprep.subr.mxu0 0.0
      %3845 = vmatpush1.msra.mxu0 0.0
      %3846 = vmatprep.subr.mxu0 0.0
      %3847 = vmatpush1.msra.mxu0 0.0
      %3848 = vmatprep.subr.mxu0 0.0
      %3849 = vmatpush1.msra.mxu0 0.0
      %3850 = vmatprep.subr.mxu0 0.0
      %3851 = vmatpush1.msra.mxu0 0.0
      %3852 = vmatprep.subr.mxu0 0.0
      %3853 = vmatpush1.msra.mxu0 0.0
      %3854 = vmatprep.subr.mxu0 0.0
      %3855 = vmatpush1.msra.mxu0 0.0
      %3856 = vmatprep.subr.mxu0 0.0
      %3857 = vmatpush1.msra.mxu0 0.0
      %3858 = vmatprep.subr.mxu0 0.0
      %3859 = vmatpush1.msra.mxu0 0.0
      %3860 = vmatprep.subr.mxu0 0.0
      %3861 = vmatpush1.msra.mxu0 0.0
      %3862 = vmatprep.subr.mxu0 0.0
      %3863 = vmatpush1.msra.mxu0 0.0
      %3864 = vmatprep.subr.mxu0 0.0
      %3865 = vmatpush1.msra.mxu0 0.0
      %3866 = vmatprep.subr.mxu0 0.0
      %3867 = vmatpush1.msra.mxu0 0.0
      %3868 = vmatprep.subr.mxu0 0.0
      %3869 = vmatpush1.msra.mxu0 0.0
      %3870 = vmatprep.subr.mxu0 0.0
      %3871 = vmatpush1.msra.mxu0 0.0
      %3872 = vmatprep.subr.mxu0 0.0
      %3873 = vmatpush1.msra.mxu0 0.0
      %3874 = vmatprep.subr.mxu0 0.0
      %3875 = vmatpush1.msra.mxu0 0.0
      %3876 = vmatprep.subr.mxu0 0.0
      %3877 = vmatpush1.msra.mxu0 0.0
      %3878 = vmatprep.subr.mxu0 0.0
      %3879 = vmatpush1.msra.mxu0 0.0
      %3880 = vmatprep.subr.mxu0 0.0
      %3881 = vmatpush1.msra.mxu0 0.0
      %3882 = vmatprep.subr.mxu0 0.0
      %3883 = vmatpush1.msra.mxu0 0.0
      %3884 = vmatprep.subr.mxu0 0.0
      %3885 = vmatpush1.msra.mxu0 0.0
      %3886 = vmatprep.subr.mxu0 0.0
      %3887 = vmatpush1.msra.mxu0 0.0
      %3888 = vmatprep.subr.mxu0 0.0
      %3889 = vmatpush1.msra.mxu0 0.0
      %3890 = vmatprep.subr.mxu0 0.0
      %3891 = vmatpush1.msra.mxu0 0.0
      %3892 = vmatprep.subr.mxu0 0.0
      %3893 = vmatpush1.msra.mxu0 0.0
      %3894 = vmatprep.subr.mxu0 0.0
      %3895 = vmatpush1.msra.mxu0 0.0
      %3896 = vmatprep.subr.mxu0 0.0
      %3897 = vmatpush1.msra.mxu0 0.0
      %3898 = vmatprep.mubr.f32.mxu0 0.0
      %3899 = vmatmul.mubr.f32.gmra.mrb[0].mxu0 %v3739
      %v3900 = vpop.f32.mrb[0].mxu0
      %v3901 = vadd.f32 0.0, %v3900
      %v3902 = vpop.f32.mrb[0].mxu0
      %3903 = vmatprep.mubr.f32.mxu0 0.0
      %3904 = vmatmul.mubr.f32.gmra.mrb[0].mxu0 %v3742
      %v3905 = vpop.f32.mrb[0].mxu0
      %v3906 = vadd.f32 0.0, %v3905
      %v3907 = vpop.f32.mrb[0].mxu0
      %3908 = vmatprep.mubr.f32.mxu0 0.0
      %3909 = vmatmul.mubr.f32.gmra.mrb[0].mxu0 %v3745
      %v3910 = vpop.f32.mrb[0].mxu0
      %v3911 = vadd.f32 0.0, %v3910
      %v3912 = vpop.f32.mrb[0].mxu0
      %3913 = vmatprep.mubr.f32.mxu0 0.0
      %3914 = vmatmul.mubr.f32.gmra.mrb[0].mxu0 %v3748
      %v3915 = vpop.f32.mrb[0].mxu0
      %v3916 = vadd.f32 0.0, %v3915
      %v3917 = vpop.f32.mrb[0].mxu0
      %3918 = vmatprep.mubr.f32.mxu0 0.0
      %3919 = vmatmul.mubr.f32.gmra.mrb[0].mxu0 %v3751
      %v3920 = vpop.f32.mrb[0].mxu0
      %v3921 = vadd.f32 0.0, %v3920
      %v3922 = vpop.f32.mrb[0].mxu0
      %3923 = vmatprep.mubr.f32.mxu0 0.0
      %3924 = vmatmul.mubr.f32.gmra.mrb[0].mxu0 %v3754
      %v3925 = vpop.f32.mrb[0].mxu0
      %v3926 = vadd.f32 0.0, %v3925
      %v3927 = vpop.f32.mrb[0].mxu0
      %3928 = vmatprep.mubr.f32.mxu0 0.0
      %3929 = vmatmul.mubr.f32.gmra.mrb[0].mxu0 %v3757
      %v3930 = vpop.f32.mrb[0].mxu0
      %v3931 = vadd.f32 0.0, %v3930
      %v3932 = vpop.f32.mrb[0].mxu0
      %3933 = vmatprep.mubr.f32.mxu0 0.0
      %3934 = vmatmul.mubr.f32.gmra.mrb[0].mxu0 %v3760
      %v3935 = vpop.f32.mrb[0].mxu0
      %v3936 = vadd.f32 0.0, %v3935
      %v3937 = vpop.f32.mrb[0].mxu0
      %3938 = vmatprep.mubr.f32.mxu0 0.0
      %3939 = vmatmul.mubr.f32.gmra.mrb[0].mxu0 %v3763
      %v3940 = vpop.f32.mrb[0].mxu0
      %v3941 = vadd.f32 0.0, %v3940
      %v3942 = vpop.f32.mrb[0].mxu0
      %3943 = vmatprep.mubr.f32.mxu0 0.0
      %3944 = vmatmul.mubr.f32.gmra.mrb[0].mxu0 %v3766
      %v3945 = vpop.f32.mrb[0].mxu0
      %v3946 = vadd.f32 0.0, %v3945
      %v3947 = vpop.f32.mrb[0].mxu0
      %3948 = vmatprep.mubr.f32.mxu0 0.0
      %3949 = vmatmul.mubr.f32.gmra.mrb[0].mxu0 %v3769
      %v3950 = vpop.f32.mrb[0].mxu0
      %v3951 = vadd.f32 0.0, %v3950
      %v3952 = vpop.f32.mrb[0].mxu0
      %3953 = vmatprep.mubr.f32.mxu0 0.0
      %3954 = vmatmul.mubr.f32.gmra.mrb[0].mxu0 %v3772
      %v3955 = vpop.f32.mrb[0].mxu0
      %v3956 = vadd.f32 0.0, %v3955
      %v3957 = vpop.f32.mrb[0].mxu0
      %3958 = vmatprep.mubr.f32.mxu0 0.0
      %3959 = vmatmul.mubr.f32.gmra.mrb[0].mxu0 %v3775
      %v3960 = vpop.f32.mrb[0].mxu0
      %v3961 = vadd.f32 0.0, %v3960
      %v3962 = vpop.f32.mrb[0].mxu0
      %3963 = vmatprep.mubr.f32.mxu0 0.0
      %3964 = vmatmul.mubr.f32.gmra.mrb[0].mxu0 %v3778
      %v3965 = vpop.f32.mrb[0].mxu0
      %v3966 = vadd.f32 0.0, %v3965
      %v3967 = vpop.f32.mrb[0].mxu0
      %3968 = vmatprep.mubr.f32.mxu0 0.0
      %3969 = vmatmul.mubr.f32.gmra.mrb[0].mxu0 %v3781
      %v3970 = vpop.f32.mrb[0].mxu0
      %v3971 = vadd.f32 0.0, %v3970
      %v3972 = vpop.f32.mrb[0].mxu0
      %3973 = vmatprep.mubr.f32.mxu0 0.0
      %3974 = vmatmul.mubr.f32.gmra.mrb[0].mxu0 %v3784
      %v3975 = vpop.f32.mrb[0].mxu0
      %v3976 = vadd.f32 0.0, %v3975
      %v3977 = vpop.f32.mrb[0].mxu0
      %3978 = vmatprep.mubr.f32.mxu0 0.0
      %3979 = vmatmul.mubr.f32.gmra.mrb[0].mxu0 %v3787
      %v3980 = vpop.f32.mrb[0].mxu0
      %v3981 = vadd.f32 0.0, %v3980
      %v3982 = vpop.f32.mrb[0].mxu0
      %3983 = vmatprep.mubr.f32.mxu0 0.0
      %3984 = vmatmul.mubr.f32.gmra.mrb[0].mxu0 %v3790
      %v3985 = vpop.f32.mrb[0].mxu0
      %v3986 = vadd.f32 0.0, %v3985
      %v3987 = vpop.f32.mrb[0].mxu0
      %3988 = vmatprep.mubr.f32.mxu0 0.0
      %3989 = vmatmul.mubr.f32.gmra.mrb[0].mxu0 %v3793
      %v3990 = vpop.f32.mrb[0].mxu0
      %v3991 = vadd.f32 0.0, %v3990
      %v3992 = vpop.f32.mrb[0].mxu0
      %3993 = vmatprep.mubr.f32.mxu0 0.0
      %3994 = vmatmul.mubr.f32.gmra.mrb[0].mxu0 %v3796
      %v3995 = vpop.f32.mrb[0].mxu0
      %v3996 = vadd.f32 0.0, %v3995
      %v3997 = vpop.f32.mrb[0].mxu0
      %3998 = vmatprep.mubr.f32.mxu0 0.0
      %3999 = vmatmul.mubr.f32.gmra.mrb[0].mxu0 %v3799
      %v4000 = vpop.f32.mrb[0].mxu0
      %v4001 = vadd.f32 0.0, %v4000
      %v4002 = vpop.f32.mrb[0].mxu0
      %4003 = vmatprep.mubr.f32.mxu0 0.0
      %4004 = vmatmul.mubr.f32.gmra.mrb[0].mxu0 %v3802
      %v4005 = vpop.f32.mrb[0].mxu0
      %v4006 = vadd.f32 0.0, %v4005
      %v4007 = vpop.f32.mrb[0].mxu0
      %4008 = vmatprep.mubr.f32.mxu0 0.0
      %4009 = vmatmul.mubr.f32.gmra.mrb[0].mxu0 %v3805
      %v4010 = vpop.f32.mrb[0].mxu0
      %v4011 = vadd.f32 0.0, %v4010
      %v4012 = vpop.f32.mrb[0].mxu0
      %4013 = vmatprep.mubr.f32.mxu0 0.0
      %4014 = vmatmul.mubr.f32.gmra.mrb[0].mxu0 %v3808
      %v4015 = vpop.f32.mrb[0].mxu0
      %v4016 = vadd.f32 0.0, %v4015
      %v4017 = vpop.f32.mrb[0].mxu0
      %4018 = vmatprep.mubr.f32.mxu0 0.0
      %4019 = vmatmul.mubr.f32.gmra.mrb[0].mxu0 %v3811
      %v4020 = vpop.f32.mrb[0].mxu0
      %v4021 = vadd.f32 0.0, %v4020
      %v4022 = vpop.f32.mrb[0].mxu0
      %4023 = vmatprep.mubr.f32.mxu0 0.0
      %4024 = vmatmul.mubr.f32.gmra.mrb[0].mxu0 %v3814
      %v4025 = vpop.f32.mrb[0].mxu0
      %v4026 = vadd.f32 0.0, %v4025
      %v4027 = vpop.f32.mrb[0].mxu0
      %4028 = vmatprep.mubr.f32.mxu0 0.0
      %4029 = vmatmul.mubr.f32.gmra.mrb[0].mxu0 %v3817
      %v4030 = vpop.f32.mrb[0].mxu0
      %v4031 = vadd.f32 0.0, %v4030
      %v4032 = vpop.f32.mrb[0].mxu0
      %4033 = vmatprep.mubr.f32.mxu0 0.0
      %4034 = vmatmul.mubr.f32.gmra.mrb[0].mxu0 %v3820
      %v4035 = vpop.f32.mrb[0].mxu0
      %v4036 = vadd.f32 0.0, %v4035
      %v4037 = vpop.f32.mrb[0].mxu0
      %4038 = vmatprep.mubr.f32.mxu0 0.0
      %4039 = vmatmul.mubr.f32.gmra.mrb[0].mxu0 %v3823
      %v4040 = vpop.f32.mrb[0].mxu0
      %v4041 = vadd.f32 0.0, %v4040
      %v4042 = vpop.f32.mrb[0].mxu0
      %4043 = vmatprep.mubr.f32.mxu0 0.0
      %4044 = vmatmul.mubr.f32.gmra.mrb[0].mxu0 %v3826
      %v4045 = vpop.f32.mrb[0].mxu0
      %v4046 = vadd.f32 0.0, %v4045
      %v4047 = vpop.f32.mrb[0].mxu0
      %4048 = vmatprep.mubr.f32.mxu0 0.0
      %4049 = vmatmul.mubr.f32.gmra.mrb[0].mxu0 %v3829
      %v4050 = vpop.f32.mrb[0].mxu0
      %v4051 = vadd.f32 0.0, %v4050
      %v4052 = vpop.f32.mrb[0].mxu0
      %4053 = vmatprep.mubr.f32.mxu0 0.0
      %4054 = vmatmul.mubr.f32.gmra.mrb[0].mxu0 %v3832
      %v4055 = vpop.f32.mrb[0].mxu0
      %v4056 = vadd.f32 0.0, %v4055
      %v4057 = vpop.f32.mrb[0].mxu0
      %4058 = vdwg.mxu0
      %v4059 = vadd.f32 %v3639, %v3901
      %v4060 = vadd.f32 %v3640, %v3906
      %v4061 = vadd.f32 %v3641, %v3911
      %v4062 = vadd.f32 %v3642, %v3916
      %v4063 = vadd.f32 %v3643, %v3921
      %v4064 = vadd.f32 %v3644, %v3926
      %v4065 = vadd.f32 %v3645, %v3931
      %v4066 = vadd.f32 %v3646, %v3936
      %v4067 = vadd.f32 %v3647, %v3941
      %v4068 = vadd.f32 %v3648, %v3946
      %v4069 = vadd.f32 %v3649, %v3951
      %v4070 = vadd.f32 %v3650, %v3956
      %v4071 = vadd.f32 %v3651, %v3961
      %v4072 = vadd.f32 %v3652, %v3966
      %v4073 = vadd.f32 %v3653, %v3971
      %v4074 = vadd.f32 %v3654, %v3976
      %v4075 = vadd.f32 %v3655, %v3981
      %v4076 = vadd.f32 %v3656, %v3986
      %v4077 = vadd.f32 %v3657, %v3991
      %v4078 = vadd.f32 %v3658, %v3996
      %v4079 = vadd.f32 %v3659, %v4001
      %v4080 = vadd.f32 %v3660, %v4006
      %v4081 = vadd.f32 %v3661, %v4011
      %v4082 = vadd.f32 %v3662, %v4016
      %v4083 = vadd.f32 %v3663, %v4021
      %v4084 = vadd.f32 %v3664, %v4026
      %v4085 = vadd.f32 %v3665, %v4031
      %v4086 = vadd.f32 %v3666, %v4036
      %v4087 = vadd.f32 %v3667, %v4041
      %v4088 = vadd.f32 %v3668, %v4046
      %v4089 = vadd.f32 %v3669, %v4051
      %v4090 = vadd.f32 %v3670, %v4056
      %v4091 = vld [vmem:[#allocation2 + $0x28] sm:$0xff]
      %v4092 = vld [vmem:[#allocation2 + $0x30] sm:$0xff]
      %v4093 = vld [vmem:[#allocation2 + $0x38] sm:$0xff]
      %v4094 = vld [vmem:[#allocation2 + $0x40] sm:$0xff]
      %v4095 = vld [vmem:[#allocation2 + $0x48] sm:$0xff]
      %v4096 = vld [vmem:[#allocation2 + $0x50] sm:$0xff]
      %v4097 = vld [vmem:[#allocation2 + $0x58] sm:$0xff]
      %v4098 = vld [vmem:[#allocation2 + $0x60] sm:$0xff]
      %v4099 = vld [vmem:[#allocation2 + $0x68] sm:$0xff]
      %v4100 = vld [vmem:[#allocation2 + $0x70] sm:$0xff]
      %v4101 = vld [vmem:[#allocation2 + $0x78] sm:$0xff]
      %v4102 = vld [vmem:[#allocation2 + $0x80] sm:$0xff]
      %v4103 = vld [vmem:[#allocation2 + $0x88] sm:$0xff]
      %v4104 = vld [vmem:[#allocation2 + $0x90] sm:$0xff]
      %v4105 = vld [vmem:[#allocation2 + $0x98] sm:$0xff]
      %v4106 = vld [vmem:[#allocation2 + $0xa0] sm:$0xff]
      %v4107 = vld [vmem:[#allocation2 + $0xa8] sm:$0xff]
      %v4108 = vld [vmem:[#allocation2 + $0xb0] sm:$0xff]
      %v4109 = vld [vmem:[#allocation2 + $0xb8] sm:$0xff]
      %v4110 = vld [vmem:[#allocation2 + $0xc0] sm:$0xff]
      %v4111 = vld [vmem:[#allocation2 + $0xc8] sm:$0xff]
      %v4112 = vld [vmem:[#allocation2 + $0xd0] sm:$0xff]
      %v4113 = vld [vmem:[#allocation2 + $0xd8] sm:$0xff]
      %v4114 = vld [vmem:[#allocation2 + $0xe0] sm:$0xff]
      %v4115 = vld [vmem:[#allocation2 + $0xe8] sm:$0xff]
      %v4116 = vld [vmem:[#allocation2 + $0xf0] sm:$0xff]
      %v4117 = vld [vmem:[#allocation2 + $0xf8] sm:$0xff]
      %v4118 = vld [vmem:[#allocation2 + $0x100] sm:$0xff]
      %v4119 = vld [vmem:[#allocation2 + $0x108] sm:$0xff]
      %v4120 = vld [vmem:[#allocation2 + $0x110] sm:$0xff]
      %v4121 = vld [vmem:[#allocation2 + $0x118] sm:$0xff]
      %v4122 = vld [vmem:[#allocation2 + $0x120] sm:$0xff]
      %s4123 = scalar_lea.vmem %s5, 112
      %v4124 = vld [vmem:[%s4123] sm:$0xff]
      %v4125 = vld [vmem:[%s4123 + $0x8] sm:$0xff]
      %v4127 = vsel %vm760, %v4091, 0
      %v4130 = vsel %vm760, %v4092, 0
      %v4133 = vsel %vm760, %v4093, 0
      %v4136 = vsel %vm760, %v4094, 0
      %v4139 = vsel %vm760, %v4095, 0
      %v4142 = vsel %vm760, %v4096, 0
      %v4145 = vsel %vm760, %v4097, 0
      %v4148 = vsel %vm760, %v4098, 0
      %v4151 = vsel %vm760, %v4099, 0
      %v4154 = vsel %vm760, %v4100, 0
      %v4157 = vsel %vm760, %v4101, 0
      %v4160 = vsel %vm760, %v4102, 0
      %v4163 = vsel %vm760, %v4103, 0
      %v4166 = vsel %vm760, %v4104, 0
      %v4169 = vsel %vm760, %v4105, 0
      %v4172 = vsel %vm760, %v4106, 0
      %v4175 = vsel %vm760, %v4107, 0
      %v4178 = vsel %vm760, %v4108, 0
      %v4181 = vsel %vm760, %v4109, 0
      %v4184 = vsel %vm760, %v4110, 0
      %v4187 = vsel %vm760, %v4111, 0
      %v4190 = vsel %vm760, %v4112, 0
      %v4193 = vsel %vm760, %v4113, 0
      %v4196 = vsel %vm760, %v4114, 0
      %v4199 = vsel %vm760, %v4115, 0
      %v4202 = vsel %vm760, %v4116, 0
      %v4205 = vsel %vm760, %v4117, 0
      %v4208 = vsel %vm760, %v4118, 0
      %v4211 = vsel %vm760, %v4119, 0
      %v4214 = vsel %vm760, %v4120, 0
      %v4217 = vsel %vm760, %v4121, 0
      %v4220 = vsel %vm760, %v4122, 0
      %4222 = vmatprep.subr.mxu0 0.0
      %4223 = vmatpush1.msra.mxu0 %v4124
      %4224 = vmatprep.subr.mxu0 0.0
      %4225 = vmatpush1.msra.mxu0 %v4125
      %4226 = vmatprep.subr.mxu0 0.0
      %4227 = vmatpush1.msra.mxu0 0.0
      %4228 = vmatprep.subr.mxu0 0.0
      %4229 = vmatpush1.msra.mxu0 0.0
      %4230 = vmatprep.subr.mxu0 0.0
      %4231 = vmatpush1.msra.mxu0 0.0
      %4232 = vmatprep.subr.mxu0 0.0
      %4233 = vmatpush1.msra.mxu0 0.0
      %4234 = vmatprep.subr.mxu0 0.0
      %4235 = vmatpush1.msra.mxu0 0.0
      %4236 = vmatprep.subr.mxu0 0.0
      %4237 = vmatpush1.msra.mxu0 0.0
      %4238 = vmatprep.subr.mxu0 0.0
      %4239 = vmatpush1.msra.mxu0 0.0
      %4240 = vmatprep.subr.mxu0 0.0
      %4241 = vmatpush1.msra.mxu0 0.0
      %4242 = vmatprep.subr.mxu0 0.0
      %4243 = vmatpush1.msra.mxu0 0.0
      %4244 = vmatprep.subr.mxu0 0.0
      %4245 = vmatpush1.msra.mxu0 0.0
      %4246 = vmatprep.subr.mxu0 0.0
      %4247 = vmatpush1.msra.mxu0 0.0
      %4248 = vmatprep.subr.mxu0 0.0
      %4249 = vmatpush1.msra.mxu0 0.0
      %4250 = vmatprep.subr.mxu0 0.0
      %4251 = vmatpush1.msra.mxu0 0.0
      %4252 = vmatprep.subr.mxu0 0.0
      %4253 = vmatpush1.msra.mxu0 0.0
      %4254 = vmatprep.subr.mxu0 0.0
      %4255 = vmatpush1.msra.mxu0 0.0
      %4256 = vmatprep.subr.mxu0 0.0
      %4257 = vmatpush1.msra.mxu0 0.0
      %4258 = vmatprep.subr.mxu0 0.0
      %4259 = vmatpush1.msra.mxu0 0.0
      %4260 = vmatprep.subr.mxu0 0.0
      %4261 = vmatpush1.msra.mxu0 0.0
      %4262 = vmatprep.subr.mxu0 0.0
      %4263 = vmatpush1.msra.mxu0 0.0
      %4264 = vmatprep.subr.mxu0 0.0
      %4265 = vmatpush1.msra.mxu0 0.0
      %4266 = vmatprep.subr.mxu0 0.0
      %4267 = vmatpush1.msra.mxu0 0.0
      %4268 = vmatprep.subr.mxu0 0.0
      %4269 = vmatpush1.msra.mxu0 0.0
      %4270 = vmatprep.subr.mxu0 0.0
      %4271 = vmatpush1.msra.mxu0 0.0
      %4272 = vmatprep.subr.mxu0 0.0
      %4273 = vmatpush1.msra.mxu0 0.0
      %4274 = vmatprep.subr.mxu0 0.0
      %4275 = vmatpush1.msra.mxu0 0.0
      %4276 = vmatprep.subr.mxu0 0.0
      %4277 = vmatpush1.msra.mxu0 0.0
      %4278 = vmatprep.subr.mxu0 0.0
      %4279 = vmatpush1.msra.mxu0 0.0
      %4280 = vmatprep.subr.mxu0 0.0
      %4281 = vmatpush1.msra.mxu0 0.0
      %4282 = vmatprep.subr.mxu0 0.0
      %4283 = vmatpush1.msra.mxu0 0.0
      %4284 = vmatprep.subr.mxu0 0.0
      %4285 = vmatpush1.msra.mxu0 0.0
      %4286 = vmatprep.mubr.f32.mxu0 0.0
      %4287 = vmatmul.mubr.f32.gmra.mrb[0].mxu0 %v4127
      %v4288 = vpop.f32.mrb[0].mxu0
      %v4289 = vadd.f32 0.0, %v4288
      %v4290 = vpop.f32.mrb[0].mxu0
      %4291 = vmatprep.mubr.f32.mxu0 0.0
      %4292 = vmatmul.mubr.f32.gmra.mrb[0].mxu0 %v4130
      %v4293 = vpop.f32.mrb[0].mxu0
      %v4294 = vadd.f32 0.0, %v4293
      %v4295 = vpop.f32.mrb[0].mxu0
      %4296 = vmatprep.mubr.f32.mxu0 0.0
      %4297 = vmatmul.mubr.f32.gmra.mrb[0].mxu0 %v4133
      %v4298 = vpop.f32.mrb[0].mxu0
      %v4299 = vadd.f32 0.0, %v4298
      %v4300 = vpop.f32.mrb[0].mxu0
      %4301 = vmatprep.mubr.f32.mxu0 0.0
      %4302 = vmatmul.mubr.f32.gmra.mrb[0].mxu0 %v4136
      %v4303 = vpop.f32.mrb[0].mxu0
      %v4304 = vadd.f32 0.0, %v4303
      %v4305 = vpop.f32.mrb[0].mxu0
      %4306 = vmatprep.mubr.f32.mxu0 0.0
      %4307 = vmatmul.mubr.f32.gmra.mrb[0].mxu0 %v4139
      %v4308 = vpop.f32.mrb[0].mxu0
      %v4309 = vadd.f32 0.0, %v4308
      %v4310 = vpop.f32.mrb[0].mxu0
      %4311 = vmatprep.mubr.f32.mxu0 0.0
      %4312 = vmatmul.mubr.f32.gmra.mrb[0].mxu0 %v4142
      %v4313 = vpop.f32.mrb[0].mxu0
      %v4314 = vadd.f32 0.0, %v4313
      %v4315 = vpop.f32.mrb[0].mxu0
      %4316 = vmatprep.mubr.f32.mxu0 0.0
      %4317 = vmatmul.mubr.f32.gmra.mrb[0].mxu0 %v4145
      %v4318 = vpop.f32.mrb[0].mxu0
      %v4319 = vadd.f32 0.0, %v4318
      %v4320 = vpop.f32.mrb[0].mxu0
      %4321 = vmatprep.mubr.f32.mxu0 0.0
      %4322 = vmatmul.mubr.f32.gmra.mrb[0].mxu0 %v4148
      %v4323 = vpop.f32.mrb[0].mxu0
      %v4324 = vadd.f32 0.0, %v4323
      %v4325 = vpop.f32.mrb[0].mxu0
      %4326 = vmatprep.mubr.f32.mxu0 0.0
      %4327 = vmatmul.mubr.f32.gmra.mrb[0].mxu0 %v4151
      %v4328 = vpop.f32.mrb[0].mxu0
      %v4329 = vadd.f32 0.0, %v4328
      %v4330 = vpop.f32.mrb[0].mxu0
      %4331 = vmatprep.mubr.f32.mxu0 0.0
      %4332 = vmatmul.mubr.f32.gmra.mrb[0].mxu0 %v4154
      %v4333 = vpop.f32.mrb[0].mxu0
      %v4334 = vadd.f32 0.0, %v4333
      %v4335 = vpop.f32.mrb[0].mxu0
      %4336 = vmatprep.mubr.f32.mxu0 0.0
      %4337 = vmatmul.mubr.f32.gmra.mrb[0].mxu0 %v4157
      %v4338 = vpop.f32.mrb[0].mxu0
      %v4339 = vadd.f32 0.0, %v4338
      %v4340 = vpop.f32.mrb[0].mxu0
      %4341 = vmatprep.mubr.f32.mxu0 0.0
      %4342 = vmatmul.mubr.f32.gmra.mrb[0].mxu0 %v4160
      %v4343 = vpop.f32.mrb[0].mxu0
      %v4344 = vadd.f32 0.0, %v4343
      %v4345 = vpop.f32.mrb[0].mxu0
      %4346 = vmatprep.mubr.f32.mxu0 0.0
      %4347 = vmatmul.mubr.f32.gmra.mrb[0].mxu0 %v4163
      %v4348 = vpop.f32.mrb[0].mxu0
      %v4349 = vadd.f32 0.0, %v4348
      %v4350 = vpop.f32.mrb[0].mxu0
      %4351 = vmatprep.mubr.f32.mxu0 0.0
      %4352 = vmatmul.mubr.f32.gmra.mrb[0].mxu0 %v4166
      %v4353 = vpop.f32.mrb[0].mxu0
      %v4354 = vadd.f32 0.0, %v4353
      %v4355 = vpop.f32.mrb[0].mxu0
      %4356 = vmatprep.mubr.f32.mxu0 0.0
      %4357 = vmatmul.mubr.f32.gmra.mrb[0].mxu0 %v4169
      %v4358 = vpop.f32.mrb[0].mxu0
      %v4359 = vadd.f32 0.0, %v4358
      %v4360 = vpop.f32.mrb[0].mxu0
      %4361 = vmatprep.mubr.f32.mxu0 0.0
      %4362 = vmatmul.mubr.f32.gmra.mrb[0].mxu0 %v4172
      %v4363 = vpop.f32.mrb[0].mxu0
      %v4364 = vadd.f32 0.0, %v4363
      %v4365 = vpop.f32.mrb[0].mxu0
      %4366 = vmatprep.mubr.f32.mxu0 0.0
      %4367 = vmatmul.mubr.f32.gmra.mrb[0].mxu0 %v4175
      %v4368 = vpop.f32.mrb[0].mxu0
      %v4369 = vadd.f32 0.0, %v4368
      %v4370 = vpop.f32.mrb[0].mxu0
      %4371 = vmatprep.mubr.f32.mxu0 0.0
      %4372 = vmatmul.mubr.f32.gmra.mrb[0].mxu0 %v4178
      %v4373 = vpop.f32.mrb[0].mxu0
      %v4374 = vadd.f32 0.0, %v4373
      %v4375 = vpop.f32.mrb[0].mxu0
      %4376 = vmatprep.mubr.f32.mxu0 0.0
      %4377 = vmatmul.mubr.f32.gmra.mrb[0].mxu0 %v4181
      %v4378 = vpop.f32.mrb[0].mxu0
      %v4379 = vadd.f32 0.0, %v4378
      %v4380 = vpop.f32.mrb[0].mxu0
      %4381 = vmatprep.mubr.f32.mxu0 0.0
      %4382 = vmatmul.mubr.f32.gmra.mrb[0].mxu0 %v4184
      %v4383 = vpop.f32.mrb[0].mxu0
      %v4384 = vadd.f32 0.0, %v4383
      %v4385 = vpop.f32.mrb[0].mxu0
      %4386 = vmatprep.mubr.f32.mxu0 0.0
      %4387 = vmatmul.mubr.f32.gmra.mrb[0].mxu0 %v4187
      %v4388 = vpop.f32.mrb[0].mxu0
      %v4389 = vadd.f32 0.0, %v4388
      %v4390 = vpop.f32.mrb[0].mxu0
      %4391 = vmatprep.mubr.f32.mxu0 0.0
      %4392 = vmatmul.mubr.f32.gmra.mrb[0].mxu0 %v4190
      %v4393 = vpop.f32.mrb[0].mxu0
      %v4394 = vadd.f32 0.0, %v4393
      %v4395 = vpop.f32.mrb[0].mxu0
      %4396 = vmatprep.mubr.f32.mxu0 0.0
      %4397 = vmatmul.mubr.f32.gmra.mrb[0].mxu0 %v4193
      %v4398 = vpop.f32.mrb[0].mxu0
      %v4399 = vadd.f32 0.0, %v4398
      %v4400 = vpop.f32.mrb[0].mxu0
      %4401 = vmatprep.mubr.f32.mxu0 0.0
      %4402 = vmatmul.mubr.f32.gmra.mrb[0].mxu0 %v4196
      %v4403 = vpop.f32.mrb[0].mxu0
      %v4404 = vadd.f32 0.0, %v4403
      %v4405 = vpop.f32.mrb[0].mxu0
      %4406 = vmatprep.mubr.f32.mxu0 0.0
      %4407 = vmatmul.mubr.f32.gmra.mrb[0].mxu0 %v4199
      %v4408 = vpop.f32.mrb[0].mxu0
      %v4409 = vadd.f32 0.0, %v4408
      %v4410 = vpop.f32.mrb[0].mxu0
      %4411 = vmatprep.mubr.f32.mxu0 0.0
      %4412 = vmatmul.mubr.f32.gmra.mrb[0].mxu0 %v4202
      %v4413 = vpop.f32.mrb[0].mxu0
      %v4414 = vadd.f32 0.0, %v4413
      %v4415 = vpop.f32.mrb[0].mxu0
      %4416 = vmatprep.mubr.f32.mxu0 0.0
      %4417 = vmatmul.mubr.f32.gmra.mrb[0].mxu0 %v4205
      %v4418 = vpop.f32.mrb[0].mxu0
      %v4419 = vadd.f32 0.0, %v4418
      %v4420 = vpop.f32.mrb[0].mxu0
      %4421 = vmatprep.mubr.f32.mxu0 0.0
      %4422 = vmatmul.mubr.f32.gmra.mrb[0].mxu0 %v4208
      %v4423 = vpop.f32.mrb[0].mxu0
      %v4424 = vadd.f32 0.0, %v4423
      %v4425 = vpop.f32.mrb[0].mxu0
      %4426 = vmatprep.mubr.f32.mxu0 0.0
      %4427 = vmatmul.mubr.f32.gmra.mrb[0].mxu0 %v4211
      %v4428 = vpop.f32.mrb[0].mxu0
      %v4429 = vadd.f32 0.0, %v4428
      %v4430 = vpop.f32.mrb[0].mxu0
      %4431 = vmatprep.mubr.f32.mxu0 0.0
      %4432 = vmatmul.mubr.f32.gmra.mrb[0].mxu0 %v4214
      %v4433 = vpop.f32.mrb[0].mxu0
      %v4434 = vadd.f32 0.0, %v4433
      %v4435 = vpop.f32.mrb[0].mxu0
      %4436 = vmatprep.mubr.f32.mxu0 0.0
      %4437 = vmatmul.mubr.f32.gmra.mrb[0].mxu0 %v4217
      %v4438 = vpop.f32.mrb[0].mxu0
      %v4439 = vadd.f32 0.0, %v4438
      %v4440 = vpop.f32.mrb[0].mxu0
      %4441 = vmatprep.mubr.f32.mxu0 0.0
      %4442 = vmatmul.mubr.f32.gmra.mrb[0].mxu0 %v4220
      %v4443 = vpop.f32.mrb[0].mxu0
      %v4444 = vadd.f32 0.0, %v4443
      %v4445 = vpop.f32.mrb[0].mxu0
      %4446 = vdwg.mxu0
      %v4447 = vadd.f32 %v4059, %v4289
      %v4448 = vadd.f32 %v4060, %v4294
      %v4449 = vadd.f32 %v4061, %v4299
      %v4450 = vadd.f32 %v4062, %v4304
      %v4451 = vadd.f32 %v4063, %v4309
      %v4452 = vadd.f32 %v4064, %v4314
      %v4453 = vadd.f32 %v4065, %v4319
      %v4454 = vadd.f32 %v4066, %v4324
      %v4455 = vadd.f32 %v4067, %v4329
      %v4456 = vadd.f32 %v4068, %v4334
      %v4457 = vadd.f32 %v4069, %v4339
      %v4458 = vadd.f32 %v4070, %v4344
      %v4459 = vadd.f32 %v4071, %v4349
      %v4460 = vadd.f32 %v4072, %v4354
      %v4461 = vadd.f32 %v4073, %v4359
      %v4462 = vadd.f32 %v4074, %v4364
      %v4463 = vadd.f32 %v4075, %v4369
      %v4464 = vadd.f32 %v4076, %v4374
      %v4465 = vadd.f32 %v4077, %v4379
      %v4466 = vadd.f32 %v4078, %v4384
      %v4467 = vadd.f32 %v4079, %v4389
      %v4468 = vadd.f32 %v4080, %v4394
      %v4469 = vadd.f32 %v4081, %v4399
      %v4470 = vadd.f32 %v4082, %v4404
      %v4471 = vadd.f32 %v4083, %v4409
      %v4472 = vadd.f32 %v4084, %v4414
      %v4473 = vadd.f32 %v4085, %v4419
      %v4474 = vadd.f32 %v4086, %v4424
      %v4475 = vadd.f32 %v4087, %v4429
      %v4476 = vadd.f32 %v4088, %v4434
      %v4477 = vadd.f32 %v4089, %v4439
      %v4478 = vadd.f32 %v4090, %v4444
      %v4479 = vld [vmem:[#allocation2 + $0x29] sm:$0xff]
      %v4480 = vld [vmem:[#allocation2 + $0x31] sm:$0xff]
      %v4481 = vld [vmem:[#allocation2 + $0x39] sm:$0xff]
      %v4482 = vld [vmem:[#allocation2 + $0x41] sm:$0xff]
      %v4483 = vld [vmem:[#allocation2 + $0x49] sm:$0xff]
      %v4484 = vld [vmem:[#allocation2 + $0x51] sm:$0xff]
      %v4485 = vld [vmem:[#allocation2 + $0x59] sm:$0xff]
      %v4486 = vld [vmem:[#allocation2 + $0x61] sm:$0xff]
      %v4487 = vld [vmem:[#allocation2 + $0x69] sm:$0xff]
      %v4488 = vld [vmem:[#allocation2 + $0x71] sm:$0xff]
      %v4489 = vld [vmem:[#allocation2 + $0x79] sm:$0xff]
      %v4490 = vld [vmem:[#allocation2 + $0x81] sm:$0xff]
      %v4491 = vld [vmem:[#allocation2 + $0x89] sm:$0xff]
      %v4492 = vld [vmem:[#allocation2 + $0x91] sm:$0xff]
      %v4493 = vld [vmem:[#allocation2 + $0x99] sm:$0xff]
      %v4494 = vld [vmem:[#allocation2 + $0xa1] sm:$0xff]
      %v4495 = vld [vmem:[#allocation2 + $0xa9] sm:$0xff]
      %v4496 = vld [vmem:[#allocation2 + $0xb1] sm:$0xff]
      %v4497 = vld [vmem:[#allocation2 + $0xb9] sm:$0xff]
      %v4498 = vld [vmem:[#allocation2 + $0xc1] sm:$0xff]
      %v4499 = vld [vmem:[#allocation2 + $0xc9] sm:$0xff]
      %v4500 = vld [vmem:[#allocation2 + $0xd1] sm:$0xff]
      %v4501 = vld [vmem:[#allocation2 + $0xd9] sm:$0xff]
      %v4502 = vld [vmem:[#allocation2 + $0xe1] sm:$0xff]
      %v4503 = vld [vmem:[#allocation2 + $0xe9] sm:$0xff]
      %v4504 = vld [vmem:[#allocation2 + $0xf1] sm:$0xff]
      %v4505 = vld [vmem:[#allocation2 + $0xf9] sm:$0xff]
      %v4506 = vld [vmem:[#allocation2 + $0x101] sm:$0xff]
      %v4507 = vld [vmem:[#allocation2 + $0x109] sm:$0xff]
      %v4508 = vld [vmem:[#allocation2 + $0x111] sm:$0xff]
      %v4509 = vld [vmem:[#allocation2 + $0x119] sm:$0xff]
      %v4510 = vld [vmem:[#allocation2 + $0x121] sm:$0xff]
      %v4511 = vsel %vm1248, %v4479, 0.0
      %v4512 = vsel %vm1249, %v4480, 0.0
      %v4513 = vsel %vm1250, %v4481, 0.0
      %v4514 = vsel %vm1251, %v4482, 0.0
      %v4515 = vsel %vm1252, %v4483, 0.0
      %v4516 = vsel %vm1253, %v4484, 0.0
      %v4517 = vsel %vm1254, %v4485, 0.0
      %v4518 = vsel %vm1255, %v4486, 0.0
      %v4519 = vsel %vm1256, %v4487, 0.0
      %v4520 = vsel %vm1257, %v4488, 0.0
      %v4521 = vsel %vm1258, %v4489, 0.0
      %v4522 = vsel %vm1259, %v4490, 0.0
      %v4523 = vsel %vm1260, %v4491, 0.0
      %v4524 = vsel %vm1261, %v4492, 0.0
      %v4525 = vsel %vm1262, %v4493, 0.0
      %v4526 = vsel %vm1263, %v4494, 0.0
      %v4527 = vsel %vm1264, %v4495, 0.0
      %v4528 = vsel %vm1265, %v4496, 0.0
      %v4529 = vsel %vm1266, %v4497, 0.0
      %v4530 = vsel %vm1267, %v4498, 0.0
      %v4531 = vsel %vm1268, %v4499, 0.0
      %v4532 = vsel %vm1269, %v4500, 0.0
      %v4533 = vsel %vm1270, %v4501, 0.0
      %v4534 = vsel %vm1271, %v4502, 0.0
      %v4535 = vsel %vm1272, %v4503, 0.0
      %v4536 = vsel %vm1273, %v4504, 0.0
      %v4537 = vsel %vm1274, %v4505, 0.0
      %v4538 = vsel %vm1275, %v4506, 0.0
      %v4539 = vsel %vm1276, %v4507, 0.0
      %v4540 = vsel %vm1277, %v4508, 0.0
      %v4541 = vsel %vm1278, %v4509, 0.0
      %v4542 = vsel %vm1279, %v4510, 0.0
      %s4543 = scalar_lea.vmem %s5, 128
      %v4544 = vld [vmem:[%s4543] sm:$0xff]
      %v4545 = vld [vmem:[%s4543 + $0x8] sm:$0xff]
      %v4547 = vsel %vm760, %v4511, 0
      %v4550 = vsel %vm760, %v4512, 0
      %v4553 = vsel %vm760, %v4513, 0
      %v4556 = vsel %vm760, %v4514, 0
      %v4559 = vsel %vm760, %v4515, 0
      %v4562 = vsel %vm760, %v4516, 0
      %v4565 = vsel %vm760, %v4517, 0
      %v4568 = vsel %vm760, %v4518, 0
      %v4571 = vsel %vm760, %v4519, 0
      %v4574 = vsel %vm760, %v4520, 0
      %v4577 = vsel %vm760, %v4521, 0
      %v4580 = vsel %vm760, %v4522, 0
      %v4583 = vsel %vm760, %v4523, 0
      %v4586 = vsel %vm760, %v4524, 0
      %v4589 = vsel %vm760, %v4525, 0
      %v4592 = vsel %vm760, %v4526, 0
      %v4595 = vsel %vm760, %v4527, 0
      %v4598 = vsel %vm760, %v4528, 0
      %v4601 = vsel %vm760, %v4529, 0
      %v4604 = vsel %vm760, %v4530, 0
      %v4607 = vsel %vm760, %v4531, 0
      %v4610 = vsel %vm760, %v4532, 0
      %v4613 = vsel %vm760, %v4533, 0
      %v4616 = vsel %vm760, %v4534, 0
      %v4619 = vsel %vm760, %v4535, 0
      %v4622 = vsel %vm760, %v4536, 0
      %v4625 = vsel %vm760, %v4537, 0
      %v4628 = vsel %vm760, %v4538, 0
      %v4631 = vsel %vm760, %v4539, 0
      %v4634 = vsel %vm760, %v4540, 0
      %v4637 = vsel %vm760, %v4541, 0
      %v4640 = vsel %vm760, %v4542, 0
      %4642 = vmatprep.subr.mxu0 0.0
      %4643 = vmatpush1.msra.mxu0 %v4544
      %4644 = vmatprep.subr.mxu0 0.0
      %4645 = vmatpush1.msra.mxu0 %v4545
      %4646 = vmatprep.subr.mxu0 0.0
      %4647 = vmatpush1.msra.mxu0 0.0
      %4648 = vmatprep.subr.mxu0 0.0
      %4649 = vmatpush1.msra.mxu0 0.0
      %4650 = vmatprep.subr.mxu0 0.0
      %4651 = vmatpush1.msra.mxu0 0.0
      %4652 = vmatprep.subr.mxu0 0.0
      %4653 = vmatpush1.msra.mxu0 0.0
      %4654 = vmatprep.subr.mxu0 0.0
      %4655 = vmatpush1.msra.mxu0 0.0
      %4656 = vmatprep.subr.mxu0 0.0
      %4657 = vmatpush1.msra.mxu0 0.0
      %4658 = vmatprep.subr.mxu0 0.0
      %4659 = vmatpush1.msra.mxu0 0.0
      %4660 = vmatprep.subr.mxu0 0.0
      %4661 = vmatpush1.msra.mxu0 0.0
      %4662 = vmatprep.subr.mxu0 0.0
      %4663 = vmatpush1.msra.mxu0 0.0
      %4664 = vmatprep.subr.mxu0 0.0
      %4665 = vmatpush1.msra.mxu0 0.0
      %4666 = vmatprep.subr.mxu0 0.0
      %4667 = vmatpush1.msra.mxu0 0.0
      %4668 = vmatprep.subr.mxu0 0.0
      %4669 = vmatpush1.msra.mxu0 0.0
      %4670 = vmatprep.subr.mxu0 0.0
      %4671 = vmatpush1.msra.mxu0 0.0
      %4672 = vmatprep.subr.mxu0 0.0
      %4673 = vmatpush1.msra.mxu0 0.0
      %4674 = vmatprep.subr.mxu0 0.0
      %4675 = vmatpush1.msra.mxu0 0.0
      %4676 = vmatprep.subr.mxu0 0.0
      %4677 = vmatpush1.msra.mxu0 0.0
      %4678 = vmatprep.subr.mxu0 0.0
      %4679 = vmatpush1.msra.mxu0 0.0
      %4680 = vmatprep.subr.mxu0 0.0
      %4681 = vmatpush1.msra.mxu0 0.0
      %4682 = vmatprep.subr.mxu0 0.0
      %4683 = vmatpush1.msra.mxu0 0.0
      %4684 = vmatprep.subr.mxu0 0.0
      %4685 = vmatpush1.msra.mxu0 0.0
      %4686 = vmatprep.subr.mxu0 0.0
      %4687 = vmatpush1.msra.mxu0 0.0
      %4688 = vmatprep.subr.mxu0 0.0
      %4689 = vmatpush1.msra.mxu0 0.0
      %4690 = vmatprep.subr.mxu0 0.0
      %4691 = vmatpush1.msra.mxu0 0.0
      %4692 = vmatprep.subr.mxu0 0.0
      %4693 = vmatpush1.msra.mxu0 0.0
      %4694 = vmatprep.subr.mxu0 0.0
      %4695 = vmatpush1.msra.mxu0 0.0
      %4696 = vmatprep.subr.mxu0 0.0
      %4697 = vmatpush1.msra.mxu0 0.0
      %4698 = vmatprep.subr.mxu0 0.0
      %4699 = vmatpush1.msra.mxu0 0.0
      %4700 = vmatprep.subr.mxu0 0.0
      %4701 = vmatpush1.msra.mxu0 0.0
      %4702 = vmatprep.subr.mxu0 0.0
      %4703 = vmatpush1.msra.mxu0 0.0
      %4704 = vmatprep.subr.mxu0 0.0
      %4705 = vmatpush1.msra.mxu0 0.0
      %4706 = vmatprep.mubr.f32.mxu0 0.0
      %4707 = vmatmul.mubr.f32.gmra.mrb[0].mxu0 %v4547
      %v4708 = vpop.f32.mrb[0].mxu0
      %v4709 = vadd.f32 0.0, %v4708
      %v4710 = vpop.f32.mrb[0].mxu0
      %4711 = vmatprep.mubr.f32.mxu0 0.0
      %4712 = vmatmul.mubr.f32.gmra.mrb[0].mxu0 %v4550
      %v4713 = vpop.f32.mrb[0].mxu0
      %v4714 = vadd.f32 0.0, %v4713
      %v4715 = vpop.f32.mrb[0].mxu0
      %4716 = vmatprep.mubr.f32.mxu0 0.0
      %4717 = vmatmul.mubr.f32.gmra.mrb[0].mxu0 %v4553
      %v4718 = vpop.f32.mrb[0].mxu0
      %v4719 = vadd.f32 0.0, %v4718
      %v4720 = vpop.f32.mrb[0].mxu0
      %4721 = vmatprep.mubr.f32.mxu0 0.0
      %4722 = vmatmul.mubr.f32.gmra.mrb[0].mxu0 %v4556
      %v4723 = vpop.f32.mrb[0].mxu0
      %v4724 = vadd.f32 0.0, %v4723
      %v4725 = vpop.f32.mrb[0].mxu0
      %4726 = vmatprep.mubr.f32.mxu0 0.0
      %4727 = vmatmul.mubr.f32.gmra.mrb[0].mxu0 %v4559
      %v4728 = vpop.f32.mrb[0].mxu0
      %v4729 = vadd.f32 0.0, %v4728
      %v4730 = vpop.f32.mrb[0].mxu0
      %4731 = vmatprep.mubr.f32.mxu0 0.0
      %4732 = vmatmul.mubr.f32.gmra.mrb[0].mxu0 %v4562
      %v4733 = vpop.f32.mrb[0].mxu0
      %v4734 = vadd.f32 0.0, %v4733
      %v4735 = vpop.f32.mrb[0].mxu0
      %4736 = vmatprep.mubr.f32.mxu0 0.0
      %4737 = vmatmul.mubr.f32.gmra.mrb[0].mxu0 %v4565
      %v4738 = vpop.f32.mrb[0].mxu0
      %v4739 = vadd.f32 0.0, %v4738
      %v4740 = vpop.f32.mrb[0].mxu0
      %4741 = vmatprep.mubr.f32.mxu0 0.0
      %4742 = vmatmul.mubr.f32.gmra.mrb[0].mxu0 %v4568
      %v4743 = vpop.f32.mrb[0].mxu0
      %v4744 = vadd.f32 0.0, %v4743
      %v4745 = vpop.f32.mrb[0].mxu0
      %4746 = vmatprep.mubr.f32.mxu0 0.0
      %4747 = vmatmul.mubr.f32.gmra.mrb[0].mxu0 %v4571
      %v4748 = vpop.f32.mrb[0].mxu0
      %v4749 = vadd.f32 0.0, %v4748
      %v4750 = vpop.f32.mrb[0].mxu0
      %4751 = vmatprep.mubr.f32.mxu0 0.0
      %4752 = vmatmul.mubr.f32.gmra.mrb[0].mxu0 %v4574
      %v4753 = vpop.f32.mrb[0].mxu0
      %v4754 = vadd.f32 0.0, %v4753
      %v4755 = vpop.f32.mrb[0].mxu0
      %4756 = vmatprep.mubr.f32.mxu0 0.0
      %4757 = vmatmul.mubr.f32.gmra.mrb[0].mxu0 %v4577
      %v4758 = vpop.f32.mrb[0].mxu0
      %v4759 = vadd.f32 0.0, %v4758
      %v4760 = vpop.f32.mrb[0].mxu0
      %4761 = vmatprep.mubr.f32.mxu0 0.0
      %4762 = vmatmul.mubr.f32.gmra.mrb[0].mxu0 %v4580
      %v4763 = vpop.f32.mrb[0].mxu0
      %v4764 = vadd.f32 0.0, %v4763
      %v4765 = vpop.f32.mrb[0].mxu0
      %4766 = vmatprep.mubr.f32.mxu0 0.0
      %4767 = vmatmul.mubr.f32.gmra.mrb[0].mxu0 %v4583
      %v4768 = vpop.f32.mrb[0].mxu0
      %v4769 = vadd.f32 0.0, %v4768
      %v4770 = vpop.f32.mrb[0].mxu0
      %4771 = vmatprep.mubr.f32.mxu0 0.0
      %4772 = vmatmul.mubr.f32.gmra.mrb[0].mxu0 %v4586
      %v4773 = vpop.f32.mrb[0].mxu0
      %v4774 = vadd.f32 0.0, %v4773
      %v4775 = vpop.f32.mrb[0].mxu0
      %4776 = vmatprep.mubr.f32.mxu0 0.0
      %4777 = vmatmul.mubr.f32.gmra.mrb[0].mxu0 %v4589
      %v4778 = vpop.f32.mrb[0].mxu0
      %v4779 = vadd.f32 0.0, %v4778
      %v4780 = vpop.f32.mrb[0].mxu0
      %4781 = vmatprep.mubr.f32.mxu0 0.0
      %4782 = vmatmul.mubr.f32.gmra.mrb[0].mxu0 %v4592
      %v4783 = vpop.f32.mrb[0].mxu0
      %v4784 = vadd.f32 0.0, %v4783
      %v4785 = vpop.f32.mrb[0].mxu0
      %4786 = vmatprep.mubr.f32.mxu0 0.0
      %4787 = vmatmul.mubr.f32.gmra.mrb[0].mxu0 %v4595
      %v4788 = vpop.f32.mrb[0].mxu0
      %v4789 = vadd.f32 0.0, %v4788
      %v4790 = vpop.f32.mrb[0].mxu0
      %4791 = vmatprep.mubr.f32.mxu0 0.0
      %4792 = vmatmul.mubr.f32.gmra.mrb[0].mxu0 %v4598
      %v4793 = vpop.f32.mrb[0].mxu0
      %v4794 = vadd.f32 0.0, %v4793
      %v4795 = vpop.f32.mrb[0].mxu0
      %4796 = vmatprep.mubr.f32.mxu0 0.0
      %4797 = vmatmul.mubr.f32.gmra.mrb[0].mxu0 %v4601
      %v4798 = vpop.f32.mrb[0].mxu0
      %v4799 = vadd.f32 0.0, %v4798
      %v4800 = vpop.f32.mrb[0].mxu0
      %4801 = vmatprep.mubr.f32.mxu0 0.0
      %4802 = vmatmul.mubr.f32.gmra.mrb[0].mxu0 %v4604
      %v4803 = vpop.f32.mrb[0].mxu0
      %v4804 = vadd.f32 0.0, %v4803
      %v4805 = vpop.f32.mrb[0].mxu0
      %4806 = vmatprep.mubr.f32.mxu0 0.0
      %4807 = vmatmul.mubr.f32.gmra.mrb[0].mxu0 %v4607
      %v4808 = vpop.f32.mrb[0].mxu0
      %v4809 = vadd.f32 0.0, %v4808
      %v4810 = vpop.f32.mrb[0].mxu0
      %4811 = vmatprep.mubr.f32.mxu0 0.0
      %4812 = vmatmul.mubr.f32.gmra.mrb[0].mxu0 %v4610
      %v4813 = vpop.f32.mrb[0].mxu0
      %v4814 = vadd.f32 0.0, %v4813
      %v4815 = vpop.f32.mrb[0].mxu0
      %4816 = vmatprep.mubr.f32.mxu0 0.0
      %4817 = vmatmul.mubr.f32.gmra.mrb[0].mxu0 %v4613
      %v4818 = vpop.f32.mrb[0].mxu0
      %v4819 = vadd.f32 0.0, %v4818
      %v4820 = vpop.f32.mrb[0].mxu0
      %4821 = vmatprep.mubr.f32.mxu0 0.0
      %4822 = vmatmul.mubr.f32.gmra.mrb[0].mxu0 %v4616
      %v4823 = vpop.f32.mrb[0].mxu0
      %v4824 = vadd.f32 0.0, %v4823
      %v4825 = vpop.f32.mrb[0].mxu0
      %4826 = vmatprep.mubr.f32.mxu0 0.0
      %4827 = vmatmul.mubr.f32.gmra.mrb[0].mxu0 %v4619
      %v4828 = vpop.f32.mrb[0].mxu0
      %v4829 = vadd.f32 0.0, %v4828
      %v4830 = vpop.f32.mrb[0].mxu0
      %4831 = vmatprep.mubr.f32.mxu0 0.0
      %4832 = vmatmul.mubr.f32.gmra.mrb[0].mxu0 %v4622
      %v4833 = vpop.f32.mrb[0].mxu0
      %v4834 = vadd.f32 0.0, %v4833
      %v4835 = vpop.f32.mrb[0].mxu0
      %4836 = vmatprep.mubr.f32.mxu0 0.0
      %4837 = vmatmul.mubr.f32.gmra.mrb[0].mxu0 %v4625
      %v4838 = vpop.f32.mrb[0].mxu0
      %v4839 = vadd.f32 0.0, %v4838
      %v4840 = vpop.f32.mrb[0].mxu0
      %4841 = vmatprep.mubr.f32.mxu0 0.0
      %4842 = vmatmul.mubr.f32.gmra.mrb[0].mxu0 %v4628
      %v4843 = vpop.f32.mrb[0].mxu0
      %v4844 = vadd.f32 0.0, %v4843
      %v4845 = vpop.f32.mrb[0].mxu0
      %4846 = vmatprep.mubr.f32.mxu0 0.0
      %4847 = vmatmul.mubr.f32.gmra.mrb[0].mxu0 %v4631
      %v4848 = vpop.f32.mrb[0].mxu0
      %v4849 = vadd.f32 0.0, %v4848
      %v4850 = vpop.f32.mrb[0].mxu0
      %4851 = vmatprep.mubr.f32.mxu0 0.0
      %4852 = vmatmul.mubr.f32.gmra.mrb[0].mxu0 %v4634
      %v4853 = vpop.f32.mrb[0].mxu0
      %v4854 = vadd.f32 0.0, %v4853
      %v4855 = vpop.f32.mrb[0].mxu0
      %4856 = vmatprep.mubr.f32.mxu0 0.0
      %4857 = vmatmul.mubr.f32.gmra.mrb[0].mxu0 %v4637
      %v4858 = vpop.f32.mrb[0].mxu0
      %v4859 = vadd.f32 0.0, %v4858
      %v4860 = vpop.f32.mrb[0].mxu0
      %4861 = vmatprep.mubr.f32.mxu0 0.0
      %4862 = vmatmul.mubr.f32.gmra.mrb[0].mxu0 %v4640
      %v4863 = vpop.f32.mrb[0].mxu0
      %v4864 = vadd.f32 0.0, %v4863
      %v4865 = vpop.f32.mrb[0].mxu0
      %4866 = vdwg.mxu0
      %v4867 = vadd.f32 %v4447, %v4709
      %v4868 = vadd.f32 %v4448, %v4714
      %v4869 = vadd.f32 %v4449, %v4719
      %v4870 = vadd.f32 %v4450, %v4724
      %v4871 = vadd.f32 %v4451, %v4729
      %v4872 = vadd.f32 %v4452, %v4734
      %v4873 = vadd.f32 %v4453, %v4739
      %v4874 = vadd.f32 %v4454, %v4744
      %v4875 = vadd.f32 %v4455, %v4749
      %v4876 = vadd.f32 %v4456, %v4754
      %v4877 = vadd.f32 %v4457, %v4759
      %v4878 = vadd.f32 %v4458, %v4764
      %v4879 = vadd.f32 %v4459, %v4769
      %v4880 = vadd.f32 %v4460, %v4774
      %v4881 = vadd.f32 %v4461, %v4779
      %v4882 = vadd.f32 %v4462, %v4784
      %v4883 = vadd.f32 %v4463, %v4789
      %v4884 = vadd.f32 %v4464, %v4794
      %v4885 = vadd.f32 %v4465, %v4799
      %v4886 = vadd.f32 %v4466, %v4804
      %v4887 = vadd.f32 %v4467, %v4809
      %v4888 = vadd.f32 %v4468, %v4814
      %v4889 = vadd.f32 %v4469, %v4819
      %v4890 = vadd.f32 %v4470, %v4824
      %v4891 = vadd.f32 %v4471, %v4829
      %v4892 = vadd.f32 %v4472, %v4834
      %v4893 = vadd.f32 %v4473, %v4839
      %v4894 = vadd.f32 %v4474, %v4844
      %v4895 = vadd.f32 %v4475, %v4849
      %v4896 = vadd.f32 %v4476, %v4854
      %v4897 = vadd.f32 %v4477, %v4859
      %v4898 = vadd.f32 %v4478, %v4864
      %4931 = vrot.lane.b32.xlu0 %v4867, 4
      %v4932 = vpop.permute.xlu0 %4931
      %4933 = vrot.lane.b32.xlu0 %v4868, 4
      %v4934 = vpop.permute.xlu0 %4933
      %4935 = vrot.lane.b32.xlu0 %v4869, 4
      %v4936 = vpop.permute.xlu0 %4935
      %4937 = vrot.lane.b32.xlu0 %v4870, 4
      %v4938 = vpop.permute.xlu0 %4937
      %4939 = vrot.lane.b32.xlu0 %v4871, 4
      %v4940 = vpop.permute.xlu0 %4939
      %4941 = vrot.lane.b32.xlu0 %v4872, 4
      %v4942 = vpop.permute.xlu0 %4941
      %4943 = vrot.lane.b32.xlu0 %v4873, 4
      %v4944 = vpop.permute.xlu0 %4943
      %4945 = vrot.lane.b32.xlu0 %v4874, 4
      %v4946 = vpop.permute.xlu0 %4945
      %4947 = vrot.lane.b32.xlu0 %v4875, 4
      %v4948 = vpop.permute.xlu0 %4947
      %4949 = vrot.lane.b32.xlu0 %v4876, 4
      %v4950 = vpop.permute.xlu0 %4949
      %4951 = vrot.lane.b32.xlu0 %v4877, 4
      %v4952 = vpop.permute.xlu0 %4951
      %4953 = vrot.lane.b32.xlu0 %v4878, 4
      %v4954 = vpop.permute.xlu0 %4953
      %4955 = vrot.lane.b32.xlu0 %v4879, 4
      %v4956 = vpop.permute.xlu0 %4955
      %4957 = vrot.lane.b32.xlu0 %v4880, 4
      %v4958 = vpop.permute.xlu0 %4957
      %4959 = vrot.lane.b32.xlu0 %v4881, 4
      %v4960 = vpop.permute.xlu0 %4959
      %4961 = vrot.lane.b32.xlu0 %v4882, 4
      %v4962 = vpop.permute.xlu0 %4961
      %4963 = vrot.lane.b32.xlu0 %v4883, 4
      %v4964 = vpop.permute.xlu0 %4963
      %4965 = vrot.lane.b32.xlu0 %v4884, 4
      %v4966 = vpop.permute.xlu0 %4965
      %4967 = vrot.lane.b32.xlu0 %v4885, 4
      %v4968 = vpop.permute.xlu0 %4967
      %4969 = vrot.lane.b32.xlu0 %v4886, 4
      %v4970 = vpop.permute.xlu0 %4969
      %4971 = vrot.lane.b32.xlu0 %v4887, 4
      %v4972 = vpop.permute.xlu0 %4971
      %4973 = vrot.lane.b32.xlu0 %v4888, 4
      %v4974 = vpop.permute.xlu0 %4973
      %4975 = vrot.lane.b32.xlu0 %v4889, 4
      %v4976 = vpop.permute.xlu0 %4975
      %4977 = vrot.lane.b32.xlu0 %v4890, 4
      %v4978 = vpop.permute.xlu0 %4977
      %4979 = vrot.lane.b32.xlu0 %v4891, 4
      %v4980 = vpop.permute.xlu0 %4979
      %4981 = vrot.lane.b32.xlu0 %v4892, 4
      %v4982 = vpop.permute.xlu0 %4981
      %4983 = vrot.lane.b32.xlu0 %v4893, 4
      %v4984 = vpop.permute.xlu0 %4983
      %4985 = vrot.lane.b32.xlu0 %v4894, 4
      %v4986 = vpop.permute.xlu0 %4985
      %4987 = vrot.lane.b32.xlu0 %v4895, 4
      %v4988 = vpop.permute.xlu0 %4987
      %4989 = vrot.lane.b32.xlu0 %v4896, 4
      %v4990 = vpop.permute.xlu0 %4989
      %4991 = vrot.lane.b32.xlu0 %v4897, 4
      %v4992 = vpop.permute.xlu0 %4991
      %4993 = vrot.lane.b32.xlu0 %v4898, 4
      %v4994 = vpop.permute.xlu0 %4993
      %v5027 = vsel %vm402, %v252, %v4932
      %v5028 = vsel %vm402, %v253, %v4934
      %v5029 = vsel %vm402, %v254, %v4936
      %v5030 = vsel %vm402, %v255, %v4938
      %v5031 = vsel %vm402, %v256, %v4940
      %v5032 = vsel %vm402, %v257, %v4942
      %v5033 = vsel %vm402, %v258, %v4944
      %v5034 = vsel %vm402, %v259, %v4946
      %v5035 = vsel %vm402, %v260, %v4948
      %v5036 = vsel %vm402, %v261, %v4950
      %v5037 = vsel %vm402, %v262, %v4952
      %v5038 = vsel %vm402, %v263, %v4954
      %v5039 = vsel %vm402, %v264, %v4956
      %v5040 = vsel %vm402, %v265, %v4958
      %v5041 = vsel %vm402, %v266, %v4960
      %v5042 = vsel %vm402, %v267, %v4962
      %v5043 = vsel %vm402, %v268, %v4964
      %v5044 = vsel %vm402, %v269, %v4966
      %v5045 = vsel %vm402, %v270, %v4968
      %v5046 = vsel %vm402, %v271, %v4970
      %v5047 = vsel %vm402, %v272, %v4972
      %v5048 = vsel %vm402, %v273, %v4974
      %v5049 = vsel %vm402, %v274, %v4976
      %v5050 = vsel %vm402, %v275, %v4978
      %v5051 = vsel %vm402, %v276, %v4980
      %v5052 = vsel %vm402, %v277, %v4982
      %v5053 = vsel %vm402, %v278, %v4984
      %v5054 = vsel %vm402, %v279, %v4986
      %v5055 = vsel %vm402, %v280, %v4988
      %v5056 = vsel %vm402, %v281, %v4990
      %v5057 = vsel %vm402, %v282, %v4992
      %v5058 = vsel %vm402, %v283, %v4994
      %vm5059 = vcmask 64512
      %5060 = vst.msk [vmem:[%s251] sm:$0xff] %vm5059, %v5027
      %5061 = vst.msk [vmem:[%s251 + $0x8] sm:$0xff] %vm5059, %v5028
      %5062 = vst.msk [vmem:[%s251 + $0x10] sm:$0xff] %vm5059, %v5029
      %5063 = vst.msk [vmem:[%s251 + $0x18] sm:$0xff] %vm5059, %v5030
      %5064 = vst.msk [vmem:[%s251 + $0x20] sm:$0xff] %vm5059, %v5031
      %5065 = vst.msk [vmem:[%s251 + $0x28] sm:$0xff] %vm5059, %v5032
      %5066 = vst.msk [vmem:[%s251 + $0x30] sm:$0xff] %vm5059, %v5033
      %5067 = vst.msk [vmem:[%s251 + $0x38] sm:$0xff] %vm5059, %v5034
      %5068 = vst.msk [vmem:[%s251 + $0x40] sm:$0xff] %vm5059, %v5035
      %5069 = vst.msk [vmem:[%s251 + $0x48] sm:$0xff] %vm5059, %v5036
      %5070 = vst.msk [vmem:[%s251 + $0x50] sm:$0xff] %vm5059, %v5037
      %5071 = vst.msk [vmem:[%s251 + $0x58] sm:$0xff] %vm5059, %v5038
      %5072 = vst.msk [vmem:[%s251 + $0x60] sm:$0xff] %vm5059, %v5039
      %5073 = vst.msk [vmem:[%s251 + $0x68] sm:$0xff] %vm5059, %v5040
      %5074 = vst.msk [vmem:[%s251 + $0x70] sm:$0xff] %vm5059, %v5041
      %5075 = vst.msk [vmem:[%s251 + $0x78] sm:$0xff] %vm5059, %v5042
      %5076 = vst.msk [vmem:[%s251 + $0x80] sm:$0xff] %vm5059, %v5043
      %5077 = vst.msk [vmem:[%s251 + $0x88] sm:$0xff] %vm5059, %v5044
      %5078 = vst.msk [vmem:[%s251 + $0x90] sm:$0xff] %vm5059, %v5045
      %5079 = vst.msk [vmem:[%s251 + $0x98] sm:$0xff] %vm5059, %v5046
      %5080 = vst.msk [vmem:[%s251 + $0xa0] sm:$0xff] %vm5059, %v5047
      %5081 = vst.msk [vmem:[%s251 + $0xa8] sm:$0xff] %vm5059, %v5048
      %5082 = vst.msk [vmem:[%s251 + $0xb0] sm:$0xff] %vm5059, %v5049
      %5083 = vst.msk [vmem:[%s251 + $0xb8] sm:$0xff] %vm5059, %v5050
      %5084 = vst.msk [vmem:[%s251 + $0xc0] sm:$0xff] %vm5059, %v5051
      %5085 = vst.msk [vmem:[%s251 + $0xc8] sm:$0xff] %vm5059, %v5052
      %5086 = vst.msk [vmem:[%s251 + $0xd0] sm:$0xff] %vm5059, %v5053
      %5087 = vst.msk [vmem:[%s251 + $0xd8] sm:$0xff] %vm5059, %v5054
      %5088 = vst.msk [vmem:[%s251 + $0xe0] sm:$0xff] %vm5059, %v5055
      %5089 = vst.msk [vmem:[%s251 + $0xe8] sm:$0xff] %vm5059, %v5056
      %5090 = vst.msk [vmem:[%s251 + $0xf0] sm:$0xff] %vm5059, %v5057
      %5091 = vst.msk [vmem:[%s251 + $0xf8] sm:$0xff] %vm5059, %v5058
      %p5092 = scmp.lt.s32.totalorder %s17, 1
      %s5093 = scalar_select %p5092, %s17, 1
      %s5094 = smul.addr %s5093, 32
      %s5095 = smul.addr %s5094, 8
      %s5096 = scalar_lea.vmem %s6, %s5095
      // Predicated region
      $region45: #{tpu_custom_call.1} parent=43 // pred_check
        %p5097 = pneg %p166
      $region46: #{tpu_custom_call.1} parent=43 // pred_check_branch
        %5099 = sbr.rel (%p5097) target = $region48
      $region47: #{tpu_custom_call.1} parent=43 // pred_region
        _
      $region48: #{tpu_custom_call.1} parent=43 // pred_fallthru
        _
    $region44: #{tpu_custom_call.1} parent=5 // pred_fallthru
      _
    %p5100 = scmp.le.s32.totalorder 2, %s12
    // Predicated region
    $region49: #{tpu_custom_call.1} parent=5 // pred_check
      %p5101 = pneg %p5100
    $region50: #{tpu_custom_call.1} parent=5 // pred_check_branch
      %5103 = sbr.rel (%p5101) target = $region52
    $region51: #{tpu_custom_call.1} parent=5 // pred_region
      %s5104 = ssub.s32 %s12, 2
      // Predicated region
      $region53: #{tpu_custom_call.1} parent=51 // pred_check
        %p5105 = pneg %p172
      $region54: #{tpu_custom_call.1} parent=51 // pred_check_branch
        %5107 = sbr.rel (%p5105) target = $region56
      $region55: #{tpu_custom_call.1} parent=51 // pred_region
        %p5108 = scmp.lt.s32.totalorder %s18, 1
        %s5109 = scalar_select %p5108, %s18, 1
        %s5110 = smul.addr %s5109, 32
        %s5111 = smul.addr %s5110, 8
        %s5112 = scalar_lea.vmem %s6, %s5111
      $region56: #{tpu_custom_call.1} parent=51 // pred_fallthru
        _
    $region52: #{tpu_custom_call.1} parent=5 // pred_fallthru
      _
  $region6: #{tpu_custom_call.1} parent=0 // loop_footer
    %s16 = sadd.s32 1, %s12
  $region7: #{tpu_custom_call.1} parent=0 // loop_footer_branch
    %11 = sbr.rel target = $region3
  $region8: #{tpu_custom_call.1} parent=0 // loop_exit
    _

</llo_original>
